<compile_context>
chip_gen: v7x
topology: tpu7x:2x2x1
jax: 0.10.0
libtpu: 0.0.40
codegen_flags: <defaults>
</compile_context>

<pallas_src>
import jax
import jax.numpy as jnp
from jax.experimental import pallas as pl
from jax.experimental.pallas import tpu as pltpu

_EPS = 1e-5


def _make_kernel(N, C, H, W):
    HW = H * W
    L = N * HW  # lane extent: batch concatenated along lanes

    def kernel(x_ref, w1_ref, w2_ref, g1_ref, b1_ref, g2_ref, b2_ref,
               mask_ref, o_ref, col_ref):
        # x_ref   : (N, C, HW)   f32   input, spatial flattened onto lanes
        # w*_ref  : (C, 9C)      bf16  conv weights, tap-major / in-ch-minor
        # g*/b*   : (C, 1)       f32   BN gamma / beta (channels on sublanes)
        # mask_ref: (9, N*HW)    f32   per-tap validity masks, tiled per image
        # o_ref   : (N, C, HW)   f32   output
        # col_ref : (9C, N*HW)   bf16  VMEM im2col scratch (shared by both convs)

        # Lane-concat the N images once: (C, N*HW).  Cheap aligned VMEM copies.
        xc = jnp.concatenate([x_ref[n] for n in range(N)], axis=-1)

        def im2col(v):
            # v: (C, N*HW) f32.  Write the 9 shifted/masked taps straight into
            # the bf16 scratch (no concatenate copies).  A single global lane
            # roll is correct: every *valid* tap position stays inside its own
            # image's HW lane segment; cross-image wraps only ever land on
            # masked-out (zeroed) positions.
            for t in range(9):
                ky, kx = t // 3 - 1, t % 3 - 1
                if ky == 0 and kx == 0:                 # center tap: identity
                    tap = v
                else:
                    shift = (-(ky * W + kx)) % L        # static, non-negative
                    rolled = pltpu.roll(v, shift, 1)    # XLU lane rotation
                    tap = rolled * mask_ref[t:t + 1, :]  # f32 VALU (v5e-safe)
                # f32 -> bf16 fuses into the aligned sublane-slice store.
                col_ref[t * C:(t + 1) * C, :] = tap.astype(jnp.bfloat16)

        def conv3x3(v, w_ref):
            im2col(v)
            # One fused K=9C bf16 matmul for the whole batch, f32 accumulation.
            return jnp.dot(w_ref[...], col_ref[...],
                           preferred_element_type=jnp.float32)  # (C, N*HW) f32

        def batchnorm(v, g_ref, b_ref):
            # Training-mode BN over (batch, spatial) == the lane axis.
            # Two-pass (centered) variance for numerical safety.
            inv_cnt = 1.0 / L
            mean = jnp.sum(v, axis=1, keepdims=True) * inv_cnt        # (C, 1)
            cen = v - mean
            var = jnp.sum(cen * cen, axis=1, keepdims=True) * inv_cnt  # biased
            scale = jax.lax.rsqrt(var + _EPS) * g_ref[...]            # (C, 1)
            return cen * scale + b_ref[...]

        h = conv3x3(xc, w1_ref)
        h = jnp.maximum(batchnorm(h, g1_ref, b1_ref), 0.0)
        h = batchnorm(conv3x3(h, w2_ref), g2_ref, b2_ref)

        # Residual add + final ReLU, written back per image (aligned slices).
        for n in range(N):
            o_ref[n] = jnp.maximum(h[:, n * HW:(n + 1) * HW] + x_ref[n], 0.0)

    return kernel


def resnet_block(x_nchw, w1_oihw, gamma1, beta1, w2_oihw, gamma2, beta2):
    """Pallas implementation of ResNetBlock.forward.  x_nchw: (N, C, H, W)."""
    N, Cin, H, W = x_nchw.shape
    Cout = w1_oihw.shape[0]
    assert Cin == Cout, "residual add requires n_channels_in == n_channels"
    C, HW = Cout, H * W
    L = N * HW

    # Free reshape only -- no pad / transpose HBM passes on activations.
    x = x_nchw.reshape(N, C, HW).astype(jnp.float32)

    def to_mat(w):  # OIHW -> (O, 9*I), tap-major / in-channel-minor, bf16
        return jnp.transpose(w, (0, 2, 3, 1)).reshape(C, 9 * C).astype(jnp.bfloat16)

    w1 = to_mat(w1_oihw)
    w2 = to_mat(w2_oihw)
    g1 = gamma1.reshape(C, 1).astype(jnp.float32)
    b1 = beta1.reshape(C, 1).astype(jnp.float32)
    g2 = gamma2.reshape(C, 1).astype(jnp.float32)
    b2 = beta2.reshape(C, 1).astype(jnp.float32)

    # Per-tap validity masks for the lane-rolled 3x3 taps, tiled over images.
    pos = jnp.arange(HW, dtype=jnp.int32)
    hh, ww = pos // W, pos % W
    mask_hw = jnp.stack(
        [((hh + (t // 3 - 1) >= 0) & (hh + (t // 3 - 1) < H) &
          (ww + (t % 3 - 1) >= 0) & (ww + (t % 3 - 1) < W)).astype(jnp.float32)
         for t in range(9)], axis=0)                              # (9, HW)
    mask = jnp.tile(mask_hw, (1, N))                              # (9, N*HW)

    def full(shape):
        nd = len(shape)
        return pl.BlockSpec(shape, lambda i, _nd=nd: (0,) * _nd)

    cost = pl.CostEstimate(
        flops=2 * 2 * C * (9 * C) * L,            # two K=9C matmuls
        transcendentals=2 * C,                    # rsqrt per channel per BN
        bytes_accessed=(2 * N * C * HW * 4        # x + out
                        + 2 * C * 9 * C * 2       # both weight matrices (bf16)
                        + 9 * L * 4               # tap masks
                        + 4 * C * 4))             # BN gamma/beta

    out = pl.pallas_call(
        _make_kernel(N, C, H, W),
        out_shape=jax.ShapeDtypeStruct((N, C, HW), jnp.float32),
        grid=(1,),  # whole (small) batch in one step so BN sees full batch stats
        in_specs=[full((N, C, HW)),
                  full((C, 9 * C)), full((C, 9 * C)),
                  full((C, 1)), full((C, 1)), full((C, 1)), full((C, 1)),
                  full((9, L))],
        out_specs=full((N, C, HW)),
        scratch_shapes=[pltpu.VMEM((9 * C, L), jnp.bfloat16)],   # im2col block
        compiler_params=pltpu.CompilerParams(
            dimension_semantics=("arbitrary",)),
        cost_estimate=cost,
    )(x, w1, w2, g1, b1, g2, b2, mask)

    return out.reshape(N, C, H, W)


def _resnet_block_ref(x, w1, g1, b1, w2, g2, b2):
    """Pure-JAX reference (NCHW).  Convs use bf16 MXU inputs with f32
    accumulation, matching the kernel's native-MXU precision."""
    def conv(h, w):
        return jax.lax.conv_general_dilated(
            h.astype(jnp.bfloat16), w.astype(jnp.bfloat16),
            (1, 1), ((1, 1), (1, 1)),
            dimension_numbers=("NCHW", "OIHW", "NCHW"),
            preferred_element_type=jnp.float32)

    def bn(h, g, b):
        mean = jnp.mean(h, axis=(0, 2, 3), keepdims=True)
        var = jnp.mean((h - mean) ** 2, axis=(0, 2, 3), keepdims=True)
        return (h - mean) * jax.lax.rsqrt(var + _EPS) * g.reshape(1, -1, 1, 1) \
            + b.reshape(1, -1, 1, 1)

    h = jax.nn.relu(bn(conv(x, w1), g1, b1))
    h = bn(conv(h, w2), g2, b2)
    return jax.nn.relu(h + x)


if __name__ == "__main__":
    key = jax.random.PRNGKey(0)
    kx, kw1, kw2, kg1, kb1, kg2, kb2 = jax.random.split(key, 7)

    # n_channels_in == n_channels == 32 (module default); identity add requires it.
    N, C, H, W = 2, 32, 16, 16
    fan_in = C * 3 * 3

    x = jax.random.normal(kx, (N, C, H, W), jnp.float32)
    w1 = jax.random.normal(kw1, (C, C, 3, 3), jnp.float32) / jnp.sqrt(fan_in)
    w2 = jax.random.normal(kw2, (C, C, 3, 3), jnp.float32) / jnp.sqrt(fan_in)
    g1 = 1.0 + 0.1 * jax.random.normal(kg1, (C,), jnp.float32)
    b1 = 0.1 * jax.random.normal(kb1, (C,), jnp.float32)
    g2 = 1.0 + 0.1 * jax.random.normal(kg2, (C,), jnp.float32)
    b2 = 0.1 * jax.random.normal(kb2, (C,), jnp.float32)

    out = jax.jit(resnet_block)(x, w1, g1, b1, w2, g2, b2)
    out = jax.block_until_ready(out)

    ref = _resnet_block_ref(x, w1, g1, b1, w2, g2, b2)
    err = float(jnp.max(jnp.abs(out - ref)))
    assert out.shape == (N, C, H, W), out.shape
    assert err < 1e-2, f"max abs err {err}"
    print("KERNEL_OK")
</pallas_src>

<mosaic_0001>
module attributes {stable_mosaic.version = 11 : i64} {
  func.func @kernel(%arg0: i32, %arg1: memref<2x32x256xf32, #tpu.memory_space<vmem>>, %arg2: memref<32x288xbf16, #tpu.memory_space<vmem>>, %arg3: memref<32x288xbf16, #tpu.memory_space<vmem>>, %arg4: memref<32x1xf32, #tpu.memory_space<vmem>>, %arg5: memref<32x1xf32, #tpu.memory_space<vmem>>, %arg6: memref<32x1xf32, #tpu.memory_space<vmem>>, %arg7: memref<32x1xf32, #tpu.memory_space<vmem>>, %arg8: memref<9x512xf32, #tpu.memory_space<vmem>>, %arg9: memref<2x32x256xf32, #tpu.memory_space<vmem>>, %arg10: memref<288x512xbf16, #tpu.memory_space<vmem>>) attributes {dimension_semantics = [#tpu.dimension_semantics<arbitrary>], iteration_bounds = array<i64: 1>, scalar_prefetch = 0 : i64, scratch_operands = 1 : i64, tpu.core_type = #tpu.core_type<tc>, window_params = [{pipeline_mode = #tpu.pipeline_mode<synchronous>, transform_indices = @transform_0, window_bounds = array<i64: 2, 32, 256>}, {pipeline_mode = #tpu.pipeline_mode<synchronous>, transform_indices = @transform_1, window_bounds = array<i64: 32, 288>}, {pipeline_mode = #tpu.pipeline_mode<synchronous>, transform_indices = @transform_2, window_bounds = array<i64: 32, 288>}, {pipeline_mode = #tpu.pipeline_mode<synchronous>, transform_indices = @transform_3, window_bounds = array<i64: 32, 1>}, {pipeline_mode = #tpu.pipeline_mode<synchronous>, transform_indices = @transform_4, window_bounds = array<i64: 32, 1>}, {pipeline_mode = #tpu.pipeline_mode<synchronous>, transform_indices = @transform_5, window_bounds = array<i64: 32, 1>}, {pipeline_mode = #tpu.pipeline_mode<synchronous>, transform_indices = @transform_6, window_bounds = array<i64: 32, 1>}, {pipeline_mode = #tpu.pipeline_mode<synchronous>, transform_indices = @transform_7, window_bounds = array<i64: 9, 512>}, {pipeline_mode = #tpu.pipeline_mode<synchronous>, transform_indices = @transform_8, window_bounds = array<i64: 2, 32, 256>}]} {
    %c0 = arith.constant 0 : index
    %c0_0 = arith.constant 0 : index
    %c0_1 = arith.constant 0 : index
    %0 = vector.load %arg1[%c0, %c0_0, %c0_1] : memref<2x32x256xf32, #tpu.memory_space<vmem>>, vector<1x32x256xf32>
    %1 = vector.shape_cast %0 : vector<1x32x256xf32> to vector<32x256xf32>
    %c1 = arith.constant 1 : index
    %c0_2 = arith.constant 0 : index
    %c0_3 = arith.constant 0 : index
    %2 = vector.load %arg1[%c1, %c0_2, %c0_3] : memref<2x32x256xf32, #tpu.memory_space<vmem>>, vector<1x32x256xf32>
    %3 = vector.shape_cast %2 : vector<1x32x256xf32> to vector<32x256xf32>
    %4 = tpu.concatenate %1, %3 in 1 : vector<32x256xf32>, vector<32x256xf32> -> vector<32x512xf32>
    %c17_i32 = arith.constant 17 : i32
    %5 = tpu.dynamic_rotate %4 by %c17_i32 dim 1 : vector<32x512xf32>, i32 -> vector<32x512xf32>
    %c0_4 = arith.constant 0 : index
    %c0_5 = arith.constant 0 : index
    %6 = vector.load %arg8[%c0_4, %c0_5] : memref<9x512xf32, #tpu.memory_space<vmem>>, vector<1x512xf32>
    %7 = vector.broadcast %6 : vector<1x512xf32> to vector<32x512xf32>
    %8 = arith.mulf %5, %7 : vector<32x512xf32>
    %9 = arith.truncf %8 : vector<32x512xf32> to vector<32x512xbf16>
    %c0_6 = arith.constant 0 : index
    %c0_7 = arith.constant 0 : index
    %10 = vector.load %arg10[%c0_6, %c0_7] : memref<288x512xbf16, #tpu.memory_space<vmem>>, vector<32x512xbf16>
    tpu.vector_store %arg10[%c0_6, %c0_7], %9 {strides = array<i32>} : memref<288x512xbf16, #tpu.memory_space<vmem>>, vector<32x512xbf16>,
    %c16_i32 = arith.constant 16 : i32
    %11 = tpu.dynamic_rotate %4 by %c16_i32 dim 1 : vector<32x512xf32>, i32 -> vector<32x512xf32>
    %c1_8 = arith.constant 1 : index
    %c0_9 = arith.constant 0 : index
    %12 = vector.load %arg8[%c1_8, %c0_9] : memref<9x512xf32, #tpu.memory_space<vmem>>, vector<1x512xf32>
    %13 = vector.broadcast %12 : vector<1x512xf32> to vector<32x512xf32>
    %14 = arith.mulf %11, %13 : vector<32x512xf32>
    %15 = arith.truncf %14 : vector<32x512xf32> to vector<32x512xbf16>
    %c32 = arith.constant 32 : index
    %c0_10 = arith.constant 0 : index
    %16 = vector.load %arg10[%c32, %c0_10] : memref<288x512xbf16, #tpu.memory_space<vmem>>, vector<32x512xbf16>
    tpu.vector_store %arg10[%c32, %c0_10], %15 {strides = array<i32>} : memref<288x512xbf16, #tpu.memory_space<vmem>>, vector<32x512xbf16>,
    %c15_i32 = arith.constant 15 : i32
    %17 = tpu.dynamic_rotate %4 by %c15_i32 dim 1 : vector<32x512xf32>, i32 -> vector<32x512xf32>
    %c2 = arith.constant 2 : index
    %c0_11 = arith.constant 0 : index
    %18 = vector.load %arg8[%c2, %c0_11] : memref<9x512xf32, #tpu.memory_space<vmem>>, vector<1x512xf32>
    %19 = vector.broadcast %18 : vector<1x512xf32> to vector<32x512xf32>
    %20 = arith.mulf %17, %19 : vector<32x512xf32>
    %21 = arith.truncf %20 : vector<32x512xf32> to vector<32x512xbf16>
    %c64 = arith.constant 64 : index
    %c0_12 = arith.constant 0 : index
    %22 = vector.load %arg10[%c64, %c0_12] : memref<288x512xbf16, #tpu.memory_space<vmem>>, vector<32x512xbf16>
    tpu.vector_store %arg10[%c64, %c0_12], %21 {strides = array<i32>} : memref<288x512xbf16, #tpu.memory_space<vmem>>, vector<32x512xbf16>,
    %c1_i32 = arith.constant 1 : i32
    %23 = tpu.dynamic_rotate %4 by %c1_i32 dim 1 : vector<32x512xf32>, i32 -> vector<32x512xf32>
    %c3 = arith.constant 3 : index
    %c0_13 = arith.constant 0 : index
    %24 = vector.load %arg8[%c3, %c0_13] : memref<9x512xf32, #tpu.memory_space<vmem>>, vector<1x512xf32>
    %25 = vector.broadcast %24 : vector<1x512xf32> to vector<32x512xf32>
    %26 = arith.mulf %23, %25 : vector<32x512xf32>
    %27 = arith.truncf %26 : vector<32x512xf32> to vector<32x512xbf16>
    %c96 = arith.constant 96 : index
    %c0_14 = arith.constant 0 : index
    %28 = vector.load %arg10[%c96, %c0_14] : memref<288x512xbf16, #tpu.memory_space<vmem>>, vector<32x512xbf16>
    tpu.vector_store %arg10[%c96, %c0_14], %27 {strides = array<i32>} : memref<288x512xbf16, #tpu.memory_space<vmem>>, vector<32x512xbf16>,
    %29 = arith.truncf %4 : vector<32x512xf32> to vector<32x512xbf16>
    %c128 = arith.constant 128 : index
    %c0_15 = arith.constant 0 : index
    %30 = vector.load %arg10[%c128, %c0_15] : memref<288x512xbf16, #tpu.memory_space<vmem>>, vector<32x512xbf16>
    tpu.vector_store %arg10[%c128, %c0_15], %29 {strides = array<i32>} : memref<288x512xbf16, #tpu.memory_space<vmem>>, vector<32x512xbf16>,
    %c511_i32 = arith.constant 511 : i32
    %31 = tpu.dynamic_rotate %4 by %c511_i32 dim 1 : vector<32x512xf32>, i32 -> vector<32x512xf32>
    %c5 = arith.constant 5 : index
    %c0_16 = arith.constant 0 : index
    %32 = vector.load %arg8[%c5, %c0_16] : memref<9x512xf32, #tpu.memory_space<vmem>>, vector<1x512xf32>
    %33 = vector.broadcast %32 : vector<1x512xf32> to vector<32x512xf32>
    %34 = arith.mulf %31, %33 : vector<32x512xf32>
    %35 = arith.truncf %34 : vector<32x512xf32> to vector<32x512xbf16>
    %c160 = arith.constant 160 : index
    %c0_17 = arith.constant 0 : index
    %36 = vector.load %arg10[%c160, %c0_17] : memref<288x512xbf16, #tpu.memory_space<vmem>>, vector<32x512xbf16>
    tpu.vector_store %arg10[%c160, %c0_17], %35 {strides = array<i32>} : memref<288x512xbf16, #tpu.memory_space<vmem>>, vector<32x512xbf16>,
    %c497_i32 = arith.constant 497 : i32
    %37 = tpu.dynamic_rotate %4 by %c497_i32 dim 1 : vector<32x512xf32>, i32 -> vector<32x512xf32>
    %c6 = arith.constant 6 : index
    %c0_18 = arith.constant 0 : index
    %38 = vector.load %arg8[%c6, %c0_18] : memref<9x512xf32, #tpu.memory_space<vmem>>, vector<1x512xf32>
    %39 = vector.broadcast %38 : vector<1x512xf32> to vector<32x512xf32>
    %40 = arith.mulf %37, %39 : vector<32x512xf32>
    %41 = arith.truncf %40 : vector<32x512xf32> to vector<32x512xbf16>
    %c192 = arith.constant 192 : index
    %c0_19 = arith.constant 0 : index
    %42 = vector.load %arg10[%c192, %c0_19] : memref<288x512xbf16, #tpu.memory_space<vmem>>, vector<32x512xbf16>
    tpu.vector_store %arg10[%c192, %c0_19], %41 {strides = array<i32>} : memref<288x512xbf16, #tpu.memory_space<vmem>>, vector<32x512xbf16>,
    %c496_i32 = arith.constant 496 : i32
    %43 = tpu.dynamic_rotate %4 by %c496_i32 dim 1 : vector<32x512xf32>, i32 -> vector<32x512xf32>
    %c7 = arith.constant 7 : index
    %c0_20 = arith.constant 0 : index
    %44 = vector.load %arg8[%c7, %c0_20] : memref<9x512xf32, #tpu.memory_space<vmem>>, vector<1x512xf32>
    %45 = vector.broadcast %44 : vector<1x512xf32> to vector<32x512xf32>
    %46 = arith.mulf %43, %45 : vector<32x512xf32>
    %47 = arith.truncf %46 : vector<32x512xf32> to vector<32x512xbf16>
    %c224 = arith.constant 224 : index
    %c0_21 = arith.constant 0 : index
    %48 = vector.load %arg10[%c224, %c0_21] : memref<288x512xbf16, #tpu.memory_space<vmem>>, vector<32x512xbf16>
    tpu.vector_store %arg10[%c224, %c0_21], %47 {strides = array<i32>} : memref<288x512xbf16, #tpu.memory_space<vmem>>, vector<32x512xbf16>,
    %c495_i32 = arith.constant 495 : i32
    %49 = tpu.dynamic_rotate %4 by %c495_i32 dim 1 : vector<32x512xf32>, i32 -> vector<32x512xf32>
    %c8 = arith.constant 8 : index
    %c0_22 = arith.constant 0 : index
    %50 = vector.load %arg8[%c8, %c0_22] : memref<9x512xf32, #tpu.memory_space<vmem>>, vector<1x512xf32>
    %51 = vector.broadcast %50 : vector<1x512xf32> to vector<32x512xf32>
    %52 = arith.mulf %49, %51 : vector<32x512xf32>
    %53 = arith.truncf %52 : vector<32x512xf32> to vector<32x512xbf16>
    %c256 = arith.constant 256 : index
    %c0_23 = arith.constant 0 : index
    %54 = vector.load %arg10[%c256, %c0_23] : memref<288x512xbf16, #tpu.memory_space<vmem>>, vector<32x512xbf16>
    tpu.vector_store %arg10[%c256, %c0_23], %53 {strides = array<i32>} : memref<288x512xbf16, #tpu.memory_space<vmem>>, vector<32x512xbf16>,
    %c0_24 = arith.constant 0 : index
    %c0_25 = arith.constant 0 : index
    %55 = vector.load %arg2[%c0_24, %c0_25] : memref<32x288xbf16, #tpu.memory_space<vmem>>, vector<32x288xbf16>
    %c0_26 = arith.constant 0 : index
    %c0_27 = arith.constant 0 : index
    %56 = vector.load %arg10[%c0_26, %c0_27] : memref<288x512xbf16, #tpu.memory_space<vmem>>, vector<288x512xbf16>
    %cst = arith.constant dense<0.000000e+00> : vector<32x512xf32>
    %57 = tpu.matmul %55, %56, %cst {dimension_numbers = #tpu.dot_dimension_numbers<[1], [0], [0], [1], [0, 0, 1, 1], [], []>} : vector<32x288xbf16>, vector<288x512xbf16>, vector<32x512xf32> -> vector<32x512xf32>
    %cst_28 = arith.constant dense<0.000000e+00> : vector<32xf32>
    %58 = vector.multi_reduction <add>, %57, %cst_28 [1] : vector<32x512xf32> to vector<32xf32>
    %59 = vector.shape_cast %58 : vector<32xf32> to vector<32x1xf32>
    %cst_29 = arith.constant 0.001953125 : f32
    %60 = vector.broadcast %cst_29 : f32 to vector<32x1xf32>
    %61 = arith.mulf %59, %60 : vector<32x1xf32>
    %62 = vector.broadcast %61 : vector<32x1xf32> to vector<32x512xf32>
    %63 = arith.subf %57, %62 : vector<32x512xf32>
    %64 = arith.mulf %63, %63 : vector<32x512xf32>
    %cst_30 = arith.constant dense<0.000000e+00> : vector<32xf32>
    %65 = vector.multi_reduction <add>, %64, %cst_30 [1] : vector<32x512xf32> to vector<32xf32>
    %66 = vector.shape_cast %65 : vector<32xf32> to vector<32x1xf32>
    %cst_31 = arith.constant 0.001953125 : f32
    %67 = vector.broadcast %cst_31 : f32 to vector<32x1xf32>
    %68 = arith.mulf %66, %67 : vector<32x1xf32>
    %cst_32 = arith.constant 9.99999974E-6 : f32
    %69 = vector.broadcast %cst_32 : f32 to vector<32x1xf32>
    %70 = arith.addf %68, %69 : vector<32x1xf32>
    %71 = math.rsqrt %70 : vector<32x1xf32>
    %c0_33 = arith.constant 0 : index
    %c0_34 = arith.constant 0 : index
    %72 = vector.load %arg4[%c0_33, %c0_34] : memref<32x1xf32, #tpu.memory_space<vmem>>, vector<32x1xf32>
    %73 = arith.mulf %71, %72 : vector<32x1xf32>
    %74 = vector.broadcast %73 : vector<32x1xf32> to vector<32x512xf32>
    %75 = arith.mulf %63, %74 : vector<32x512xf32>
    %c0_35 = arith.constant 0 : index
    %c0_36 = arith.constant 0 : index
    %76 = vector.load %arg5[%c0_35, %c0_36] : memref<32x1xf32, #tpu.memory_space<vmem>>, vector<32x1xf32>
    %77 = vector.broadcast %76 : vector<32x1xf32> to vector<32x512xf32>
    %78 = arith.addf %75, %77 : vector<32x512xf32>
    %cst_37 = arith.constant 0.000000e+00 : f32
    %79 = vector.broadcast %cst_37 : f32 to vector<32x512xf32>
    %80 = arith.maximumf %78, %79 : vector<32x512xf32>
    %c17_i32_38 = arith.constant 17 : i32
    %81 = tpu.dynamic_rotate %80 by %c17_i32_38 dim 1 : vector<32x512xf32>, i32 -> vector<32x512xf32>
    %c0_39 = arith.constant 0 : index
    %c0_40 = arith.constant 0 : index
    %82 = vector.load %arg8[%c0_39, %c0_40] : memref<9x512xf32, #tpu.memory_space<vmem>>, vector<1x512xf32>
    %83 = vector.broadcast %82 : vector<1x512xf32> to vector<32x512xf32>
    %84 = arith.mulf %81, %83 : vector<32x512xf32>
    %85 = arith.truncf %84 : vector<32x512xf32> to vector<32x512xbf16>
    %c0_41 = arith.constant 0 : index
    %c0_42 = arith.constant 0 : index
    %86 = vector.load %arg10[%c0_41, %c0_42] : memref<288x512xbf16, #tpu.memory_space<vmem>>, vector<32x512xbf16>
    tpu.vector_store %arg10[%c0_41, %c0_42], %85 {strides = array<i32>} : memref<288x512xbf16, #tpu.memory_space<vmem>>, vector<32x512xbf16>,
    %c16_i32_43 = arith.constant 16 : i32
    %87 = tpu.dynamic_rotate %80 by %c16_i32_43 dim 1 : vector<32x512xf32>, i32 -> vector<32x512xf32>
    %c1_44 = arith.constant 1 : index
    %c0_45 = arith.constant 0 : index
    %88 = vector.load %arg8[%c1_44, %c0_45] : memref<9x512xf32, #tpu.memory_space<vmem>>, vector<1x512xf32>
    %89 = vector.broadcast %88 : vector<1x512xf32> to vector<32x512xf32>
    %90 = arith.mulf %87, %89 : vector<32x512xf32>
    %91 = arith.truncf %90 : vector<32x512xf32> to vector<32x512xbf16>
    %c32_46 = arith.constant 32 : index
    %c0_47 = arith.constant 0 : index
    %92 = vector.load %arg10[%c32_46, %c0_47] : memref<288x512xbf16, #tpu.memory_space<vmem>>, vector<32x512xbf16>
    tpu.vector_store %arg10[%c32_46, %c0_47], %91 {strides = array<i32>} : memref<288x512xbf16, #tpu.memory_space<vmem>>, vector<32x512xbf16>,
    %c15_i32_48 = arith.constant 15 : i32
    %93 = tpu.dynamic_rotate %80 by %c15_i32_48 dim 1 : vector<32x512xf32>, i32 -> vector<32x512xf32>
    %c2_49 = arith.constant 2 : index
    %c0_50 = arith.constant 0 : index
    %94 = vector.load %arg8[%c2_49, %c0_50] : memref<9x512xf32, #tpu.memory_space<vmem>>, vector<1x512xf32>
    %95 = vector.broadcast %94 : vector<1x512xf32> to vector<32x512xf32>
    %96 = arith.mulf %93, %95 : vector<32x512xf32>
    %97 = arith.truncf %96 : vector<32x512xf32> to vector<32x512xbf16>
    %c64_51 = arith.constant 64 : index
    %c0_52 = arith.constant 0 : index
    %98 = vector.load %arg10[%c64_51, %c0_52] : memref<288x512xbf16, #tpu.memory_space<vmem>>, vector<32x512xbf16>
    tpu.vector_store %arg10[%c64_51, %c0_52], %97 {strides = array<i32>} : memref<288x512xbf16, #tpu.memory_space<vmem>>, vector<32x512xbf16>,
    %c1_i32_53 = arith.constant 1 : i32
    %99 = tpu.dynamic_rotate %80 by %c1_i32_53 dim 1 : vector<32x512xf32>, i32 -> vector<32x512xf32>
    %c3_54 = arith.constant 3 : index
    %c0_55 = arith.constant 0 : index
    %100 = vector.load %arg8[%c3_54, %c0_55] : memref<9x512xf32, #tpu.memory_space<vmem>>, vector<1x512xf32>
    %101 = vector.broadcast %100 : vector<1x512xf32> to vector<32x512xf32>
    %102 = arith.mulf %99, %101 : vector<32x512xf32>
    %103 = arith.truncf %102 : vector<32x512xf32> to vector<32x512xbf16>
    %c96_56 = arith.constant 96 : index
    %c0_57 = arith.constant 0 : index
    %104 = vector.load %arg10[%c96_56, %c0_57] : memref<288x512xbf16, #tpu.memory_space<vmem>>, vector<32x512xbf16>
    tpu.vector_store %arg10[%c96_56, %c0_57], %103 {strides = array<i32>} : memref<288x512xbf16, #tpu.memory_space<vmem>>, vector<32x512xbf16>,
    %105 = arith.truncf %80 : vector<32x512xf32> to vector<32x512xbf16>
    %c128_58 = arith.constant 128 : index
    %c0_59 = arith.constant 0 : index
    %106 = vector.load %arg10[%c128_58, %c0_59] : memref<288x512xbf16, #tpu.memory_space<vmem>>, vector<32x512xbf16>
    tpu.vector_store %arg10[%c128_58, %c0_59], %105 {strides = array<i32>} : memref<288x512xbf16, #tpu.memory_space<vmem>>, vector<32x512xbf16>,
    %c511_i32_60 = arith.constant 511 : i32
    %107 = tpu.dynamic_rotate %80 by %c511_i32_60 dim 1 : vector<32x512xf32>, i32 -> vector<32x512xf32>
    %c5_61 = arith.constant 5 : index
    %c0_62 = arith.constant 0 : index
    %108 = vector.load %arg8[%c5_61, %c0_62] : memref<9x512xf32, #tpu.memory_space<vmem>>, vector<1x512xf32>
    %109 = vector.broadcast %108 : vector<1x512xf32> to vector<32x512xf32>
    %110 = arith.mulf %107, %109 : vector<32x512xf32>
    %111 = arith.truncf %110 : vector<32x512xf32> to vector<32x512xbf16>
    %c160_63 = arith.constant 160 : index
    %c0_64 = arith.constant 0 : index
    %112 = vector.load %arg10[%c160_63, %c0_64] : memref<288x512xbf16, #tpu.memory_space<vmem>>, vector<32x512xbf16>
    tpu.vector_store %arg10[%c160_63, %c0_64], %111 {strides = array<i32>} : memref<288x512xbf16, #tpu.memory_space<vmem>>, vector<32x512xbf16>,
    %c497_i32_65 = arith.constant 497 : i32
    %113 = tpu.dynamic_rotate %80 by %c497_i32_65 dim 1 : vector<32x512xf32>, i32 -> vector<32x512xf32>
    %c6_66 = arith.constant 6 : index
    %c0_67 = arith.constant 0 : index
    %114 = vector.load %arg8[%c6_66, %c0_67] : memref<9x512xf32, #tpu.memory_space<vmem>>, vector<1x512xf32>
    %115 = vector.broadcast %114 : vector<1x512xf32> to vector<32x512xf32>
    %116 = arith.mulf %113, %115 : vector<32x512xf32>
    %117 = arith.truncf %116 : vector<32x512xf32> to vector<32x512xbf16>
    %c192_68 = arith.constant 192 : index
    %c0_69 = arith.constant 0 : index
    %118 = vector.load %arg10[%c192_68, %c0_69] : memref<288x512xbf16, #tpu.memory_space<vmem>>, vector<32x512xbf16>
    tpu.vector_store %arg10[%c192_68, %c0_69], %117 {strides = array<i32>} : memref<288x512xbf16, #tpu.memory_space<vmem>>, vector<32x512xbf16>,
    %c496_i32_70 = arith.constant 496 : i32
    %119 = tpu.dynamic_rotate %80 by %c496_i32_70 dim 1 : vector<32x512xf32>, i32 -> vector<32x512xf32>
    %c7_71 = arith.constant 7 : index
    %c0_72 = arith.constant 0 : index
    %120 = vector.load %arg8[%c7_71, %c0_72] : memref<9x512xf32, #tpu.memory_space<vmem>>, vector<1x512xf32>
    %121 = vector.broadcast %120 : vector<1x512xf32> to vector<32x512xf32>
    %122 = arith.mulf %119, %121 : vector<32x512xf32>
    %123 = arith.truncf %122 : vector<32x512xf32> to vector<32x512xbf16>
    %c224_73 = arith.constant 224 : index
    %c0_74 = arith.constant 0 : index
    %124 = vector.load %arg10[%c224_73, %c0_74] : memref<288x512xbf16, #tpu.memory_space<vmem>>, vector<32x512xbf16>
    tpu.vector_store %arg10[%c224_73, %c0_74], %123 {strides = array<i32>} : memref<288x512xbf16, #tpu.memory_space<vmem>>, vector<32x512xbf16>,
    %c495_i32_75 = arith.constant 495 : i32
    %125 = tpu.dynamic_rotate %80 by %c495_i32_75 dim 1 : vector<32x512xf32>, i32 -> vector<32x512xf32>
    %c8_76 = arith.constant 8 : index
    %c0_77 = arith.constant 0 : index
    %126 = vector.load %arg8[%c8_76, %c0_77] : memref<9x512xf32, #tpu.memory_space<vmem>>, vector<1x512xf32>
    %127 = vector.broadcast %126 : vector<1x512xf32> to vector<32x512xf32>
    %128 = arith.mulf %125, %127 : vector<32x512xf32>
    %129 = arith.truncf %128 : vector<32x512xf32> to vector<32x512xbf16>
    %c256_78 = arith.constant 256 : index
    %c0_79 = arith.constant 0 : index
    %130 = vector.load %arg10[%c256_78, %c0_79] : memref<288x512xbf16, #tpu.memory_space<vmem>>, vector<32x512xbf16>
    tpu.vector_store %arg10[%c256_78, %c0_79], %129 {strides = array<i32>} : memref<288x512xbf16, #tpu.memory_space<vmem>>, vector<32x512xbf16>,
    %c0_80 = arith.constant 0 : index
    %c0_81 = arith.constant 0 : index
    %131 = vector.load %arg3[%c0_80, %c0_81] : memref<32x288xbf16, #tpu.memory_space<vmem>>, vector<32x288xbf16>
    %c0_82 = arith.constant 0 : index
    %c0_83 = arith.constant 0 : index
    %132 = vector.load %arg10[%c0_82, %c0_83] : memref<288x512xbf16, #tpu.memory_space<vmem>>, vector<288x512xbf16>
    %cst_84 = arith.constant dense<0.000000e+00> : vector<32x512xf32>
    %133 = tpu.matmul %131, %132, %cst_84 {dimension_numbers = #tpu.dot_dimension_numbers<[1], [0], [0], [1], [0, 0, 1, 1], [], []>} : vector<32x288xbf16>, vector<288x512xbf16>, vector<32x512xf32> -> vector<32x512xf32>
    %cst_85 = arith.constant dense<0.000000e+00> : vector<32xf32>
    %134 = vector.multi_reduction <add>, %133, %cst_85 [1] : vector<32x512xf32> to vector<32xf32>
    %135 = vector.shape_cast %134 : vector<32xf32> to vector<32x1xf32>
    %cst_86 = arith.constant 0.001953125 : f32
    %136 = vector.broadcast %cst_86 : f32 to vector<32x1xf32>
    %137 = arith.mulf %135, %136 : vector<32x1xf32>
    %138 = vector.broadcast %137 : vector<32x1xf32> to vector<32x512xf32>
    %139 = arith.subf %133, %138 : vector<32x512xf32>
    %140 = arith.mulf %139, %139 : vector<32x512xf32>
    %cst_87 = arith.constant dense<0.000000e+00> : vector<32xf32>
    %141 = vector.multi_reduction <add>, %140, %cst_87 [1] : vector<32x512xf32> to vector<32xf32>
    %142 = vector.shape_cast %141 : vector<32xf32> to vector<32x1xf32>
    %cst_88 = arith.constant 0.001953125 : f32
    %143 = vector.broadcast %cst_88 : f32 to vector<32x1xf32>
    %144 = arith.mulf %142, %143 : vector<32x1xf32>
    %cst_89 = arith.constant 9.99999974E-6 : f32
    %145 = vector.broadcast %cst_89 : f32 to vector<32x1xf32>
    %146 = arith.addf %144, %145 : vector<32x1xf32>
    %147 = math.rsqrt %146 : vector<32x1xf32>
    %c0_90 = arith.constant 0 : index
    %c0_91 = arith.constant 0 : index
    %148 = vector.load %arg6[%c0_90, %c0_91] : memref<32x1xf32, #tpu.memory_space<vmem>>, vector<32x1xf32>
    %149 = arith.mulf %147, %148 : vector<32x1xf32>
    %150 = vector.broadcast %149 : vector<32x1xf32> to vector<32x512xf32>
    %151 = arith.mulf %139, %150 : vector<32x512xf32>
    %c0_92 = arith.constant 0 : index
    %c0_93 = arith.constant 0 : index
    %152 = vector.load %arg7[%c0_92, %c0_93] : memref<32x1xf32, #tpu.memory_space<vmem>>, vector<32x1xf32>
    %153 = vector.broadcast %152 : vector<32x1xf32> to vector<32x512xf32>
    %154 = arith.addf %151, %153 : vector<32x512xf32>
    %155 = vector.extract_strided_slice %154 {offsets = [0, 0], sizes = [32, 256], strides = [1, 1]} : vector<32x512xf32> to vector<32x256xf32>
    %c0_94 = arith.constant 0 : index
    %c0_95 = arith.constant 0 : index
    %c0_96 = arith.constant 0 : index
    %156 = vector.load %arg1[%c0_94, %c0_95, %c0_96] : memref<2x32x256xf32, #tpu.memory_space<vmem>>, vector<1x32x256xf32>
    %157 = vector.shape_cast %156 : vector<1x32x256xf32> to vector<32x256xf32>
    %158 = arith.addf %155, %157 : vector<32x256xf32>
    %cst_97 = arith.constant 0.000000e+00 : f32
    %159 = vector.broadcast %cst_97 : f32 to vector<32x256xf32>
    %160 = arith.maximumf %158, %159 : vector<32x256xf32>
    %c0_98 = arith.constant 0 : index
    %c0_99 = arith.constant 0 : index
    %c0_100 = arith.constant 0 : index
    %161 = vector.load %arg9[%c0_98, %c0_99, %c0_100] : memref<2x32x256xf32, #tpu.memory_space<vmem>>, vector<1x32x256xf32>
    %162 = vector.shape_cast %161 : vector<1x32x256xf32> to vector<32x256xf32>
    %163 = vector.shape_cast %160 : vector<32x256xf32> to vector<1x32x256xf32>
    tpu.vector_store %arg9[%c0_98, %c0_99, %c0_100], %163 {strides = array<i32>} : memref<2x32x256xf32, #tpu.memory_space<vmem>>, vector<1x32x256xf32>,
    %164 = vector.extract_strided_slice %154 {offsets = [0, 256], sizes = [32, 256], strides = [1, 1]} : vector<32x512xf32> to vector<32x256xf32>
    %c1_101 = arith.constant 1 : index
    %c0_102 = arith.constant 0 : index
    %c0_103 = arith.constant 0 : index
    %165 = vector.load %arg1[%c1_101, %c0_102, %c0_103] : memref<2x32x256xf32, #tpu.memory_space<vmem>>, vector<1x32x256xf32>
    %166 = vector.shape_cast %165 : vector<1x32x256xf32> to vector<32x256xf32>
    %167 = arith.addf %164, %166 : vector<32x256xf32>
    %cst_104 = arith.constant 0.000000e+00 : f32
    %168 = vector.broadcast %cst_104 : f32 to vector<32x256xf32>
    %169 = arith.maximumf %167, %168 : vector<32x256xf32>
    %c1_105 = arith.constant 1 : index
    %c0_106 = arith.constant 0 : index
    %c0_107 = arith.constant 0 : index
    %170 = vector.load %arg9[%c1_105, %c0_106, %c0_107] : memref<2x32x256xf32, #tpu.memory_space<vmem>>, vector<1x32x256xf32>
    %171 = vector.shape_cast %170 : vector<1x32x256xf32> to vector<32x256xf32>
    %172 = vector.shape_cast %169 : vector<32x256xf32> to vector<1x32x256xf32>
    tpu.vector_store %arg9[%c1_105, %c0_106, %c0_107], %172 {strides = array<i32>} : memref<2x32x256xf32, #tpu.memory_space<vmem>>, vector<1x32x256xf32>,
    return
  }
  func.func @transform_0(%arg0: i32) -> (i32, i32, i32) {
    %c0_i32 = arith.constant 0 : i32
    %c0_i32_0 = arith.constant 0 : i32
    %c0_i32_1 = arith.constant 0 : i32
    %c0_i32_2 = arith.constant 0 : i32
    return %c0_i32, %c0_i32_0, %c0_i32_1 : i32, i32, i32
  }
  func.func @transform_1(%arg0: i32) -> (i32, i32) {
    %c0_i32 = arith.constant 0 : i32
    %c0_i32_0 = arith.constant 0 : i32
    %c0_i32_1 = arith.constant 0 : i32
    return %c0_i32, %c0_i32_0 : i32, i32
  }
  func.func @transform_2(%arg0: i32) -> (i32, i32) {
    %c0_i32 = arith.constant 0 : i32
    %c0_i32_0 = arith.constant 0 : i32
    %c0_i32_1 = arith.constant 0 : i32
    return %c0_i32, %c0_i32_0 : i32, i32
  }
  func.func @transform_3(%arg0: i32) -> (i32, i32) {
    %c0_i32 = arith.constant 0 : i32
    %c0_i32_0 = arith.constant 0 : i32
    %c0_i32_1 = arith.constant 0 : i32
    return %c0_i32, %c0_i32_0 : i32, i32
  }
  func.func @transform_4(%arg0: i32) -> (i32, i32) {
    %c0_i32 = arith.constant 0 : i32
    %c0_i32_0 = arith.constant 0 : i32
    %c0_i32_1 = arith.constant 0 : i32
    return %c0_i32, %c0_i32_0 : i32, i32
  }
  func.func @transform_5(%arg0: i32) -> (i32, i32) {
    %c0_i32 = arith.constant 0 : i32
    %c0_i32_0 = arith.constant 0 : i32
    %c0_i32_1 = arith.constant 0 : i32
    return %c0_i32, %c0_i32_0 : i32, i32
  }
  func.func @transform_6(%arg0: i32) -> (i32, i32) {
    %c0_i32 = arith.constant 0 : i32
    %c0_i32_0 = arith.constant 0 : i32
    %c0_i32_1 = arith.constant 0 : i32
    return %c0_i32, %c0_i32_0 : i32, i32
  }
  func.func @transform_7(%arg0: i32) -> (i32, i32) {
    %c0_i32 = arith.constant 0 : i32
    %c0_i32_0 = arith.constant 0 : i32
    %c0_i32_1 = arith.constant 0 : i32
    return %c0_i32, %c0_i32_0 : i32, i32
  }
  func.func @transform_8(%arg0: i32) -> (i32, i32, i32) {
    %c0_i32 = arith.constant 0 : i32
    %c0_i32_0 = arith.constant 0 : i32
    %c0_i32_1 = arith.constant 0 : i32
    %c0_i32_2 = arith.constant 0 : i32
    return %c0_i32, %c0_i32_0, %c0_i32_1 : i32, i32, i32
  }
}

</mosaic_0001>

<llo_original>
// kernel: resnet_block.1
$region0: #{resnet_block.1}
  #allocation0 [shape = 'u32[]', space=smem, size = 0x4, offset = 0x4, fixed_abs, tag = 'smem constant byte address 0x4 - core index']
  #allocation1 [shape = 'u32[144,128]{1,0:T(1,128)}', space=vmem, size = 0x12000, scoped, tag = 'internal scratch']
  #allocation2 [shape = 'bf16[288,512]{1,0:T(16,128)(2,1)}', space=vmem, size = 0x48000, scoped, tag = 'scratch operand']
  %s0 = inlined_call_operand.vmem [shape: f32[2,32,256], index: 0, kind: input, shape index: {}]
  %s1 = inlined_call_operand.vmem [shape: bf16[32,288], index: 1, kind: input, shape index: {}]
  %s2 = inlined_call_operand.vmem [shape: bf16[32,288], index: 2, kind: input, shape index: {}]
  %s3 = inlined_call_operand.vmem [shape: f32[32,1], index: 3, kind: input, shape index: {}]
  %s4 = inlined_call_operand.vmem [shape: f32[32,1], index: 4, kind: input, shape index: {}]
  %s5 = inlined_call_operand.vmem [shape: f32[32,1], index: 5, kind: input, shape index: {}]
  %s6 = inlined_call_operand.vmem [shape: f32[32,1], index: 6, kind: input, shape index: {}]
  %s7 = inlined_call_operand.vmem [shape: f32[9,512], index: 7, kind: input, shape index: {}]
  %s8 = inlined_call_operand.vmem [shape: f32[2,32,256], index: 8, kind: output, shape index: {}]
  %s9 = sld [smem:[#allocation0]]
  $region42: #{resnet_block.1} parent=0
    _
  %s11 = ssub.s32 1, %s9
  %s12 = scalar_select 0, %s11, %s9
  // Predicated region
  $region2: #{resnet_block.1} parent=0 // pred_check
    _
  $region3: #{resnet_block.1} parent=0 // pred_check_branch
    %14 = sbr.rel (0) target = $region5
  $region4: #{resnet_block.1} parent=0 // pred_region
    _
  $region5: #{resnet_block.1} parent=0 // pred_fallthru
    _
  // Predicated region
  $region6: #{resnet_block.1} parent=0 // pred_check
    _
  $region7: #{resnet_block.1} parent=0 // pred_check_branch
    %16 = sbr.rel (0) target = $region9
  $region8: #{resnet_block.1} parent=0 // pred_region
    _
  $region9: #{resnet_block.1} parent=0 // pred_fallthru
    _
  // Predicated region
  $region10: #{resnet_block.1} parent=0 // pred_check
    _
  $region11: #{resnet_block.1} parent=0 // pred_check_branch
    %18 = sbr.rel (0) target = $region13
  $region12: #{resnet_block.1} parent=0 // pred_region
    _
  $region13: #{resnet_block.1} parent=0 // pred_fallthru
    _
  // Predicated region
  $region14: #{resnet_block.1} parent=0 // pred_check
    _
  $region15: #{resnet_block.1} parent=0 // pred_check_branch
    %20 = sbr.rel (0) target = $region17
  $region16: #{resnet_block.1} parent=0 // pred_region
    _
  $region17: #{resnet_block.1} parent=0 // pred_fallthru
    _
  // Predicated region
  $region18: #{resnet_block.1} parent=0 // pred_check
    _
  $region19: #{resnet_block.1} parent=0 // pred_check_branch
    %22 = sbr.rel (0) target = $region21
  $region20: #{resnet_block.1} parent=0 // pred_region
    _
  $region21: #{resnet_block.1} parent=0 // pred_fallthru
    _
  // Predicated region
  $region22: #{resnet_block.1} parent=0 // pred_check
    _
  $region23: #{resnet_block.1} parent=0 // pred_check_branch
    %24 = sbr.rel (0) target = $region25
  $region24: #{resnet_block.1} parent=0 // pred_region
    _
  $region25: #{resnet_block.1} parent=0 // pred_fallthru
    _
  // Predicated region
  $region26: #{resnet_block.1} parent=0 // pred_check
    _
  $region27: #{resnet_block.1} parent=0 // pred_check_branch
    %26 = sbr.rel (0) target = $region29
  $region28: #{resnet_block.1} parent=0 // pred_region
    _
  $region29: #{resnet_block.1} parent=0 // pred_fallthru
    _
  // Predicated region
  $region30: #{resnet_block.1} parent=0 // pred_check
    _
  $region31: #{resnet_block.1} parent=0 // pred_check_branch
    %28 = sbr.rel (0) target = $region33
  $region32: #{resnet_block.1} parent=0 // pred_region
    _
  $region33: #{resnet_block.1} parent=0 // pred_fallthru
    _
  %v30 = vld [vmem:[%s0] sm:$0xff]
  %v31 = vld [vmem:[%s0 + $0x8] sm:$0xff]
  %v32 = vld [vmem:[%s0 + $0x10] sm:$0xff]
  %v33 = vld [vmem:[%s0 + $0x18] sm:$0xff]
  %v34 = vld [vmem:[%s0 + $0x20] sm:$0xff]
  %v35 = vld [vmem:[%s0 + $0x28] sm:$0xff]
  %v36 = vld [vmem:[%s0 + $0x30] sm:$0xff]
  %v37 = vld [vmem:[%s0 + $0x38] sm:$0xff]
  %s38 = scalar_lea.vmem %s0, 64
  %v39 = vld [vmem:[%s38] sm:$0xff]
  %v40 = vld [vmem:[%s38 + $0x8] sm:$0xff]
  %v41 = vld [vmem:[%s38 + $0x10] sm:$0xff]
  %v42 = vld [vmem:[%s38 + $0x18] sm:$0xff]
  %v43 = vld [vmem:[%s38 + $0x20] sm:$0xff]
  %v44 = vld [vmem:[%s38 + $0x28] sm:$0xff]
  %v45 = vld [vmem:[%s38 + $0x30] sm:$0xff]
  %v46 = vld [vmem:[%s38 + $0x38] sm:$0xff]
  %47 = vrot.lane.b32.xlu0 %v30, 17
  %v48 = vpop.permute.xlu0 %47
  %49 = vrot.lane.b32.xlu0 %v32, 17
  %v50 = vpop.permute.xlu0 %49
  %51 = vrot.lane.b32.xlu0 %v34, 17
  %v52 = vpop.permute.xlu0 %51
  %53 = vrot.lane.b32.xlu0 %v36, 17
  %v54 = vpop.permute.xlu0 %53
  %55 = vrot.lane.b32.xlu0 %v31, 17
  %v56 = vpop.permute.xlu0 %55
  %57 = vrot.lane.b32.xlu0 %v33, 17
  %v58 = vpop.permute.xlu0 %57
  %59 = vrot.lane.b32.xlu0 %v35, 17
  %v60 = vpop.permute.xlu0 %59
  %61 = vrot.lane.b32.xlu0 %v37, 17
  %v62 = vpop.permute.xlu0 %61
  %63 = vrot.lane.b32.xlu0 %v39, 17
  %v64 = vpop.permute.xlu0 %63
  %65 = vrot.lane.b32.xlu0 %v41, 17
  %v66 = vpop.permute.xlu0 %65
  %67 = vrot.lane.b32.xlu0 %v43, 17
  %v68 = vpop.permute.xlu0 %67
  %69 = vrot.lane.b32.xlu0 %v45, 17
  %v70 = vpop.permute.xlu0 %69
  %71 = vrot.lane.b32.xlu0 %v40, 17
  %v72 = vpop.permute.xlu0 %71
  %73 = vrot.lane.b32.xlu0 %v42, 17
  %v74 = vpop.permute.xlu0 %73
  %75 = vrot.lane.b32.xlu0 %v44, 17
  %v76 = vpop.permute.xlu0 %75
  %77 = vrot.lane.b32.xlu0 %v46, 17
  %v78 = vpop.permute.xlu0 %77
  %v79 = vlaneseq
  %v80 = vand.u32 %v79, 127
  %vm81 = vcmp.lt.s32.totalorder %v80, 17
  %v82 = vsel %vm81, %v64, %v72
  %v83 = vsel %vm81, %v66, %v74
  %v84 = vsel %vm81, %v68, %v76
  %v85 = vsel %vm81, %v70, %v78
  %v86 = vsel %vm81, %v56, %v64
  %v87 = vsel %vm81, %v58, %v66
  %v88 = vsel %vm81, %v60, %v68
  %v89 = vsel %vm81, %v62, %v70
  %v90 = vsel %vm81, %v48, %v56
  %v91 = vsel %vm81, %v50, %v58
  %v92 = vsel %vm81, %v52, %v60
  %v93 = vsel %vm81, %v54, %v62
  %v94 = vsel %vm81, %v72, %v48
  %v95 = vsel %vm81, %v74, %v50
  %v96 = vsel %vm81, %v76, %v52
  %v97 = vsel %vm81, %v78, %v54
  %v98 = vld [vmem:[%s7] ss:$8 sm:$0xf]
  %v100 = vlaneseq
  %v101 = vshrl.u32 %v100, 7
  %v102 = vsub.s32 0, %v101
  %v103 = vrot.slane %v98, %v102
  %v104 = vlaneseq
  %v105 = vshrl.u32 %v104, 7
  %v106 = vsub.s32 1, %v105
  %v107 = vrot.slane %v98, %v106
  %v108 = vlaneseq
  %v109 = vshrl.u32 %v108, 7
  %v110 = vsub.s32 2, %v109
  %v111 = vrot.slane %v98, %v110
  %v112 = vlaneseq
  %v113 = vshrl.u32 %v112, 7
  %v114 = vsub.s32 3, %v113
  %v115 = vrot.slane %v98, %v114
  %v120 = vmul.f32 %v94, %v103
  %v121 = vmul.f32 %v90, %v107
  %v122 = vmul.f32 %v86, %v111
  %v123 = vmul.f32 %v82, %v115
  %v124 = vmul.f32 %v95, %v103
  %v125 = vmul.f32 %v91, %v107
  %v126 = vmul.f32 %v87, %v111
  %v127 = vmul.f32 %v83, %v115
  %v128 = vmul.f32 %v96, %v103
  %v129 = vmul.f32 %v92, %v107
  %v130 = vmul.f32 %v88, %v111
  %v131 = vmul.f32 %v84, %v115
  %v132 = vmul.f32 %v97, %v103
  %v133 = vmul.f32 %v93, %v107
  %v134 = vmul.f32 %v89, %v111
  %v135 = vmul.f32 %v85, %v115
  %v136 = vpack.c.bf16 %v124, %v120
  %v137 = vpack.c.bf16 %v125, %v121
  %v138 = vpack.c.bf16 %v126, %v122
  %v139 = vpack.c.bf16 %v127, %v123
  %v140 = vpack.c.bf16 %v132, %v128
  %v141 = vpack.c.bf16 %v133, %v129
  %v142 = vpack.c.bf16 %v134, %v130
  %v143 = vpack.c.bf16 %v135, %v131
  %144 = vst [vmem:[#allocation2] sm:$0xff] %v136
  %145 = vst [vmem:[#allocation2 + $0x8] sm:$0xff] %v137
  %146 = vst [vmem:[#allocation2 + $0x10] sm:$0xff] %v138
  %147 = vst [vmem:[#allocation2 + $0x18] sm:$0xff] %v139
  %148 = vst [vmem:[#allocation2 + $0x20] sm:$0xff] %v140
  %149 = vst [vmem:[#allocation2 + $0x28] sm:$0xff] %v141
  %150 = vst [vmem:[#allocation2 + $0x30] sm:$0xff] %v142
  %151 = vst [vmem:[#allocation2 + $0x38] sm:$0xff] %v143
  %152 = vrot.lane.b32.xlu0 %v30, 16
  %v153 = vpop.permute.xlu0 %152
  %154 = vrot.lane.b32.xlu0 %v32, 16
  %v155 = vpop.permute.xlu0 %154
  %156 = vrot.lane.b32.xlu0 %v34, 16
  %v157 = vpop.permute.xlu0 %156
  %158 = vrot.lane.b32.xlu0 %v36, 16
  %v159 = vpop.permute.xlu0 %158
  %160 = vrot.lane.b32.xlu0 %v31, 16
  %v161 = vpop.permute.xlu0 %160
  %162 = vrot.lane.b32.xlu0 %v33, 16
  %v163 = vpop.permute.xlu0 %162
  %164 = vrot.lane.b32.xlu0 %v35, 16
  %v165 = vpop.permute.xlu0 %164
  %166 = vrot.lane.b32.xlu0 %v37, 16
  %v167 = vpop.permute.xlu0 %166
  %168 = vrot.lane.b32.xlu0 %v39, 16
  %v169 = vpop.permute.xlu0 %168
  %170 = vrot.lane.b32.xlu0 %v41, 16
  %v171 = vpop.permute.xlu0 %170
  %172 = vrot.lane.b32.xlu0 %v43, 16
  %v173 = vpop.permute.xlu0 %172
  %174 = vrot.lane.b32.xlu0 %v45, 16
  %v175 = vpop.permute.xlu0 %174
  %176 = vrot.lane.b32.xlu0 %v40, 16
  %v177 = vpop.permute.xlu0 %176
  %178 = vrot.lane.b32.xlu0 %v42, 16
  %v179 = vpop.permute.xlu0 %178
  %180 = vrot.lane.b32.xlu0 %v44, 16
  %v181 = vpop.permute.xlu0 %180
  %182 = vrot.lane.b32.xlu0 %v46, 16
  %v183 = vpop.permute.xlu0 %182
  %vm184 = vcmp.lt.s32.totalorder %v80, 16
  %v185 = vsel %vm184, %v169, %v177
  %v186 = vsel %vm184, %v171, %v179
  %v187 = vsel %vm184, %v173, %v181
  %v188 = vsel %vm184, %v175, %v183
  %v189 = vsel %vm184, %v161, %v169
  %v190 = vsel %vm184, %v163, %v171
  %v191 = vsel %vm184, %v165, %v173
  %v192 = vsel %vm184, %v167, %v175
  %v193 = vsel %vm184, %v153, %v161
  %v194 = vsel %vm184, %v155, %v163
  %v195 = vsel %vm184, %v157, %v165
  %v196 = vsel %vm184, %v159, %v167
  %v197 = vsel %vm184, %v177, %v153
  %v198 = vsel %vm184, %v179, %v155
  %v199 = vsel %vm184, %v181, %v157
  %v200 = vsel %vm184, %v183, %v159
  %s201 = scalar_lea.vmem %s7, 1
  %v202 = vld [vmem:[%s201] ss:$8 sm:$0xf]
  %v204 = vlaneseq
  %v205 = vshrl.u32 %v204, 7
  %v206 = vsub.s32 0, %v205
  %v207 = vrot.slane %v202, %v206
  %v208 = vlaneseq
  %v209 = vshrl.u32 %v208, 7
  %v210 = vsub.s32 1, %v209
  %v211 = vrot.slane %v202, %v210
  %v212 = vlaneseq
  %v213 = vshrl.u32 %v212, 7
  %v214 = vsub.s32 2, %v213
  %v215 = vrot.slane %v202, %v214
  %v216 = vlaneseq
  %v217 = vshrl.u32 %v216, 7
  %v218 = vsub.s32 3, %v217
  %v219 = vrot.slane %v202, %v218
  %v224 = vmul.f32 %v197, %v207
  %v225 = vmul.f32 %v193, %v211
  %v226 = vmul.f32 %v189, %v215
  %v227 = vmul.f32 %v185, %v219
  %v228 = vmul.f32 %v198, %v207
  %v229 = vmul.f32 %v194, %v211
  %v230 = vmul.f32 %v190, %v215
  %v231 = vmul.f32 %v186, %v219
  %v232 = vmul.f32 %v199, %v207
  %v233 = vmul.f32 %v195, %v211
  %v234 = vmul.f32 %v191, %v215
  %v235 = vmul.f32 %v187, %v219
  %v236 = vmul.f32 %v200, %v207
  %v237 = vmul.f32 %v196, %v211
  %v238 = vmul.f32 %v192, %v215
  %v239 = vmul.f32 %v188, %v219
  %v240 = vpack.c.bf16 %v228, %v224
  %v241 = vpack.c.bf16 %v229, %v225
  %v242 = vpack.c.bf16 %v230, %v226
  %v243 = vpack.c.bf16 %v231, %v227
  %v244 = vpack.c.bf16 %v236, %v232
  %v245 = vpack.c.bf16 %v237, %v233
  %v246 = vpack.c.bf16 %v238, %v234
  %v247 = vpack.c.bf16 %v239, %v235
  %248 = vst [vmem:[#allocation2 + $0x40] sm:$0xff] %v240
  %249 = vst [vmem:[#allocation2 + $0x48] sm:$0xff] %v241
  %250 = vst [vmem:[#allocation2 + $0x50] sm:$0xff] %v242
  %251 = vst [vmem:[#allocation2 + $0x58] sm:$0xff] %v243
  %252 = vst [vmem:[#allocation2 + $0x60] sm:$0xff] %v244
  %253 = vst [vmem:[#allocation2 + $0x68] sm:$0xff] %v245
  %254 = vst [vmem:[#allocation2 + $0x70] sm:$0xff] %v246
  %255 = vst [vmem:[#allocation2 + $0x78] sm:$0xff] %v247
  %256 = vrot.lane.b32.xlu0 %v30, 15
  %v257 = vpop.permute.xlu0 %256
  %258 = vrot.lane.b32.xlu0 %v32, 15
  %v259 = vpop.permute.xlu0 %258
  %260 = vrot.lane.b32.xlu0 %v34, 15
  %v261 = vpop.permute.xlu0 %260
  %262 = vrot.lane.b32.xlu0 %v36, 15
  %v263 = vpop.permute.xlu0 %262
  %264 = vrot.lane.b32.xlu0 %v31, 15
  %v265 = vpop.permute.xlu0 %264
  %266 = vrot.lane.b32.xlu0 %v33, 15
  %v267 = vpop.permute.xlu0 %266
  %268 = vrot.lane.b32.xlu0 %v35, 15
  %v269 = vpop.permute.xlu0 %268
  %270 = vrot.lane.b32.xlu0 %v37, 15
  %v271 = vpop.permute.xlu0 %270
  %272 = vrot.lane.b32.xlu0 %v39, 15
  %v273 = vpop.permute.xlu0 %272
  %274 = vrot.lane.b32.xlu0 %v41, 15
  %v275 = vpop.permute.xlu0 %274
  %276 = vrot.lane.b32.xlu0 %v43, 15
  %v277 = vpop.permute.xlu0 %276
  %278 = vrot.lane.b32.xlu0 %v45, 15
  %v279 = vpop.permute.xlu0 %278
  %280 = vrot.lane.b32.xlu0 %v40, 15
  %v281 = vpop.permute.xlu0 %280
  %282 = vrot.lane.b32.xlu0 %v42, 15
  %v283 = vpop.permute.xlu0 %282
  %284 = vrot.lane.b32.xlu0 %v44, 15
  %v285 = vpop.permute.xlu0 %284
  %286 = vrot.lane.b32.xlu0 %v46, 15
  %v287 = vpop.permute.xlu0 %286
  %vm288 = vcmp.lt.s32.totalorder %v80, 15
  %v289 = vsel %vm288, %v273, %v281
  %v290 = vsel %vm288, %v275, %v283
  %v291 = vsel %vm288, %v277, %v285
  %v292 = vsel %vm288, %v279, %v287
  %v293 = vsel %vm288, %v265, %v273
  %v294 = vsel %vm288, %v267, %v275
  %v295 = vsel %vm288, %v269, %v277
  %v296 = vsel %vm288, %v271, %v279
  %v297 = vsel %vm288, %v257, %v265
  %v298 = vsel %vm288, %v259, %v267
  %v299 = vsel %vm288, %v261, %v269
  %v300 = vsel %vm288, %v263, %v271
  %v301 = vsel %vm288, %v281, %v257
  %v302 = vsel %vm288, %v283, %v259
  %v303 = vsel %vm288, %v285, %v261
  %v304 = vsel %vm288, %v287, %v263
  %s305 = scalar_lea.vmem %s7, 2
  %v306 = vld [vmem:[%s305] ss:$8 sm:$0xf]
  %v308 = vlaneseq
  %v309 = vshrl.u32 %v308, 7
  %v310 = vsub.s32 0, %v309
  %v311 = vrot.slane %v306, %v310
  %v312 = vlaneseq
  %v313 = vshrl.u32 %v312, 7
  %v314 = vsub.s32 1, %v313
  %v315 = vrot.slane %v306, %v314
  %v316 = vlaneseq
  %v317 = vshrl.u32 %v316, 7
  %v318 = vsub.s32 2, %v317
  %v319 = vrot.slane %v306, %v318
  %v320 = vlaneseq
  %v321 = vshrl.u32 %v320, 7
  %v322 = vsub.s32 3, %v321
  %v323 = vrot.slane %v306, %v322
  %v328 = vmul.f32 %v301, %v311
  %v329 = vmul.f32 %v297, %v315
  %v330 = vmul.f32 %v293, %v319
  %v331 = vmul.f32 %v289, %v323
  %v332 = vmul.f32 %v302, %v311
  %v333 = vmul.f32 %v298, %v315
  %v334 = vmul.f32 %v294, %v319
  %v335 = vmul.f32 %v290, %v323
  %v336 = vmul.f32 %v303, %v311
  %v337 = vmul.f32 %v299, %v315
  %v338 = vmul.f32 %v295, %v319
  %v339 = vmul.f32 %v291, %v323
  %v340 = vmul.f32 %v304, %v311
  %v341 = vmul.f32 %v300, %v315
  %v342 = vmul.f32 %v296, %v319
  %v343 = vmul.f32 %v292, %v323
  %v344 = vpack.c.bf16 %v332, %v328
  %v345 = vpack.c.bf16 %v333, %v329
  %v346 = vpack.c.bf16 %v334, %v330
  %v347 = vpack.c.bf16 %v335, %v331
  %v348 = vpack.c.bf16 %v340, %v336
  %v349 = vpack.c.bf16 %v341, %v337
  %v350 = vpack.c.bf16 %v342, %v338
  %v351 = vpack.c.bf16 %v343, %v339
  %352 = vst [vmem:[#allocation2 + $0x80] sm:$0xff] %v344
  %353 = vst [vmem:[#allocation2 + $0x88] sm:$0xff] %v345
  %354 = vst [vmem:[#allocation2 + $0x90] sm:$0xff] %v346
  %355 = vst [vmem:[#allocation2 + $0x98] sm:$0xff] %v347
  %356 = vst [vmem:[#allocation2 + $0xa0] sm:$0xff] %v348
  %357 = vst [vmem:[#allocation2 + $0xa8] sm:$0xff] %v349
  %358 = vst [vmem:[#allocation2 + $0xb0] sm:$0xff] %v350
  %359 = vst [vmem:[#allocation2 + $0xb8] sm:$0xff] %v351
  %360 = vrot.lane.b32.xlu0 %v30, 1
  %v361 = vpop.permute.xlu0 %360
  %362 = vrot.lane.b32.xlu0 %v32, 1
  %v363 = vpop.permute.xlu0 %362
  %364 = vrot.lane.b32.xlu0 %v34, 1
  %v365 = vpop.permute.xlu0 %364
  %366 = vrot.lane.b32.xlu0 %v36, 1
  %v367 = vpop.permute.xlu0 %366
  %368 = vrot.lane.b32.xlu0 %v31, 1
  %v369 = vpop.permute.xlu0 %368
  %370 = vrot.lane.b32.xlu0 %v33, 1
  %v371 = vpop.permute.xlu0 %370
  %372 = vrot.lane.b32.xlu0 %v35, 1
  %v373 = vpop.permute.xlu0 %372
  %374 = vrot.lane.b32.xlu0 %v37, 1
  %v375 = vpop.permute.xlu0 %374
  %376 = vrot.lane.b32.xlu0 %v39, 1
  %v377 = vpop.permute.xlu0 %376
  %378 = vrot.lane.b32.xlu0 %v41, 1
  %v379 = vpop.permute.xlu0 %378
  %380 = vrot.lane.b32.xlu0 %v43, 1
  %v381 = vpop.permute.xlu0 %380
  %382 = vrot.lane.b32.xlu0 %v45, 1
  %v383 = vpop.permute.xlu0 %382
  %384 = vrot.lane.b32.xlu0 %v40, 1
  %v385 = vpop.permute.xlu0 %384
  %386 = vrot.lane.b32.xlu0 %v42, 1
  %v387 = vpop.permute.xlu0 %386
  %388 = vrot.lane.b32.xlu0 %v44, 1
  %v389 = vpop.permute.xlu0 %388
  %390 = vrot.lane.b32.xlu0 %v46, 1
  %v391 = vpop.permute.xlu0 %390
  %vm392 = vcmp.lt.s32.totalorder %v80, 1
  %v393 = vsel %vm392, %v377, %v385
  %v394 = vsel %vm392, %v379, %v387
  %v395 = vsel %vm392, %v381, %v389
  %v396 = vsel %vm392, %v383, %v391
  %v397 = vsel %vm392, %v369, %v377
  %v398 = vsel %vm392, %v371, %v379
  %v399 = vsel %vm392, %v373, %v381
  %v400 = vsel %vm392, %v375, %v383
  %v401 = vsel %vm392, %v361, %v369
  %v402 = vsel %vm392, %v363, %v371
  %v403 = vsel %vm392, %v365, %v373
  %v404 = vsel %vm392, %v367, %v375
  %v405 = vsel %vm392, %v385, %v361
  %v406 = vsel %vm392, %v387, %v363
  %v407 = vsel %vm392, %v389, %v365
  %v408 = vsel %vm392, %v391, %v367
  %s409 = scalar_lea.vmem %s7, 3
  %v410 = vld [vmem:[%s409] ss:$8 sm:$0xf]
  %v412 = vlaneseq
  %v413 = vshrl.u32 %v412, 7
  %v414 = vsub.s32 0, %v413
  %v415 = vrot.slane %v410, %v414
  %v416 = vlaneseq
  %v417 = vshrl.u32 %v416, 7
  %v418 = vsub.s32 1, %v417
  %v419 = vrot.slane %v410, %v418
  %v420 = vlaneseq
  %v421 = vshrl.u32 %v420, 7
  %v422 = vsub.s32 2, %v421
  %v423 = vrot.slane %v410, %v422
  %v424 = vlaneseq
  %v425 = vshrl.u32 %v424, 7
  %v426 = vsub.s32 3, %v425
  %v427 = vrot.slane %v410, %v426
  %v432 = vmul.f32 %v405, %v415
  %v433 = vmul.f32 %v401, %v419
  %v434 = vmul.f32 %v397, %v423
  %v435 = vmul.f32 %v393, %v427
  %v436 = vmul.f32 %v406, %v415
  %v437 = vmul.f32 %v402, %v419
  %v438 = vmul.f32 %v398, %v423
  %v439 = vmul.f32 %v394, %v427
  %v440 = vmul.f32 %v407, %v415
  %v441 = vmul.f32 %v403, %v419
  %v442 = vmul.f32 %v399, %v423
  %v443 = vmul.f32 %v395, %v427
  %v444 = vmul.f32 %v408, %v415
  %v445 = vmul.f32 %v404, %v419
  %v446 = vmul.f32 %v400, %v423
  %v447 = vmul.f32 %v396, %v427
  %v448 = vpack.c.bf16 %v436, %v432
  %v449 = vpack.c.bf16 %v437, %v433
  %v450 = vpack.c.bf16 %v438, %v434
  %v451 = vpack.c.bf16 %v439, %v435
  %v452 = vpack.c.bf16 %v444, %v440
  %v453 = vpack.c.bf16 %v445, %v441
  %v454 = vpack.c.bf16 %v446, %v442
  %v455 = vpack.c.bf16 %v447, %v443
  %456 = vst [vmem:[#allocation2 + $0xc0] sm:$0xff] %v448
  %457 = vst [vmem:[#allocation2 + $0xc8] sm:$0xff] %v449
  %458 = vst [vmem:[#allocation2 + $0xd0] sm:$0xff] %v450
  %459 = vst [vmem:[#allocation2 + $0xd8] sm:$0xff] %v451
  %460 = vst [vmem:[#allocation2 + $0xe0] sm:$0xff] %v452
  %461 = vst [vmem:[#allocation2 + $0xe8] sm:$0xff] %v453
  %462 = vst [vmem:[#allocation2 + $0xf0] sm:$0xff] %v454
  %463 = vst [vmem:[#allocation2 + $0xf8] sm:$0xff] %v455
  %v464 = vpack.c.bf16 %v32, %v30
  %v465 = vpack.c.bf16 %v33, %v31
  %v466 = vpack.c.bf16 %v41, %v39
  %v467 = vpack.c.bf16 %v42, %v40
  %v468 = vpack.c.bf16 %v36, %v34
  %v469 = vpack.c.bf16 %v37, %v35
  %v470 = vpack.c.bf16 %v45, %v43
  %v471 = vpack.c.bf16 %v46, %v44
  %472 = vst [vmem:[#allocation2 + $0x100] sm:$0xff] %v464
  %473 = vst [vmem:[#allocation2 + $0x108] sm:$0xff] %v465
  %474 = vst [vmem:[#allocation2 + $0x110] sm:$0xff] %v466
  %475 = vst [vmem:[#allocation2 + $0x118] sm:$0xff] %v467
  %476 = vst [vmem:[#allocation2 + $0x120] sm:$0xff] %v468
  %477 = vst [vmem:[#allocation2 + $0x128] sm:$0xff] %v469
  %478 = vst [vmem:[#allocation2 + $0x130] sm:$0xff] %v470
  %479 = vst [vmem:[#allocation2 + $0x138] sm:$0xff] %v471
  %480 = vrot.lane.b32.xlu0 %v30, 127
  %v481 = vpop.permute.xlu0 %480
  %482 = vrot.lane.b32.xlu0 %v32, 127
  %v483 = vpop.permute.xlu0 %482
  %484 = vrot.lane.b32.xlu0 %v34, 127
  %v485 = vpop.permute.xlu0 %484
  %486 = vrot.lane.b32.xlu0 %v36, 127
  %v487 = vpop.permute.xlu0 %486
  %488 = vrot.lane.b32.xlu0 %v31, 127
  %v489 = vpop.permute.xlu0 %488
  %490 = vrot.lane.b32.xlu0 %v33, 127
  %v491 = vpop.permute.xlu0 %490
  %492 = vrot.lane.b32.xlu0 %v35, 127
  %v493 = vpop.permute.xlu0 %492
  %494 = vrot.lane.b32.xlu0 %v37, 127
  %v495 = vpop.permute.xlu0 %494
  %496 = vrot.lane.b32.xlu0 %v39, 127
  %v497 = vpop.permute.xlu0 %496
  %498 = vrot.lane.b32.xlu0 %v41, 127
  %v499 = vpop.permute.xlu0 %498
  %500 = vrot.lane.b32.xlu0 %v43, 127
  %v501 = vpop.permute.xlu0 %500
  %502 = vrot.lane.b32.xlu0 %v45, 127
  %v503 = vpop.permute.xlu0 %502
  %504 = vrot.lane.b32.xlu0 %v40, 127
  %v505 = vpop.permute.xlu0 %504
  %506 = vrot.lane.b32.xlu0 %v42, 127
  %v507 = vpop.permute.xlu0 %506
  %508 = vrot.lane.b32.xlu0 %v44, 127
  %v509 = vpop.permute.xlu0 %508
  %510 = vrot.lane.b32.xlu0 %v46, 127
  %v511 = vpop.permute.xlu0 %510
  %vm512 = vcmp.lt.s32.totalorder %v80, 127
  %v513 = vsel %vm512, %v497, %v505
  %v514 = vsel %vm512, %v499, %v507
  %v515 = vsel %vm512, %v501, %v509
  %v516 = vsel %vm512, %v503, %v511
  %v517 = vsel %vm512, %v489, %v497
  %v518 = vsel %vm512, %v491, %v499
  %v519 = vsel %vm512, %v493, %v501
  %v520 = vsel %vm512, %v495, %v503
  %v521 = vsel %vm512, %v481, %v489
  %v522 = vsel %vm512, %v483, %v491
  %v523 = vsel %vm512, %v485, %v493
  %v524 = vsel %vm512, %v487, %v495
  %v525 = vsel %vm512, %v505, %v481
  %v526 = vsel %vm512, %v507, %v483
  %v527 = vsel %vm512, %v509, %v485
  %v528 = vsel %vm512, %v511, %v487
  %s529 = scalar_lea.vmem %s7, 5
  %v530 = vld [vmem:[%s529] ss:$8 sm:$0xf]
  %v532 = vlaneseq
  %v533 = vshrl.u32 %v532, 7
  %v534 = vsub.s32 0, %v533
  %v535 = vrot.slane %v530, %v534
  %v536 = vlaneseq
  %v537 = vshrl.u32 %v536, 7
  %v538 = vsub.s32 1, %v537
  %v539 = vrot.slane %v530, %v538
  %v540 = vlaneseq
  %v541 = vshrl.u32 %v540, 7
  %v542 = vsub.s32 2, %v541
  %v543 = vrot.slane %v530, %v542
  %v544 = vlaneseq
  %v545 = vshrl.u32 %v544, 7
  %v546 = vsub.s32 3, %v545
  %v547 = vrot.slane %v530, %v546
  %v552 = vmul.f32 %v521, %v535
  %v553 = vmul.f32 %v517, %v539
  %v554 = vmul.f32 %v513, %v543
  %v555 = vmul.f32 %v525, %v547
  %v556 = vmul.f32 %v522, %v535
  %v557 = vmul.f32 %v518, %v539
  %v558 = vmul.f32 %v514, %v543
  %v559 = vmul.f32 %v526, %v547
  %v560 = vmul.f32 %v523, %v535
  %v561 = vmul.f32 %v519, %v539
  %v562 = vmul.f32 %v515, %v543
  %v563 = vmul.f32 %v527, %v547
  %v564 = vmul.f32 %v524, %v535
  %v565 = vmul.f32 %v520, %v539
  %v566 = vmul.f32 %v516, %v543
  %v567 = vmul.f32 %v528, %v547
  %v568 = vpack.c.bf16 %v556, %v552
  %v569 = vpack.c.bf16 %v557, %v553
  %v570 = vpack.c.bf16 %v558, %v554
  %v571 = vpack.c.bf16 %v559, %v555
  %v572 = vpack.c.bf16 %v564, %v560
  %v573 = vpack.c.bf16 %v565, %v561
  %v574 = vpack.c.bf16 %v566, %v562
  %v575 = vpack.c.bf16 %v567, %v563
  %576 = vst [vmem:[#allocation2 + $0x140] sm:$0xff] %v568
  %577 = vst [vmem:[#allocation2 + $0x148] sm:$0xff] %v569
  %578 = vst [vmem:[#allocation2 + $0x150] sm:$0xff] %v570
  %579 = vst [vmem:[#allocation2 + $0x158] sm:$0xff] %v571
  %580 = vst [vmem:[#allocation2 + $0x160] sm:$0xff] %v572
  %581 = vst [vmem:[#allocation2 + $0x168] sm:$0xff] %v573
  %582 = vst [vmem:[#allocation2 + $0x170] sm:$0xff] %v574
  %583 = vst [vmem:[#allocation2 + $0x178] sm:$0xff] %v575
  %584 = vrot.lane.b32.xlu0 %v30, 113
  %v585 = vpop.permute.xlu0 %584
  %586 = vrot.lane.b32.xlu0 %v32, 113
  %v587 = vpop.permute.xlu0 %586
  %588 = vrot.lane.b32.xlu0 %v34, 113
  %v589 = vpop.permute.xlu0 %588
  %590 = vrot.lane.b32.xlu0 %v36, 113
  %v591 = vpop.permute.xlu0 %590
  %592 = vrot.lane.b32.xlu0 %v31, 113
  %v593 = vpop.permute.xlu0 %592
  %594 = vrot.lane.b32.xlu0 %v33, 113
  %v595 = vpop.permute.xlu0 %594
  %596 = vrot.lane.b32.xlu0 %v35, 113
  %v597 = vpop.permute.xlu0 %596
  %598 = vrot.lane.b32.xlu0 %v37, 113
  %v599 = vpop.permute.xlu0 %598
  %600 = vrot.lane.b32.xlu0 %v39, 113
  %v601 = vpop.permute.xlu0 %600
  %602 = vrot.lane.b32.xlu0 %v41, 113
  %v603 = vpop.permute.xlu0 %602
  %604 = vrot.lane.b32.xlu0 %v43, 113
  %v605 = vpop.permute.xlu0 %604
  %606 = vrot.lane.b32.xlu0 %v45, 113
  %v607 = vpop.permute.xlu0 %606
  %608 = vrot.lane.b32.xlu0 %v40, 113
  %v609 = vpop.permute.xlu0 %608
  %610 = vrot.lane.b32.xlu0 %v42, 113
  %v611 = vpop.permute.xlu0 %610
  %612 = vrot.lane.b32.xlu0 %v44, 113
  %v613 = vpop.permute.xlu0 %612
  %614 = vrot.lane.b32.xlu0 %v46, 113
  %v615 = vpop.permute.xlu0 %614
  %vm616 = vcmp.lt.s32.totalorder %v80, 113
  %v617 = vsel %vm616, %v601, %v609
  %v618 = vsel %vm616, %v603, %v611
  %v619 = vsel %vm616, %v605, %v613
  %v620 = vsel %vm616, %v607, %v615
  %v621 = vsel %vm616, %v593, %v601
  %v622 = vsel %vm616, %v595, %v603
  %v623 = vsel %vm616, %v597, %v605
  %v624 = vsel %vm616, %v599, %v607
  %v625 = vsel %vm616, %v585, %v593
  %v626 = vsel %vm616, %v587, %v595
  %v627 = vsel %vm616, %v589, %v597
  %v628 = vsel %vm616, %v591, %v599
  %v629 = vsel %vm616, %v609, %v585
  %v630 = vsel %vm616, %v611, %v587
  %v631 = vsel %vm616, %v613, %v589
  %v632 = vsel %vm616, %v615, %v591
  %s633 = scalar_lea.vmem %s7, 6
  %v634 = vld [vmem:[%s633] ss:$8 sm:$0xf]
  %v636 = vlaneseq
  %v637 = vshrl.u32 %v636, 7
  %v638 = vsub.s32 0, %v637
  %v639 = vrot.slane %v634, %v638
  %v640 = vlaneseq
  %v641 = vshrl.u32 %v640, 7
  %v642 = vsub.s32 1, %v641
  %v643 = vrot.slane %v634, %v642
  %v644 = vlaneseq
  %v645 = vshrl.u32 %v644, 7
  %v646 = vsub.s32 2, %v645
  %v647 = vrot.slane %v634, %v646
  %v648 = vlaneseq
  %v649 = vshrl.u32 %v648, 7
  %v650 = vsub.s32 3, %v649
  %v651 = vrot.slane %v634, %v650
  %v656 = vmul.f32 %v625, %v639
  %v657 = vmul.f32 %v621, %v643
  %v658 = vmul.f32 %v617, %v647
  %v659 = vmul.f32 %v629, %v651
  %v660 = vmul.f32 %v626, %v639
  %v661 = vmul.f32 %v622, %v643
  %v662 = vmul.f32 %v618, %v647
  %v663 = vmul.f32 %v630, %v651
  %v664 = vmul.f32 %v627, %v639
  %v665 = vmul.f32 %v623, %v643
  %v666 = vmul.f32 %v619, %v647
  %v667 = vmul.f32 %v631, %v651
  %v668 = vmul.f32 %v628, %v639
  %v669 = vmul.f32 %v624, %v643
  %v670 = vmul.f32 %v620, %v647
  %v671 = vmul.f32 %v632, %v651
  %v672 = vpack.c.bf16 %v660, %v656
  %v673 = vpack.c.bf16 %v661, %v657
  %v674 = vpack.c.bf16 %v662, %v658
  %v675 = vpack.c.bf16 %v663, %v659
  %v676 = vpack.c.bf16 %v668, %v664
  %v677 = vpack.c.bf16 %v669, %v665
  %v678 = vpack.c.bf16 %v670, %v666
  %v679 = vpack.c.bf16 %v671, %v667
  %680 = vst [vmem:[#allocation2 + $0x180] sm:$0xff] %v672
  %681 = vst [vmem:[#allocation2 + $0x188] sm:$0xff] %v673
  %682 = vst [vmem:[#allocation2 + $0x190] sm:$0xff] %v674
  %683 = vst [vmem:[#allocation2 + $0x198] sm:$0xff] %v675
  %684 = vst [vmem:[#allocation2 + $0x1a0] sm:$0xff] %v676
  %685 = vst [vmem:[#allocation2 + $0x1a8] sm:$0xff] %v677
  %686 = vst [vmem:[#allocation2 + $0x1b0] sm:$0xff] %v678
  %687 = vst [vmem:[#allocation2 + $0x1b8] sm:$0xff] %v679
  %688 = vrot.lane.b32.xlu0 %v30, 112
  %v689 = vpop.permute.xlu0 %688
  %690 = vrot.lane.b32.xlu0 %v32, 112
  %v691 = vpop.permute.xlu0 %690
  %692 = vrot.lane.b32.xlu0 %v34, 112
  %v693 = vpop.permute.xlu0 %692
  %694 = vrot.lane.b32.xlu0 %v36, 112
  %v695 = vpop.permute.xlu0 %694
  %696 = vrot.lane.b32.xlu0 %v31, 112
  %v697 = vpop.permute.xlu0 %696
  %698 = vrot.lane.b32.xlu0 %v33, 112
  %v699 = vpop.permute.xlu0 %698
  %700 = vrot.lane.b32.xlu0 %v35, 112
  %v701 = vpop.permute.xlu0 %700
  %702 = vrot.lane.b32.xlu0 %v37, 112
  %v703 = vpop.permute.xlu0 %702
  %704 = vrot.lane.b32.xlu0 %v39, 112
  %v705 = vpop.permute.xlu0 %704
  %706 = vrot.lane.b32.xlu0 %v41, 112
  %v707 = vpop.permute.xlu0 %706
  %708 = vrot.lane.b32.xlu0 %v43, 112
  %v709 = vpop.permute.xlu0 %708
  %710 = vrot.lane.b32.xlu0 %v45, 112
  %v711 = vpop.permute.xlu0 %710
  %712 = vrot.lane.b32.xlu0 %v40, 112
  %v713 = vpop.permute.xlu0 %712
  %714 = vrot.lane.b32.xlu0 %v42, 112
  %v715 = vpop.permute.xlu0 %714
  %716 = vrot.lane.b32.xlu0 %v44, 112
  %v717 = vpop.permute.xlu0 %716
  %718 = vrot.lane.b32.xlu0 %v46, 112
  %v719 = vpop.permute.xlu0 %718
  %vm720 = vcmp.lt.s32.totalorder %v80, 112
  %v721 = vsel %vm720, %v705, %v713
  %v722 = vsel %vm720, %v707, %v715
  %v723 = vsel %vm720, %v709, %v717
  %v724 = vsel %vm720, %v711, %v719
  %v725 = vsel %vm720, %v697, %v705
  %v726 = vsel %vm720, %v699, %v707
  %v727 = vsel %vm720, %v701, %v709
  %v728 = vsel %vm720, %v703, %v711
  %v729 = vsel %vm720, %v689, %v697
  %v730 = vsel %vm720, %v691, %v699
  %v731 = vsel %vm720, %v693, %v701
  %v732 = vsel %vm720, %v695, %v703
  %v733 = vsel %vm720, %v713, %v689
  %v734 = vsel %vm720, %v715, %v691
  %v735 = vsel %vm720, %v717, %v693
  %v736 = vsel %vm720, %v719, %v695
  %s737 = scalar_lea.vmem %s7, 7
  %v738 = vld [vmem:[%s737] ss:$8 sm:$0xf]
  %v740 = vlaneseq
  %v741 = vshrl.u32 %v740, 7
  %v742 = vsub.s32 0, %v741
  %v743 = vrot.slane %v738, %v742
  %v744 = vlaneseq
  %v745 = vshrl.u32 %v744, 7
  %v746 = vsub.s32 1, %v745
  %v747 = vrot.slane %v738, %v746
  %v748 = vlaneseq
  %v749 = vshrl.u32 %v748, 7
  %v750 = vsub.s32 2, %v749
  %v751 = vrot.slane %v738, %v750
  %v752 = vlaneseq
  %v753 = vshrl.u32 %v752, 7
  %v754 = vsub.s32 3, %v753
  %v755 = vrot.slane %v738, %v754
  %v760 = vmul.f32 %v729, %v743
  %v761 = vmul.f32 %v725, %v747
  %v762 = vmul.f32 %v721, %v751
  %v763 = vmul.f32 %v733, %v755
  %v764 = vmul.f32 %v730, %v743
  %v765 = vmul.f32 %v726, %v747
  %v766 = vmul.f32 %v722, %v751
  %v767 = vmul.f32 %v734, %v755
  %v768 = vmul.f32 %v731, %v743
  %v769 = vmul.f32 %v727, %v747
  %v770 = vmul.f32 %v723, %v751
  %v771 = vmul.f32 %v735, %v755
  %v772 = vmul.f32 %v732, %v743
  %v773 = vmul.f32 %v728, %v747
  %v774 = vmul.f32 %v724, %v751
  %v775 = vmul.f32 %v736, %v755
  %v776 = vpack.c.bf16 %v764, %v760
  %v777 = vpack.c.bf16 %v765, %v761
  %v778 = vpack.c.bf16 %v766, %v762
  %v779 = vpack.c.bf16 %v767, %v763
  %v780 = vpack.c.bf16 %v772, %v768
  %v781 = vpack.c.bf16 %v773, %v769
  %v782 = vpack.c.bf16 %v774, %v770
  %v783 = vpack.c.bf16 %v775, %v771
  %784 = vst [vmem:[#allocation2 + $0x1c0] sm:$0xff] %v776
  %785 = vst [vmem:[#allocation2 + $0x1c8] sm:$0xff] %v777
  %786 = vst [vmem:[#allocation2 + $0x1d0] sm:$0xff] %v778
  %787 = vst [vmem:[#allocation2 + $0x1d8] sm:$0xff] %v779
  %788 = vst [vmem:[#allocation2 + $0x1e0] sm:$0xff] %v780
  %789 = vst [vmem:[#allocation2 + $0x1e8] sm:$0xff] %v781
  %790 = vst [vmem:[#allocation2 + $0x1f0] sm:$0xff] %v782
  %791 = vst [vmem:[#allocation2 + $0x1f8] sm:$0xff] %v783
  %792 = vrot.lane.b32.xlu0 %v30, 111
  %v793 = vpop.permute.xlu0 %792
  %794 = vrot.lane.b32.xlu0 %v32, 111
  %v795 = vpop.permute.xlu0 %794
  %796 = vrot.lane.b32.xlu0 %v34, 111
  %v797 = vpop.permute.xlu0 %796
  %798 = vrot.lane.b32.xlu0 %v36, 111
  %v799 = vpop.permute.xlu0 %798
  %800 = vrot.lane.b32.xlu0 %v31, 111
  %v801 = vpop.permute.xlu0 %800
  %802 = vrot.lane.b32.xlu0 %v33, 111
  %v803 = vpop.permute.xlu0 %802
  %804 = vrot.lane.b32.xlu0 %v35, 111
  %v805 = vpop.permute.xlu0 %804
  %806 = vrot.lane.b32.xlu0 %v37, 111
  %v807 = vpop.permute.xlu0 %806
  %808 = vrot.lane.b32.xlu0 %v39, 111
  %v809 = vpop.permute.xlu0 %808
  %810 = vrot.lane.b32.xlu0 %v41, 111
  %v811 = vpop.permute.xlu0 %810
  %812 = vrot.lane.b32.xlu0 %v43, 111
  %v813 = vpop.permute.xlu0 %812
  %814 = vrot.lane.b32.xlu0 %v45, 111
  %v815 = vpop.permute.xlu0 %814
  %816 = vrot.lane.b32.xlu0 %v40, 111
  %v817 = vpop.permute.xlu0 %816
  %818 = vrot.lane.b32.xlu0 %v42, 111
  %v819 = vpop.permute.xlu0 %818
  %820 = vrot.lane.b32.xlu0 %v44, 111
  %v821 = vpop.permute.xlu0 %820
  %822 = vrot.lane.b32.xlu0 %v46, 111
  %v823 = vpop.permute.xlu0 %822
  %vm824 = vcmp.lt.s32.totalorder %v80, 111
  %v825 = vsel %vm824, %v809, %v817
  %v826 = vsel %vm824, %v811, %v819
  %v827 = vsel %vm824, %v813, %v821
  %v828 = vsel %vm824, %v815, %v823
  %v829 = vsel %vm824, %v801, %v809
  %v830 = vsel %vm824, %v803, %v811
  %v831 = vsel %vm824, %v805, %v813
  %v832 = vsel %vm824, %v807, %v815
  %v833 = vsel %vm824, %v793, %v801
  %v834 = vsel %vm824, %v795, %v803
  %v835 = vsel %vm824, %v797, %v805
  %v836 = vsel %vm824, %v799, %v807
  %v837 = vsel %vm824, %v817, %v793
  %v838 = vsel %vm824, %v819, %v795
  %v839 = vsel %vm824, %v821, %v797
  %v840 = vsel %vm824, %v823, %v799
  %s841 = scalar_lea.vmem %s7, 32
  %v842 = vld [vmem:[%s841] ss:$8 sm:$0xf]
  %v844 = vlaneseq
  %v845 = vshrl.u32 %v844, 7
  %v846 = vsub.s32 0, %v845
  %v847 = vrot.slane %v842, %v846
  %v848 = vlaneseq
  %v849 = vshrl.u32 %v848, 7
  %v850 = vsub.s32 1, %v849
  %v851 = vrot.slane %v842, %v850
  %v852 = vlaneseq
  %v853 = vshrl.u32 %v852, 7
  %v854 = vsub.s32 2, %v853
  %v855 = vrot.slane %v842, %v854
  %v856 = vlaneseq
  %v857 = vshrl.u32 %v856, 7
  %v858 = vsub.s32 3, %v857
  %v859 = vrot.slane %v842, %v858
  %v864 = vmul.f32 %v833, %v847
  %v865 = vmul.f32 %v829, %v851
  %v866 = vmul.f32 %v825, %v855
  %v867 = vmul.f32 %v837, %v859
  %v868 = vmul.f32 %v834, %v847
  %v869 = vmul.f32 %v830, %v851
  %v870 = vmul.f32 %v826, %v855
  %v871 = vmul.f32 %v838, %v859
  %v872 = vmul.f32 %v835, %v847
  %v873 = vmul.f32 %v831, %v851
  %v874 = vmul.f32 %v827, %v855
  %v875 = vmul.f32 %v839, %v859
  %v876 = vmul.f32 %v836, %v847
  %v877 = vmul.f32 %v832, %v851
  %v878 = vmul.f32 %v828, %v855
  %v879 = vmul.f32 %v840, %v859
  %v880 = vpack.c.bf16 %v868, %v864
  %v881 = vpack.c.bf16 %v869, %v865
  %v882 = vpack.c.bf16 %v870, %v866
  %v883 = vpack.c.bf16 %v871, %v867
  %v884 = vpack.c.bf16 %v876, %v872
  %v885 = vpack.c.bf16 %v877, %v873
  %v886 = vpack.c.bf16 %v878, %v874
  %v887 = vpack.c.bf16 %v879, %v875
  %888 = vst [vmem:[#allocation2 + $0x200] sm:$0xff] %v880
  %889 = vst [vmem:[#allocation2 + $0x208] sm:$0xff] %v881
  %890 = vst [vmem:[#allocation2 + $0x210] sm:$0xff] %v882
  %891 = vst [vmem:[#allocation2 + $0x218] sm:$0xff] %v883
  %892 = vst [vmem:[#allocation2 + $0x220] sm:$0xff] %v884
  %893 = vst [vmem:[#allocation2 + $0x228] sm:$0xff] %v885
  %894 = vst [vmem:[#allocation2 + $0x230] sm:$0xff] %v886
  %895 = vst [vmem:[#allocation2 + $0x238] sm:$0xff] %v887
  %v896 = vld [vmem:[%s1] sm:$0xff]
  %v897 = vld [vmem:[%s1 + $0x8] sm:$0xf]
  %v898 = vld [vmem:[%s1 + $0xc] sm:$0xff]
  %v899 = vld [vmem:[%s1 + $0x14] sm:$0xf]
  %v900 = vld [vmem:[%s1 + $0x18] sm:$0xff]
  %v901 = vld [vmem:[%s1 + $0x20] sm:$0xf]
  %v902 = vld [vmem:[%s1 + $0x24] sm:$0xff]
  %v903 = vld [vmem:[%s1 + $0x2c] sm:$0xf]
  %v904 = vld [vmem:[#allocation2] sm:$0xff]
  %v905 = vld [vmem:[#allocation2 + $0x8] sm:$0xff]
  %v906 = vld [vmem:[#allocation2 + $0x10] sm:$0xff]
  %v907 = vld [vmem:[#allocation2 + $0x18] sm:$0xff]
  %v908 = vld [vmem:[#allocation2 + $0x20] sm:$0xff]
  %v909 = vld [vmem:[#allocation2 + $0x28] sm:$0xff]
  %v910 = vld [vmem:[#allocation2 + $0x30] sm:$0xff]
  %v911 = vld [vmem:[#allocation2 + $0x38] sm:$0xff]
  %v912 = vld [vmem:[#allocation2 + $0x40] sm:$0xff]
  %v913 = vld [vmem:[#allocation2 + $0x48] sm:$0xff]
  %v914 = vld [vmem:[#allocation2 + $0x50] sm:$0xff]
  %v915 = vld [vmem:[#allocation2 + $0x58] sm:$0xff]
  %v916 = vld [vmem:[#allocation2 + $0x60] sm:$0xff]
  %v917 = vld [vmem:[#allocation2 + $0x68] sm:$0xff]
  %v918 = vld [vmem:[#allocation2 + $0x70] sm:$0xff]
  %v919 = vld [vmem:[#allocation2 + $0x78] sm:$0xff]
  %v920 = vld [vmem:[#allocation2 + $0x80] sm:$0xff]
  %v921 = vld [vmem:[#allocation2 + $0x88] sm:$0xff]
  %v922 = vld [vmem:[#allocation2 + $0x90] sm:$0xff]
  %v923 = vld [vmem:[#allocation2 + $0x98] sm:$0xff]
  %v924 = vld [vmem:[#allocation2 + $0xa0] sm:$0xff]
  %v925 = vld [vmem:[#allocation2 + $0xa8] sm:$0xff]
  %v926 = vld [vmem:[#allocation2 + $0xb0] sm:$0xff]
  %v927 = vld [vmem:[#allocation2 + $0xb8] sm:$0xff]
  %v928 = vld [vmem:[#allocation2 + $0xc0] sm:$0xff]
  %v929 = vld [vmem:[#allocation2 + $0xc8] sm:$0xff]
  %v930 = vld [vmem:[#allocation2 + $0xd0] sm:$0xff]
  %v931 = vld [vmem:[#allocation2 + $0xd8] sm:$0xff]
  %v932 = vld [vmem:[#allocation2 + $0xe0] sm:$0xff]
  %v933 = vld [vmem:[#allocation2 + $0xe8] sm:$0xff]
  %v934 = vld [vmem:[#allocation2 + $0xf0] sm:$0xff]
  %v935 = vld [vmem:[#allocation2 + $0xf8] sm:$0xff]
  %v936 = vld [vmem:[#allocation2 + $0x100] sm:$0xff]
  %v937 = vld [vmem:[#allocation2 + $0x108] sm:$0xff]
  %v938 = vld [vmem:[#allocation2 + $0x110] sm:$0xff]
  %v939 = vld [vmem:[#allocation2 + $0x118] sm:$0xff]
  %v940 = vld [vmem:[#allocation2 + $0x120] sm:$0xff]
  %v941 = vld [vmem:[#allocation2 + $0x128] sm:$0xff]
  %v942 = vld [vmem:[#allocation2 + $0x130] sm:$0xff]
  %v943 = vld [vmem:[#allocation2 + $0x138] sm:$0xff]
  %v944 = vld [vmem:[#allocation2 + $0x140] sm:$0xff]
  %v945 = vld [vmem:[#allocation2 + $0x148] sm:$0xff]
  %v946 = vld [vmem:[#allocation2 + $0x150] sm:$0xff]
  %v947 = vld [vmem:[#allocation2 + $0x158] sm:$0xff]
  %v948 = vld [vmem:[#allocation2 + $0x160] sm:$0xff]
  %v949 = vld [vmem:[#allocation2 + $0x168] sm:$0xff]
  %v950 = vld [vmem:[#allocation2 + $0x170] sm:$0xff]
  %v951 = vld [vmem:[#allocation2 + $0x178] sm:$0xff]
  %v952 = vld [vmem:[#allocation2 + $0x180] sm:$0xff]
  %v953 = vld [vmem:[#allocation2 + $0x188] sm:$0xff]
  %v954 = vld [vmem:[#allocation2 + $0x190] sm:$0xff]
  %v955 = vld [vmem:[#allocation2 + $0x198] sm:$0xff]
  %v956 = vld [vmem:[#allocation2 + $0x1a0] sm:$0xff]
  %v957 = vld [vmem:[#allocation2 + $0x1a8] sm:$0xff]
  %v958 = vld [vmem:[#allocation2 + $0x1b0] sm:$0xff]
  %v959 = vld [vmem:[#allocation2 + $0x1b8] sm:$0xff]
  %v960 = vld [vmem:[#allocation2 + $0x1c0] sm:$0xff]
  %v961 = vld [vmem:[#allocation2 + $0x1c8] sm:$0xff]
  %v962 = vld [vmem:[#allocation2 + $0x1d0] sm:$0xff]
  %v963 = vld [vmem:[#allocation2 + $0x1d8] sm:$0xff]
  %v964 = vld [vmem:[#allocation2 + $0x1e0] sm:$0xff]
  %v965 = vld [vmem:[#allocation2 + $0x1e8] sm:$0xff]
  %v966 = vld [vmem:[#allocation2 + $0x1f0] sm:$0xff]
  %v967 = vld [vmem:[#allocation2 + $0x1f8] sm:$0xff]
  %v968 = vld [vmem:[#allocation2 + $0x200] sm:$0xff]
  %v969 = vld [vmem:[#allocation2 + $0x208] sm:$0xff]
  %v970 = vld [vmem:[#allocation2 + $0x210] sm:$0xff]
  %v971 = vld [vmem:[#allocation2 + $0x218] sm:$0xff]
  %v972 = vld [vmem:[#allocation2 + $0x220] sm:$0xff]
  %v973 = vld [vmem:[#allocation2 + $0x228] sm:$0xff]
  %v974 = vld [vmem:[#allocation2 + $0x230] sm:$0xff]
  %v975 = vld [vmem:[#allocation2 + $0x238] sm:$0xff]
  %v984 = vunpack.c.l.b16 %v896
  %v985 = vunpack.c.h.b16 %v896
  %v986 = vunpack.c.l.b16 %v897
  %v987 = vunpack.c.l.b16 %v898
  %v988 = vunpack.c.h.b16 %v898
  %v989 = vunpack.c.l.b16 %v899
  %v990 = vunpack.c.l.b16 %v900
  %v991 = vunpack.c.h.b16 %v900
  %v992 = vunpack.c.l.b16 %v901
  %v993 = vunpack.c.l.b16 %v902
  %v994 = vunpack.c.h.b16 %v902
  %v995 = vunpack.c.l.b16 %v903
  %v996 = vpack.c.b16 %v987, %v984
  %v997 = vpack.c.b16 %v988, %v985
  %v998 = vpack.c.b16 %v989, %v986
  %v999 = vpack.c.b16 %v993, %v990
  %v1000 = vpack.c.b16 %v994, %v991
  %v1001 = vpack.c.b16 %v995, %v992
  %vm1006 = vcmask 261120
  %v1008 = vsel %vm1006, %v998, 0
  %v1011 = vsel %vm1006, %v1001, 0
  %1013 = vmatprep.subr.bf16.mxu0 %v905
  %1014 = vmatpush1.bf16.msra.mxu0 %v904
  %1015 = vmatprep.subr.bf16.mxu0 %v909
  %1016 = vmatpush1.bf16.msra.mxu0 %v908
  %1017 = vmatprep.subr.bf16.mxu0 %v913
  %1018 = vmatpush1.bf16.msra.mxu0 %v912
  %1019 = vmatprep.subr.bf16.mxu0 %v917
  %1020 = vmatpush1.bf16.msra.mxu0 %v916
  %1021 = vmatprep.subr.bf16.mxu0 %v921
  %1022 = vmatpush1.bf16.msra.mxu0 %v920
  %1023 = vmatprep.subr.bf16.mxu0 %v925
  %1024 = vmatpush1.bf16.msra.mxu0 %v924
  %1025 = vmatprep.subr.bf16.mxu0 %v929
  %1026 = vmatpush1.bf16.msra.mxu0 %v928
  %1027 = vmatprep.subr.bf16.mxu0 %v933
  %1028 = vmatpush1.bf16.msra.mxu0 %v932
  %1029 = vmatprep.subr.bf16.mxu0 %v937
  %1030 = vmatpush1.bf16.msra.mxu0 %v936
  %1031 = vmatprep.subr.bf16.mxu0 %v941
  %1032 = vmatpush1.bf16.msra.mxu0 %v940
  %1033 = vmatprep.subr.bf16.mxu0 %v945
  %1034 = vmatpush1.bf16.msra.mxu0 %v944
  %1035 = vmatprep.subr.bf16.mxu0 %v949
  %1036 = vmatpush1.bf16.msra.mxu0 %v948
  %1037 = vmatprep.subr.bf16.mxu0 %v953
  %1038 = vmatpush1.bf16.msra.mxu0 %v952
  %1039 = vmatprep.subr.bf16.mxu0 %v957
  %1040 = vmatpush1.bf16.msra.mxu0 %v956
  %1041 = vmatprep.subr.bf16.mxu0 %v961
  %1042 = vmatpush1.bf16.msra.mxu0 %v960
  %1043 = vmatprep.subr.bf16.mxu0 %v965
  %1044 = vmatpush1.bf16.msra.mxu0 %v964
  %1045 = vmatprep.mubr.bf16.mxu0 %v997
  %1046 = vmatmul.mubr.bf16.gmra.mrb[0].mxu0 %v996
  %v1047 = vpop.f32.mrb[0].mxu0
  %v1048 = vadd.f32 0.0, %v1047
  %v1049 = vpop.f32.mrb[0].mxu0
  %v1050 = vadd.f32 0.0, %v1049
  %v1051 = vpop.f32.mrb[0].mxu0
  %v1052 = vadd.f32 0.0, %v1051
  %v1053 = vpop.f32.mrb[0].mxu0
  %v1054 = vadd.f32 0.0, %v1053
  %1055 = vmatprep.mubr.bf16.mxu0 %v1000
  %1056 = vmatmul.mubr.bf16.gmra.mrb[0].mxu0 %v999
  %v1057 = vpop.f32.mrb[0].mxu0
  %v1058 = vadd.f32 0.0, %v1057
  %v1059 = vpop.f32.mrb[0].mxu0
  %v1060 = vadd.f32 0.0, %v1059
  %v1061 = vpop.f32.mrb[0].mxu0
  %v1062 = vadd.f32 0.0, %v1061
  %v1063 = vpop.f32.mrb[0].mxu0
  %v1064 = vadd.f32 0.0, %v1063
  %1065 = vdwg.mxu0
  %1066 = vmatprep.subr.bf16.mxu0 %v969
  %1067 = vmatpush1.bf16.msra.mxu0 %v968
  %1068 = vmatprep.subr.bf16.mxu0 %v973
  %1069 = vmatpush1.bf16.msra.mxu0 %v972
  %1070 = vmatprep.subr.bf16.mxu0 0
  %1071 = vmatpush1.bf16.msra.mxu0 0
  %1072 = vmatprep.subr.bf16.mxu0 0
  %1073 = vmatpush1.bf16.msra.mxu0 0
  %1074 = vmatprep.subr.bf16.mxu0 0
  %1075 = vmatpush1.bf16.msra.mxu0 0
  %1076 = vmatprep.subr.bf16.mxu0 0
  %1077 = vmatpush1.bf16.msra.mxu0 0
  %1078 = vmatprep.subr.bf16.mxu0 0
  %1079 = vmatpush1.bf16.msra.mxu0 0
  %1080 = vmatprep.subr.bf16.mxu0 0
  %1081 = vmatpush1.bf16.msra.mxu0 0
  %1082 = vmatprep.subr.bf16.mxu0 0
  %1083 = vmatpush1.bf16.msra.mxu0 0
  %1084 = vmatprep.subr.bf16.mxu0 0
  %1085 = vmatpush1.bf16.msra.mxu0 0
  %1086 = vmatprep.subr.bf16.mxu0 0
  %1087 = vmatpush1.bf16.msra.mxu0 0
  %1088 = vmatprep.subr.bf16.mxu0 0
  %1089 = vmatpush1.bf16.msra.mxu0 0
  %1090 = vmatprep.subr.bf16.mxu0 0
  %1091 = vmatpush1.bf16.msra.mxu0 0
  %1092 = vmatprep.subr.bf16.mxu0 0
  %1093 = vmatpush1.bf16.msra.mxu0 0
  %1094 = vmatprep.subr.bf16.mxu0 0
  %1095 = vmatpush1.bf16.msra.mxu0 0
  %1096 = vmatprep.subr.bf16.mxu0 0
  %1097 = vmatpush1.bf16.msra.mxu0 0
  %1098 = vmatprep.mubr.bf16.mxu0 0
  %1099 = vmatmul.mubr.bf16.gmra.mrb[0].mxu0 %v1008
  %v1100 = vpop.f32.mrb[0].mxu0
  %v1101 = vadd.f32 %v1048, %v1100
  %v1102 = vpop.f32.mrb[0].mxu0
  %v1103 = vadd.f32 %v1050, %v1102
  %v1104 = vpop.f32.mrb[0].mxu0
  %v1105 = vadd.f32 %v1052, %v1104
  %v1106 = vpop.f32.mrb[0].mxu0
  %v1107 = vadd.f32 %v1054, %v1106
  %1108 = vmatprep.mubr.bf16.mxu0 0
  %1109 = vmatmul.mubr.bf16.gmra.mrb[0].mxu0 %v1011
  %v1110 = vpop.f32.mrb[0].mxu0
  %v1111 = vadd.f32 %v1058, %v1110
  %v1112 = vpop.f32.mrb[0].mxu0
  %v1113 = vadd.f32 %v1060, %v1112
  %v1114 = vpop.f32.mrb[0].mxu0
  %v1115 = vadd.f32 %v1062, %v1114
  %v1116 = vpop.f32.mrb[0].mxu0
  %v1117 = vadd.f32 %v1064, %v1116
  %1118 = vdwg.mxu0
  %1119 = vmatprep.subr.bf16.mxu0 %v907
  %1120 = vmatpush1.bf16.msra.mxu0 %v906
  %1121 = vmatprep.subr.bf16.mxu0 %v911
  %1122 = vmatpush1.bf16.msra.mxu0 %v910
  %1123 = vmatprep.subr.bf16.mxu0 %v915
  %1124 = vmatpush1.bf16.msra.mxu0 %v914
  %1125 = vmatprep.subr.bf16.mxu0 %v919
  %1126 = vmatpush1.bf16.msra.mxu0 %v918
  %1127 = vmatprep.subr.bf16.mxu0 %v923
  %1128 = vmatpush1.bf16.msra.mxu0 %v922
  %1129 = vmatprep.subr.bf16.mxu0 %v927
  %1130 = vmatpush1.bf16.msra.mxu0 %v926
  %1131 = vmatprep.subr.bf16.mxu0 %v931
  %1132 = vmatpush1.bf16.msra.mxu0 %v930
  %1133 = vmatprep.subr.bf16.mxu0 %v935
  %1134 = vmatpush1.bf16.msra.mxu0 %v934
  %1135 = vmatprep.subr.bf16.mxu0 %v939
  %1136 = vmatpush1.bf16.msra.mxu0 %v938
  %1137 = vmatprep.subr.bf16.mxu0 %v943
  %1138 = vmatpush1.bf16.msra.mxu0 %v942
  %1139 = vmatprep.subr.bf16.mxu0 %v947
  %1140 = vmatpush1.bf16.msra.mxu0 %v946
  %1141 = vmatprep.subr.bf16.mxu0 %v951
  %1142 = vmatpush1.bf16.msra.mxu0 %v950
  %1143 = vmatprep.subr.bf16.mxu0 %v955
  %1144 = vmatpush1.bf16.msra.mxu0 %v954
  %1145 = vmatprep.subr.bf16.mxu0 %v959
  %1146 = vmatpush1.bf16.msra.mxu0 %v958
  %1147 = vmatprep.subr.bf16.mxu0 %v963
  %1148 = vmatpush1.bf16.msra.mxu0 %v962
  %1149 = vmatprep.subr.bf16.mxu0 %v967
  %1150 = vmatpush1.bf16.msra.mxu0 %v966
  %1151 = vmatprep.mubr.bf16.mxu0 %v997
  %1152 = vmatmul.mubr.bf16.gmra.mrb[0].mxu0 %v996
  %v1153 = vpop.f32.mrb[0].mxu0
  %v1154 = vadd.f32 0.0, %v1153
  %v1155 = vpop.f32.mrb[0].mxu0
  %v1156 = vadd.f32 0.0, %v1155
  %v1157 = vpop.f32.mrb[0].mxu0
  %v1158 = vadd.f32 0.0, %v1157
  %v1159 = vpop.f32.mrb[0].mxu0
  %v1160 = vadd.f32 0.0, %v1159
  %1161 = vmatprep.mubr.bf16.mxu0 %v1000
  %1162 = vmatmul.mubr.bf16.gmra.mrb[0].mxu0 %v999
  %v1163 = vpop.f32.mrb[0].mxu0
  %v1164 = vadd.f32 0.0, %v1163
  %v1165 = vpop.f32.mrb[0].mxu0
  %v1166 = vadd.f32 0.0, %v1165
  %v1167 = vpop.f32.mrb[0].mxu0
  %v1168 = vadd.f32 0.0, %v1167
  %v1169 = vpop.f32.mrb[0].mxu0
  %v1170 = vadd.f32 0.0, %v1169
  %1171 = vdwg.mxu0
  %1172 = vmatprep.subr.bf16.mxu0 %v971
  %1173 = vmatpush1.bf16.msra.mxu0 %v970
  %1174 = vmatprep.subr.bf16.mxu0 %v975
  %1175 = vmatpush1.bf16.msra.mxu0 %v974
  %1176 = vmatprep.subr.bf16.mxu0 0
  %1177 = vmatpush1.bf16.msra.mxu0 0
  %1178 = vmatprep.subr.bf16.mxu0 0
  %1179 = vmatpush1.bf16.msra.mxu0 0
  %1180 = vmatprep.subr.bf16.mxu0 0
  %1181 = vmatpush1.bf16.msra.mxu0 0
  %1182 = vmatprep.subr.bf16.mxu0 0
  %1183 = vmatpush1.bf16.msra.mxu0 0
  %1184 = vmatprep.subr.bf16.mxu0 0
  %1185 = vmatpush1.bf16.msra.mxu0 0
  %1186 = vmatprep.subr.bf16.mxu0 0
  %1187 = vmatpush1.bf16.msra.mxu0 0
  %1188 = vmatprep.subr.bf16.mxu0 0
  %1189 = vmatpush1.bf16.msra.mxu0 0
  %1190 = vmatprep.subr.bf16.mxu0 0
  %1191 = vmatpush1.bf16.msra.mxu0 0
  %1192 = vmatprep.subr.bf16.mxu0 0
  %1193 = vmatpush1.bf16.msra.mxu0 0
  %1194 = vmatprep.subr.bf16.mxu0 0
  %1195 = vmatpush1.bf16.msra.mxu0 0
  %1196 = vmatprep.subr.bf16.mxu0 0
  %1197 = vmatpush1.bf16.msra.mxu0 0
  %1198 = vmatprep.subr.bf16.mxu0 0
  %1199 = vmatpush1.bf16.msra.mxu0 0
  %1200 = vmatprep.subr.bf16.mxu0 0
  %1201 = vmatpush1.bf16.msra.mxu0 0
  %1202 = vmatprep.subr.bf16.mxu0 0
  %1203 = vmatpush1.bf16.msra.mxu0 0
  %1204 = vmatprep.mubr.bf16.mxu0 0
  %1205 = vmatmul.mubr.bf16.gmra.mrb[0].mxu0 %v1008
  %v1206 = vpop.f32.mrb[0].mxu0
  %v1207 = vadd.f32 %v1154, %v1206
  %v1208 = vpop.f32.mrb[0].mxu0
  %v1209 = vadd.f32 %v1156, %v1208
  %v1210 = vpop.f32.mrb[0].mxu0
  %v1211 = vadd.f32 %v1158, %v1210
  %v1212 = vpop.f32.mrb[0].mxu0
  %v1213 = vadd.f32 %v1160, %v1212
  %1214 = vmatprep.mubr.bf16.mxu0 0
  %1215 = vmatmul.mubr.bf16.gmra.mrb[0].mxu0 %v1011
  %v1216 = vpop.f32.mrb[0].mxu0
  %v1217 = vadd.f32 %v1164, %v1216
  %v1218 = vpop.f32.mrb[0].mxu0
  %v1219 = vadd.f32 %v1166, %v1218
  %v1220 = vpop.f32.mrb[0].mxu0
  %v1221 = vadd.f32 %v1168, %v1220
  %v1222 = vpop.f32.mrb[0].mxu0
  %v1223 = vadd.f32 %v1170, %v1222
  %1224 = vdwg.mxu0
  %v1225 = vadd.f32 %v1101, %v1103
  %v1226 = vadd.f32 %v1225, %v1207
  %v1227 = vadd.f32 %v1226, %v1209
  %1228 = vadd.xlane.f32.xlu0 %v1227
  %v1229 = vpop.xlane.xlu0 %1228
  %v1230 = vadd.f32 %v1105, %v1107
  %v1231 = vadd.f32 %v1230, %v1211
  %v1232 = vadd.f32 %v1231, %v1213
  %1233 = vadd.xlane.f32.xlu0 %v1232
  %v1234 = vpop.xlane.xlu0 %1233
  %v1235 = vadd.f32 %v1111, %v1113
  %v1236 = vadd.f32 %v1235, %v1217
  %v1237 = vadd.f32 %v1236, %v1219
  %1238 = vadd.xlane.f32.xlu0 %v1237
  %v1239 = vpop.xlane.xlu0 %1238
  %v1240 = vadd.f32 %v1115, %v1117
  %v1241 = vadd.f32 %v1240, %v1221
  %v1242 = vadd.f32 %v1241, %v1223
  %1243 = vadd.xlane.f32.xlu0 %v1242
  %v1244 = vpop.xlane.xlu0 %1243
  %v1245 = vmul.f32 %v1229, 0.001953125
  %v1246 = vmul.f32 %v1234, 0.001953125
  %v1247 = vmul.f32 %v1239, 0.001953125
  %v1248 = vmul.f32 %v1244, 0.001953125
  %v1249 = vsub.f32 %v1101, %v1245
  %v1250 = vsub.f32 %v1103, %v1245
  %v1251 = vsub.f32 %v1207, %v1245
  %v1252 = vsub.f32 %v1209, %v1245
  %v1253 = vsub.f32 %v1105, %v1246
  %v1254 = vsub.f32 %v1107, %v1246
  %v1255 = vsub.f32 %v1211, %v1246
  %v1256 = vsub.f32 %v1213, %v1246
  %v1257 = vsub.f32 %v1111, %v1247
  %v1258 = vsub.f32 %v1113, %v1247
  %v1259 = vsub.f32 %v1217, %v1247
  %v1260 = vsub.f32 %v1219, %v1247
  %v1261 = vsub.f32 %v1115, %v1248
  %v1262 = vsub.f32 %v1117, %v1248
  %v1263 = vsub.f32 %v1221, %v1248
  %v1264 = vsub.f32 %v1223, %v1248
  %v1265 = vmul.f32 %v1249, %v1249
  %v1266 = vmul.f32 %v1250, %v1250
  %v1267 = vmul.f32 %v1251, %v1251
  %v1268 = vmul.f32 %v1252, %v1252
  %v1269 = vmul.f32 %v1253, %v1253
  %v1270 = vmul.f32 %v1254, %v1254
  %v1271 = vmul.f32 %v1255, %v1255
  %v1272 = vmul.f32 %v1256, %v1256
  %v1273 = vmul.f32 %v1257, %v1257
  %v1274 = vmul.f32 %v1258, %v1258
  %v1275 = vmul.f32 %v1259, %v1259
  %v1276 = vmul.f32 %v1260, %v1260
  %v1277 = vmul.f32 %v1261, %v1261
  %v1278 = vmul.f32 %v1262, %v1262
  %v1279 = vmul.f32 %v1263, %v1263
  %v1280 = vmul.f32 %v1264, %v1264
  %v1281 = vadd.f32 %v1265, %v1266
  %v1282 = vadd.f32 %v1281, %v1267
  %v1283 = vadd.f32 %v1282, %v1268
  %1284 = vadd.xlane.f32.xlu0 %v1283
  %v1285 = vpop.xlane.xlu0 %1284
  %v1286 = vadd.f32 %v1269, %v1270
  %v1287 = vadd.f32 %v1286, %v1271
  %v1288 = vadd.f32 %v1287, %v1272
  %1289 = vadd.xlane.f32.xlu0 %v1288
  %v1290 = vpop.xlane.xlu0 %1289
  %v1291 = vadd.f32 %v1273, %v1274
  %v1292 = vadd.f32 %v1291, %v1275
  %v1293 = vadd.f32 %v1292, %v1276
  %1294 = vadd.xlane.f32.xlu0 %v1293
  %v1295 = vpop.xlane.xlu0 %1294
  %v1296 = vadd.f32 %v1277, %v1278
  %v1297 = vadd.f32 %v1296, %v1279
  %v1298 = vadd.f32 %v1297, %v1280
  %1299 = vadd.xlane.f32.xlu0 %v1298
  %v1300 = vpop.xlane.xlu0 %1299
  %v1301 = vmul.f32 %v1285, 0.001953125
  %v1302 = vmul.f32 %v1290, 0.001953125
  %v1303 = vmul.f32 %v1295, 0.001953125
  %v1304 = vmul.f32 %v1300, 0.001953125
  %v1305 = vadd.f32 %v1301, 1e-05
  %v1306 = vadd.f32 %v1302, 1e-05
  %v1307 = vadd.f32 %v1303, 1e-05
  %v1308 = vadd.f32 %v1304, 1e-05
  %v1309 = vrsqrt.pop %v1305
  %v1310 = vrsqrt.pop %v1306
  %v1311 = vrsqrt.pop %v1307
  %v1312 = vrsqrt.pop %v1308
  %v1313 = vld [vmem:[%s3] sm:$0xff]
  %v1314 = vld [vmem:[%s3 + $0x8] sm:$0xff]
  %v1315 = vld [vmem:[%s3 + $0x10] sm:$0xff]
  %v1316 = vld [vmem:[%s3 + $0x18] sm:$0xff]
  %v1317 = vmul.f32 %v1309, %v1313
  %v1318 = vmul.f32 %v1310, %v1314
  %v1319 = vmul.f32 %v1311, %v1315
  %v1320 = vmul.f32 %v1312, %v1316
  %1322 = vset.pattern.permute.xlu0 0
  %1323 = vperm.xlu0 %1322, %v1317
  %v1324 = vpop.permute.xlu0 %1323
  %1327 = vset.pattern.permute.xlu0 0
  %1328 = vperm.xlu0 %1327, %v1318
  %v1329 = vpop.permute.xlu0 %1328
  %1332 = vset.pattern.permute.xlu0 0
  %1333 = vperm.xlu0 %1332, %v1319
  %v1334 = vpop.permute.xlu0 %1333
  %1337 = vset.pattern.permute.xlu0 0
  %1338 = vperm.xlu0 %1337, %v1320
  %v1339 = vpop.permute.xlu0 %1338
  %v1341 = vmul.f32 %v1249, %v1324
  %v1342 = vmul.f32 %v1250, %v1324
  %v1343 = vmul.f32 %v1251, %v1324
  %v1344 = vmul.f32 %v1252, %v1324
  %v1345 = vmul.f32 %v1253, %v1329
  %v1346 = vmul.f32 %v1254, %v1329
  %v1347 = vmul.f32 %v1255, %v1329
  %v1348 = vmul.f32 %v1256, %v1329
  %v1349 = vmul.f32 %v1257, %v1334
  %v1350 = vmul.f32 %v1258, %v1334
  %v1351 = vmul.f32 %v1259, %v1334
  %v1352 = vmul.f32 %v1260, %v1334
  %v1353 = vmul.f32 %v1261, %v1339
  %v1354 = vmul.f32 %v1262, %v1339
  %v1355 = vmul.f32 %v1263, %v1339
  %v1356 = vmul.f32 %v1264, %v1339
  %v1357 = vld [vmem:[%s4] sm:$0xff]
  %v1358 = vld [vmem:[%s4 + $0x8] sm:$0xff]
  %v1359 = vld [vmem:[%s4 + $0x10] sm:$0xff]
  %v1360 = vld [vmem:[%s4 + $0x18] sm:$0xff]
  %1362 = vset.pattern.permute.xlu0 0
  %1363 = vperm.xlu0 %1362, %v1357
  %v1364 = vpop.permute.xlu0 %1363
  %1367 = vset.pattern.permute.xlu0 0
  %1368 = vperm.xlu0 %1367, %v1358
  %v1369 = vpop.permute.xlu0 %1368
  %1372 = vset.pattern.permute.xlu0 0
  %1373 = vperm.xlu0 %1372, %v1359
  %v1374 = vpop.permute.xlu0 %1373
  %1377 = vset.pattern.permute.xlu0 0
  %1378 = vperm.xlu0 %1377, %v1360
  %v1379 = vpop.permute.xlu0 %1378
  %v1381 = vadd.f32 %v1341, %v1364
  %v1382 = vadd.f32 %v1342, %v1364
  %v1383 = vadd.f32 %v1343, %v1364
  %v1384 = vadd.f32 %v1344, %v1364
  %v1385 = vadd.f32 %v1345, %v1369
  %v1386 = vadd.f32 %v1346, %v1369
  %v1387 = vadd.f32 %v1347, %v1369
  %v1388 = vadd.f32 %v1348, %v1369
  %v1389 = vadd.f32 %v1349, %v1374
  %v1390 = vadd.f32 %v1350, %v1374
  %v1391 = vadd.f32 %v1351, %v1374
  %v1392 = vadd.f32 %v1352, %v1374
  %v1393 = vadd.f32 %v1353, %v1379
  %v1394 = vadd.f32 %v1354, %v1379
  %v1395 = vadd.f32 %v1355, %v1379
  %v1396 = vadd.f32 %v1356, %v1379
  %v1397 = vmax.f32 %v1381, 0.0
  %v1398 = vmax.f32 %v1382, 0.0
  %v1399 = vmax.f32 %v1383, 0.0
  %v1400 = vmax.f32 %v1384, 0.0
  %v1401 = vmax.f32 %v1385, 0.0
  %v1402 = vmax.f32 %v1386, 0.0
  %v1403 = vmax.f32 %v1387, 0.0
  %v1404 = vmax.f32 %v1388, 0.0
  %v1405 = vmax.f32 %v1389, 0.0
  %v1406 = vmax.f32 %v1390, 0.0
  %v1407 = vmax.f32 %v1391, 0.0
  %v1408 = vmax.f32 %v1392, 0.0
  %v1409 = vmax.f32 %v1393, 0.0
  %v1410 = vmax.f32 %v1394, 0.0
  %v1411 = vmax.f32 %v1395, 0.0
  %v1412 = vmax.f32 %v1396, 0.0
  %1413 = vrot.lane.b32.xlu0 %v1397, 17
  %v1414 = vpop.permute.xlu0 %1413
  %1415 = vrot.lane.b32.xlu0 %v1401, 17
  %v1416 = vpop.permute.xlu0 %1415
  %1417 = vrot.lane.b32.xlu0 %v1405, 17
  %v1418 = vpop.permute.xlu0 %1417
  %1419 = vrot.lane.b32.xlu0 %v1409, 17
  %v1420 = vpop.permute.xlu0 %1419
  %1421 = vrot.lane.b32.xlu0 %v1398, 17
  %v1422 = vpop.permute.xlu0 %1421
  %1423 = vrot.lane.b32.xlu0 %v1402, 17
  %v1424 = vpop.permute.xlu0 %1423
  %1425 = vrot.lane.b32.xlu0 %v1406, 17
  %v1426 = vpop.permute.xlu0 %1425
  %1427 = vrot.lane.b32.xlu0 %v1410, 17
  %v1428 = vpop.permute.xlu0 %1427
  %1429 = vrot.lane.b32.xlu0 %v1399, 17
  %v1430 = vpop.permute.xlu0 %1429
  %1431 = vrot.lane.b32.xlu0 %v1403, 17
  %v1432 = vpop.permute.xlu0 %1431
  %1433 = vrot.lane.b32.xlu0 %v1407, 17
  %v1434 = vpop.permute.xlu0 %1433
  %1435 = vrot.lane.b32.xlu0 %v1411, 17
  %v1436 = vpop.permute.xlu0 %1435
  %1437 = vrot.lane.b32.xlu0 %v1400, 17
  %v1438 = vpop.permute.xlu0 %1437
  %1439 = vrot.lane.b32.xlu0 %v1404, 17
  %v1440 = vpop.permute.xlu0 %1439
  %1441 = vrot.lane.b32.xlu0 %v1408, 17
  %v1442 = vpop.permute.xlu0 %1441
  %1443 = vrot.lane.b32.xlu0 %v1412, 17
  %v1444 = vpop.permute.xlu0 %1443
  %v1445 = vsel %vm81, %v1430, %v1438
  %v1446 = vsel %vm81, %v1432, %v1440
  %v1447 = vsel %vm81, %v1434, %v1442
  %v1448 = vsel %vm81, %v1436, %v1444
  %v1449 = vsel %vm81, %v1422, %v1430
  %v1450 = vsel %vm81, %v1424, %v1432
  %v1451 = vsel %vm81, %v1426, %v1434
  %v1452 = vsel %vm81, %v1428, %v1436
  %v1453 = vsel %vm81, %v1414, %v1422
  %v1454 = vsel %vm81, %v1416, %v1424
  %v1455 = vsel %vm81, %v1418, %v1426
  %v1456 = vsel %vm81, %v1420, %v1428
  %v1457 = vsel %vm81, %v1438, %v1414
  %v1458 = vsel %vm81, %v1440, %v1416
  %v1459 = vsel %vm81, %v1442, %v1418
  %v1460 = vsel %vm81, %v1444, %v1420
  %v1461 = vld [vmem:[%s7] ss:$8 sm:$0xf]
  %v1463 = vlaneseq
  %v1464 = vshrl.u32 %v1463, 7
  %v1465 = vsub.s32 0, %v1464
  %v1466 = vrot.slane %v1461, %v1465
  %v1467 = vlaneseq
  %v1468 = vshrl.u32 %v1467, 7
  %v1469 = vsub.s32 1, %v1468
  %v1470 = vrot.slane %v1461, %v1469
  %v1471 = vlaneseq
  %v1472 = vshrl.u32 %v1471, 7
  %v1473 = vsub.s32 2, %v1472
  %v1474 = vrot.slane %v1461, %v1473
  %v1475 = vlaneseq
  %v1476 = vshrl.u32 %v1475, 7
  %v1477 = vsub.s32 3, %v1476
  %v1478 = vrot.slane %v1461, %v1477
  %v1483 = vmul.f32 %v1457, %v1466
  %v1484 = vmul.f32 %v1453, %v1470
  %v1485 = vmul.f32 %v1449, %v1474
  %v1486 = vmul.f32 %v1445, %v1478
  %v1487 = vmul.f32 %v1458, %v1466
  %v1488 = vmul.f32 %v1454, %v1470
  %v1489 = vmul.f32 %v1450, %v1474
  %v1490 = vmul.f32 %v1446, %v1478
  %v1491 = vmul.f32 %v1459, %v1466
  %v1492 = vmul.f32 %v1455, %v1470
  %v1493 = vmul.f32 %v1451, %v1474
  %v1494 = vmul.f32 %v1447, %v1478
  %v1495 = vmul.f32 %v1460, %v1466
  %v1496 = vmul.f32 %v1456, %v1470
  %v1497 = vmul.f32 %v1452, %v1474
  %v1498 = vmul.f32 %v1448, %v1478
  %v1499 = vpack.c.bf16 %v1487, %v1483
  %v1500 = vpack.c.bf16 %v1488, %v1484
  %v1501 = vpack.c.bf16 %v1489, %v1485
  %v1502 = vpack.c.bf16 %v1490, %v1486
  %v1503 = vpack.c.bf16 %v1495, %v1491
  %v1504 = vpack.c.bf16 %v1496, %v1492
  %v1505 = vpack.c.bf16 %v1497, %v1493
  %v1506 = vpack.c.bf16 %v1498, %v1494
  %1507 = vst [vmem:[#allocation2] sm:$0xff] %v1499
  %1508 = vst [vmem:[#allocation2 + $0x8] sm:$0xff] %v1500
  %1509 = vst [vmem:[#allocation2 + $0x10] sm:$0xff] %v1501
  %1510 = vst [vmem:[#allocation2 + $0x18] sm:$0xff] %v1502
  %1511 = vst [vmem:[#allocation2 + $0x20] sm:$0xff] %v1503
  %1512 = vst [vmem:[#allocation2 + $0x28] sm:$0xff] %v1504
  %1513 = vst [vmem:[#allocation2 + $0x30] sm:$0xff] %v1505
  %1514 = vst [vmem:[#allocation2 + $0x38] sm:$0xff] %v1506
  %1515 = vrot.lane.b32.xlu0 %v1397, 16
  %v1516 = vpop.permute.xlu0 %1515
  %1517 = vrot.lane.b32.xlu0 %v1401, 16
  %v1518 = vpop.permute.xlu0 %1517
  %1519 = vrot.lane.b32.xlu0 %v1405, 16
  %v1520 = vpop.permute.xlu0 %1519
  %1521 = vrot.lane.b32.xlu0 %v1409, 16
  %v1522 = vpop.permute.xlu0 %1521
  %1523 = vrot.lane.b32.xlu0 %v1398, 16
  %v1524 = vpop.permute.xlu0 %1523
  %1525 = vrot.lane.b32.xlu0 %v1402, 16
  %v1526 = vpop.permute.xlu0 %1525
  %1527 = vrot.lane.b32.xlu0 %v1406, 16
  %v1528 = vpop.permute.xlu0 %1527
  %1529 = vrot.lane.b32.xlu0 %v1410, 16
  %v1530 = vpop.permute.xlu0 %1529
  %1531 = vrot.lane.b32.xlu0 %v1399, 16
  %v1532 = vpop.permute.xlu0 %1531
  %1533 = vrot.lane.b32.xlu0 %v1403, 16
  %v1534 = vpop.permute.xlu0 %1533
  %1535 = vrot.lane.b32.xlu0 %v1407, 16
  %v1536 = vpop.permute.xlu0 %1535
  %1537 = vrot.lane.b32.xlu0 %v1411, 16
  %v1538 = vpop.permute.xlu0 %1537
  %1539 = vrot.lane.b32.xlu0 %v1400, 16
  %v1540 = vpop.permute.xlu0 %1539
  %1541 = vrot.lane.b32.xlu0 %v1404, 16
  %v1542 = vpop.permute.xlu0 %1541
  %1543 = vrot.lane.b32.xlu0 %v1408, 16
  %v1544 = vpop.permute.xlu0 %1543
  %1545 = vrot.lane.b32.xlu0 %v1412, 16
  %v1546 = vpop.permute.xlu0 %1545
  %v1547 = vsel %vm184, %v1532, %v1540
  %v1548 = vsel %vm184, %v1534, %v1542
  %v1549 = vsel %vm184, %v1536, %v1544
  %v1550 = vsel %vm184, %v1538, %v1546
  %v1551 = vsel %vm184, %v1524, %v1532
  %v1552 = vsel %vm184, %v1526, %v1534
  %v1553 = vsel %vm184, %v1528, %v1536
  %v1554 = vsel %vm184, %v1530, %v1538
  %v1555 = vsel %vm184, %v1516, %v1524
  %v1556 = vsel %vm184, %v1518, %v1526
  %v1557 = vsel %vm184, %v1520, %v1528
  %v1558 = vsel %vm184, %v1522, %v1530
  %v1559 = vsel %vm184, %v1540, %v1516
  %v1560 = vsel %vm184, %v1542, %v1518
  %v1561 = vsel %vm184, %v1544, %v1520
  %v1562 = vsel %vm184, %v1546, %v1522
  %v1563 = vld [vmem:[%s201] ss:$8 sm:$0xf]
  %v1565 = vlaneseq
  %v1566 = vshrl.u32 %v1565, 7
  %v1567 = vsub.s32 0, %v1566
  %v1568 = vrot.slane %v1563, %v1567
  %v1569 = vlaneseq
  %v1570 = vshrl.u32 %v1569, 7
  %v1571 = vsub.s32 1, %v1570
  %v1572 = vrot.slane %v1563, %v1571
  %v1573 = vlaneseq
  %v1574 = vshrl.u32 %v1573, 7
  %v1575 = vsub.s32 2, %v1574
  %v1576 = vrot.slane %v1563, %v1575
  %v1577 = vlaneseq
  %v1578 = vshrl.u32 %v1577, 7
  %v1579 = vsub.s32 3, %v1578
  %v1580 = vrot.slane %v1563, %v1579
  %v1585 = vmul.f32 %v1559, %v1568
  %v1586 = vmul.f32 %v1555, %v1572
  %v1587 = vmul.f32 %v1551, %v1576
  %v1588 = vmul.f32 %v1547, %v1580
  %v1589 = vmul.f32 %v1560, %v1568
  %v1590 = vmul.f32 %v1556, %v1572
  %v1591 = vmul.f32 %v1552, %v1576
  %v1592 = vmul.f32 %v1548, %v1580
  %v1593 = vmul.f32 %v1561, %v1568
  %v1594 = vmul.f32 %v1557, %v1572
  %v1595 = vmul.f32 %v1553, %v1576
  %v1596 = vmul.f32 %v1549, %v1580
  %v1597 = vmul.f32 %v1562, %v1568
  %v1598 = vmul.f32 %v1558, %v1572
  %v1599 = vmul.f32 %v1554, %v1576
  %v1600 = vmul.f32 %v1550, %v1580
  %v1601 = vpack.c.bf16 %v1589, %v1585
  %v1602 = vpack.c.bf16 %v1590, %v1586
  %v1603 = vpack.c.bf16 %v1591, %v1587
  %v1604 = vpack.c.bf16 %v1592, %v1588
  %v1605 = vpack.c.bf16 %v1597, %v1593
  %v1606 = vpack.c.bf16 %v1598, %v1594
  %v1607 = vpack.c.bf16 %v1599, %v1595
  %v1608 = vpack.c.bf16 %v1600, %v1596
  %1609 = vst [vmem:[#allocation2 + $0x40] sm:$0xff] %v1601
  %1610 = vst [vmem:[#allocation2 + $0x48] sm:$0xff] %v1602
  %1611 = vst [vmem:[#allocation2 + $0x50] sm:$0xff] %v1603
  %1612 = vst [vmem:[#allocation2 + $0x58] sm:$0xff] %v1604
  %1613 = vst [vmem:[#allocation2 + $0x60] sm:$0xff] %v1605
  %1614 = vst [vmem:[#allocation2 + $0x68] sm:$0xff] %v1606
  %1615 = vst [vmem:[#allocation2 + $0x70] sm:$0xff] %v1607
  %1616 = vst [vmem:[#allocation2 + $0x78] sm:$0xff] %v1608
  %1617 = vrot.lane.b32.xlu0 %v1397, 15
  %v1618 = vpop.permute.xlu0 %1617
  %1619 = vrot.lane.b32.xlu0 %v1401, 15
  %v1620 = vpop.permute.xlu0 %1619
  %1621 = vrot.lane.b32.xlu0 %v1405, 15
  %v1622 = vpop.permute.xlu0 %1621
  %1623 = vrot.lane.b32.xlu0 %v1409, 15
  %v1624 = vpop.permute.xlu0 %1623
  %1625 = vrot.lane.b32.xlu0 %v1398, 15
  %v1626 = vpop.permute.xlu0 %1625
  %1627 = vrot.lane.b32.xlu0 %v1402, 15
  %v1628 = vpop.permute.xlu0 %1627
  %1629 = vrot.lane.b32.xlu0 %v1406, 15
  %v1630 = vpop.permute.xlu0 %1629
  %1631 = vrot.lane.b32.xlu0 %v1410, 15
  %v1632 = vpop.permute.xlu0 %1631
  %1633 = vrot.lane.b32.xlu0 %v1399, 15
  %v1634 = vpop.permute.xlu0 %1633
  %1635 = vrot.lane.b32.xlu0 %v1403, 15
  %v1636 = vpop.permute.xlu0 %1635
  %1637 = vrot.lane.b32.xlu0 %v1407, 15
  %v1638 = vpop.permute.xlu0 %1637
  %1639 = vrot.lane.b32.xlu0 %v1411, 15
  %v1640 = vpop.permute.xlu0 %1639
  %1641 = vrot.lane.b32.xlu0 %v1400, 15
  %v1642 = vpop.permute.xlu0 %1641
  %1643 = vrot.lane.b32.xlu0 %v1404, 15
  %v1644 = vpop.permute.xlu0 %1643
  %1645 = vrot.lane.b32.xlu0 %v1408, 15
  %v1646 = vpop.permute.xlu0 %1645
  %1647 = vrot.lane.b32.xlu0 %v1412, 15
  %v1648 = vpop.permute.xlu0 %1647
  %v1649 = vsel %vm288, %v1634, %v1642
  %v1650 = vsel %vm288, %v1636, %v1644
  %v1651 = vsel %vm288, %v1638, %v1646
  %v1652 = vsel %vm288, %v1640, %v1648
  %v1653 = vsel %vm288, %v1626, %v1634
  %v1654 = vsel %vm288, %v1628, %v1636
  %v1655 = vsel %vm288, %v1630, %v1638
  %v1656 = vsel %vm288, %v1632, %v1640
  %v1657 = vsel %vm288, %v1618, %v1626
  %v1658 = vsel %vm288, %v1620, %v1628
  %v1659 = vsel %vm288, %v1622, %v1630
  %v1660 = vsel %vm288, %v1624, %v1632
  %v1661 = vsel %vm288, %v1642, %v1618
  %v1662 = vsel %vm288, %v1644, %v1620
  %v1663 = vsel %vm288, %v1646, %v1622
  %v1664 = vsel %vm288, %v1648, %v1624
  %v1665 = vld [vmem:[%s305] ss:$8 sm:$0xf]
  %v1667 = vlaneseq
  %v1668 = vshrl.u32 %v1667, 7
  %v1669 = vsub.s32 0, %v1668
  %v1670 = vrot.slane %v1665, %v1669
  %v1671 = vlaneseq
  %v1672 = vshrl.u32 %v1671, 7
  %v1673 = vsub.s32 1, %v1672
  %v1674 = vrot.slane %v1665, %v1673
  %v1675 = vlaneseq
  %v1676 = vshrl.u32 %v1675, 7
  %v1677 = vsub.s32 2, %v1676
  %v1678 = vrot.slane %v1665, %v1677
  %v1679 = vlaneseq
  %v1680 = vshrl.u32 %v1679, 7
  %v1681 = vsub.s32 3, %v1680
  %v1682 = vrot.slane %v1665, %v1681
  %v1687 = vmul.f32 %v1661, %v1670
  %v1688 = vmul.f32 %v1657, %v1674
  %v1689 = vmul.f32 %v1653, %v1678
  %v1690 = vmul.f32 %v1649, %v1682
  %v1691 = vmul.f32 %v1662, %v1670
  %v1692 = vmul.f32 %v1658, %v1674
  %v1693 = vmul.f32 %v1654, %v1678
  %v1694 = vmul.f32 %v1650, %v1682
  %v1695 = vmul.f32 %v1663, %v1670
  %v1696 = vmul.f32 %v1659, %v1674
  %v1697 = vmul.f32 %v1655, %v1678
  %v1698 = vmul.f32 %v1651, %v1682
  %v1699 = vmul.f32 %v1664, %v1670
  %v1700 = vmul.f32 %v1660, %v1674
  %v1701 = vmul.f32 %v1656, %v1678
  %v1702 = vmul.f32 %v1652, %v1682
  %v1703 = vpack.c.bf16 %v1691, %v1687
  %v1704 = vpack.c.bf16 %v1692, %v1688
  %v1705 = vpack.c.bf16 %v1693, %v1689
  %v1706 = vpack.c.bf16 %v1694, %v1690
  %v1707 = vpack.c.bf16 %v1699, %v1695
  %v1708 = vpack.c.bf16 %v1700, %v1696
  %v1709 = vpack.c.bf16 %v1701, %v1697
  %v1710 = vpack.c.bf16 %v1702, %v1698
  %1711 = vst [vmem:[#allocation2 + $0x80] sm:$0xff] %v1703
  %1712 = vst [vmem:[#allocation2 + $0x88] sm:$0xff] %v1704
  %1713 = vst [vmem:[#allocation2 + $0x90] sm:$0xff] %v1705
  %1714 = vst [vmem:[#allocation2 + $0x98] sm:$0xff] %v1706
  %1715 = vst [vmem:[#allocation2 + $0xa0] sm:$0xff] %v1707
  %1716 = vst [vmem:[#allocation2 + $0xa8] sm:$0xff] %v1708
  %1717 = vst [vmem:[#allocation2 + $0xb0] sm:$0xff] %v1709
  %1718 = vst [vmem:[#allocation2 + $0xb8] sm:$0xff] %v1710
  %1719 = vrot.lane.b32.xlu0 %v1397, 1
  %v1720 = vpop.permute.xlu0 %1719
  %1721 = vrot.lane.b32.xlu0 %v1401, 1
  %v1722 = vpop.permute.xlu0 %1721
  %1723 = vrot.lane.b32.xlu0 %v1405, 1
  %v1724 = vpop.permute.xlu0 %1723
  %1725 = vrot.lane.b32.xlu0 %v1409, 1
  %v1726 = vpop.permute.xlu0 %1725
  %1727 = vrot.lane.b32.xlu0 %v1398, 1
  %v1728 = vpop.permute.xlu0 %1727
  %1729 = vrot.lane.b32.xlu0 %v1402, 1
  %v1730 = vpop.permute.xlu0 %1729
  %1731 = vrot.lane.b32.xlu0 %v1406, 1
  %v1732 = vpop.permute.xlu0 %1731
  %1733 = vrot.lane.b32.xlu0 %v1410, 1
  %v1734 = vpop.permute.xlu0 %1733
  %1735 = vrot.lane.b32.xlu0 %v1399, 1
  %v1736 = vpop.permute.xlu0 %1735
  %1737 = vrot.lane.b32.xlu0 %v1403, 1
  %v1738 = vpop.permute.xlu0 %1737
  %1739 = vrot.lane.b32.xlu0 %v1407, 1
  %v1740 = vpop.permute.xlu0 %1739
  %1741 = vrot.lane.b32.xlu0 %v1411, 1
  %v1742 = vpop.permute.xlu0 %1741
  %1743 = vrot.lane.b32.xlu0 %v1400, 1
  %v1744 = vpop.permute.xlu0 %1743
  %1745 = vrot.lane.b32.xlu0 %v1404, 1
  %v1746 = vpop.permute.xlu0 %1745
  %1747 = vrot.lane.b32.xlu0 %v1408, 1
  %v1748 = vpop.permute.xlu0 %1747
  %1749 = vrot.lane.b32.xlu0 %v1412, 1
  %v1750 = vpop.permute.xlu0 %1749
  %v1751 = vsel %vm392, %v1736, %v1744
  %v1752 = vsel %vm392, %v1738, %v1746
  %v1753 = vsel %vm392, %v1740, %v1748
  %v1754 = vsel %vm392, %v1742, %v1750
  %v1755 = vsel %vm392, %v1728, %v1736
  %v1756 = vsel %vm392, %v1730, %v1738
  %v1757 = vsel %vm392, %v1732, %v1740
  %v1758 = vsel %vm392, %v1734, %v1742
  %v1759 = vsel %vm392, %v1720, %v1728
  %v1760 = vsel %vm392, %v1722, %v1730
  %v1761 = vsel %vm392, %v1724, %v1732
  %v1762 = vsel %vm392, %v1726, %v1734
  %v1763 = vsel %vm392, %v1744, %v1720
  %v1764 = vsel %vm392, %v1746, %v1722
  %v1765 = vsel %vm392, %v1748, %v1724
  %v1766 = vsel %vm392, %v1750, %v1726
  %v1767 = vld [vmem:[%s409] ss:$8 sm:$0xf]
  %v1769 = vlaneseq
  %v1770 = vshrl.u32 %v1769, 7
  %v1771 = vsub.s32 0, %v1770
  %v1772 = vrot.slane %v1767, %v1771
  %v1773 = vlaneseq
  %v1774 = vshrl.u32 %v1773, 7
  %v1775 = vsub.s32 1, %v1774
  %v1776 = vrot.slane %v1767, %v1775
  %v1777 = vlaneseq
  %v1778 = vshrl.u32 %v1777, 7
  %v1779 = vsub.s32 2, %v1778
  %v1780 = vrot.slane %v1767, %v1779
  %v1781 = vlaneseq
  %v1782 = vshrl.u32 %v1781, 7
  %v1783 = vsub.s32 3, %v1782
  %v1784 = vrot.slane %v1767, %v1783
  %v1789 = vmul.f32 %v1763, %v1772
  %v1790 = vmul.f32 %v1759, %v1776
  %v1791 = vmul.f32 %v1755, %v1780
  %v1792 = vmul.f32 %v1751, %v1784
  %v1793 = vmul.f32 %v1764, %v1772
  %v1794 = vmul.f32 %v1760, %v1776
  %v1795 = vmul.f32 %v1756, %v1780
  %v1796 = vmul.f32 %v1752, %v1784
  %v1797 = vmul.f32 %v1765, %v1772
  %v1798 = vmul.f32 %v1761, %v1776
  %v1799 = vmul.f32 %v1757, %v1780
  %v1800 = vmul.f32 %v1753, %v1784
  %v1801 = vmul.f32 %v1766, %v1772
  %v1802 = vmul.f32 %v1762, %v1776
  %v1803 = vmul.f32 %v1758, %v1780
  %v1804 = vmul.f32 %v1754, %v1784
  %v1805 = vpack.c.bf16 %v1793, %v1789
  %v1806 = vpack.c.bf16 %v1794, %v1790
  %v1807 = vpack.c.bf16 %v1795, %v1791
  %v1808 = vpack.c.bf16 %v1796, %v1792
  %v1809 = vpack.c.bf16 %v1801, %v1797
  %v1810 = vpack.c.bf16 %v1802, %v1798
  %v1811 = vpack.c.bf16 %v1803, %v1799
  %v1812 = vpack.c.bf16 %v1804, %v1800
  %1813 = vst [vmem:[#allocation2 + $0xc0] sm:$0xff] %v1805
  %1814 = vst [vmem:[#allocation2 + $0xc8] sm:$0xff] %v1806
  %1815 = vst [vmem:[#allocation2 + $0xd0] sm:$0xff] %v1807
  %1816 = vst [vmem:[#allocation2 + $0xd8] sm:$0xff] %v1808
  %1817 = vst [vmem:[#allocation2 + $0xe0] sm:$0xff] %v1809
  %1818 = vst [vmem:[#allocation2 + $0xe8] sm:$0xff] %v1810
  %1819 = vst [vmem:[#allocation2 + $0xf0] sm:$0xff] %v1811
  %1820 = vst [vmem:[#allocation2 + $0xf8] sm:$0xff] %v1812
  %v1821 = vpack.c.bf16 %v1401, %v1397
  %v1822 = vpack.c.bf16 %v1402, %v1398
  %v1823 = vpack.c.bf16 %v1403, %v1399
  %v1824 = vpack.c.bf16 %v1404, %v1400
  %v1825 = vpack.c.bf16 %v1409, %v1405
  %v1826 = vpack.c.bf16 %v1410, %v1406
  %v1827 = vpack.c.bf16 %v1411, %v1407
  %v1828 = vpack.c.bf16 %v1412, %v1408
  %1829 = vst [vmem:[#allocation2 + $0x100] sm:$0xff] %v1821
  %1830 = vst [vmem:[#allocation2 + $0x108] sm:$0xff] %v1822
  %1831 = vst [vmem:[#allocation2 + $0x110] sm:$0xff] %v1823
  %1832 = vst [vmem:[#allocation2 + $0x118] sm:$0xff] %v1824
  %1833 = vst [vmem:[#allocation2 + $0x120] sm:$0xff] %v1825
  %1834 = vst [vmem:[#allocation2 + $0x128] sm:$0xff] %v1826
  %1835 = vst [vmem:[#allocation2 + $0x130] sm:$0xff] %v1827
  %1836 = vst [vmem:[#allocation2 + $0x138] sm:$0xff] %v1828
  %1837 = vrot.lane.b32.xlu0 %v1397, 127
  %v1838 = vpop.permute.xlu0 %1837
  %1839 = vrot.lane.b32.xlu0 %v1401, 127
  %v1840 = vpop.permute.xlu0 %1839
  %1841 = vrot.lane.b32.xlu0 %v1405, 127
  %v1842 = vpop.permute.xlu0 %1841
  %1843 = vrot.lane.b32.xlu0 %v1409, 127
  %v1844 = vpop.permute.xlu0 %1843
  %1845 = vrot.lane.b32.xlu0 %v1398, 127
  %v1846 = vpop.permute.xlu0 %1845
  %1847 = vrot.lane.b32.xlu0 %v1402, 127
  %v1848 = vpop.permute.xlu0 %1847
  %1849 = vrot.lane.b32.xlu0 %v1406, 127
  %v1850 = vpop.permute.xlu0 %1849
  %1851 = vrot.lane.b32.xlu0 %v1410, 127
  %v1852 = vpop.permute.xlu0 %1851
  %1853 = vrot.lane.b32.xlu0 %v1399, 127
  %v1854 = vpop.permute.xlu0 %1853
  %1855 = vrot.lane.b32.xlu0 %v1403, 127
  %v1856 = vpop.permute.xlu0 %1855
  %1857 = vrot.lane.b32.xlu0 %v1407, 127
  %v1858 = vpop.permute.xlu0 %1857
  %1859 = vrot.lane.b32.xlu0 %v1411, 127
  %v1860 = vpop.permute.xlu0 %1859
  %1861 = vrot.lane.b32.xlu0 %v1400, 127
  %v1862 = vpop.permute.xlu0 %1861
  %1863 = vrot.lane.b32.xlu0 %v1404, 127
  %v1864 = vpop.permute.xlu0 %1863
  %1865 = vrot.lane.b32.xlu0 %v1408, 127
  %v1866 = vpop.permute.xlu0 %1865
  %1867 = vrot.lane.b32.xlu0 %v1412, 127
  %v1868 = vpop.permute.xlu0 %1867
  %v1869 = vsel %vm512, %v1854, %v1862
  %v1870 = vsel %vm512, %v1856, %v1864
  %v1871 = vsel %vm512, %v1858, %v1866
  %v1872 = vsel %vm512, %v1860, %v1868
  %v1873 = vsel %vm512, %v1846, %v1854
  %v1874 = vsel %vm512, %v1848, %v1856
  %v1875 = vsel %vm512, %v1850, %v1858
  %v1876 = vsel %vm512, %v1852, %v1860
  %v1877 = vsel %vm512, %v1838, %v1846
  %v1878 = vsel %vm512, %v1840, %v1848
  %v1879 = vsel %vm512, %v1842, %v1850
  %v1880 = vsel %vm512, %v1844, %v1852
  %v1881 = vsel %vm512, %v1862, %v1838
  %v1882 = vsel %vm512, %v1864, %v1840
  %v1883 = vsel %vm512, %v1866, %v1842
  %v1884 = vsel %vm512, %v1868, %v1844
  %v1885 = vld [vmem:[%s529] ss:$8 sm:$0xf]
  %v1887 = vlaneseq
  %v1888 = vshrl.u32 %v1887, 7
  %v1889 = vsub.s32 0, %v1888
  %v1890 = vrot.slane %v1885, %v1889
  %v1891 = vlaneseq
  %v1892 = vshrl.u32 %v1891, 7
  %v1893 = vsub.s32 1, %v1892
  %v1894 = vrot.slane %v1885, %v1893
  %v1895 = vlaneseq
  %v1896 = vshrl.u32 %v1895, 7
  %v1897 = vsub.s32 2, %v1896
  %v1898 = vrot.slane %v1885, %v1897
  %v1899 = vlaneseq
  %v1900 = vshrl.u32 %v1899, 7
  %v1901 = vsub.s32 3, %v1900
  %v1902 = vrot.slane %v1885, %v1901
  %v1907 = vmul.f32 %v1877, %v1890
  %v1908 = vmul.f32 %v1873, %v1894
  %v1909 = vmul.f32 %v1869, %v1898
  %v1910 = vmul.f32 %v1881, %v1902
  %v1911 = vmul.f32 %v1878, %v1890
  %v1912 = vmul.f32 %v1874, %v1894
  %v1913 = vmul.f32 %v1870, %v1898
  %v1914 = vmul.f32 %v1882, %v1902
  %v1915 = vmul.f32 %v1879, %v1890
  %v1916 = vmul.f32 %v1875, %v1894
  %v1917 = vmul.f32 %v1871, %v1898
  %v1918 = vmul.f32 %v1883, %v1902
  %v1919 = vmul.f32 %v1880, %v1890
  %v1920 = vmul.f32 %v1876, %v1894
  %v1921 = vmul.f32 %v1872, %v1898
  %v1922 = vmul.f32 %v1884, %v1902
  %v1923 = vpack.c.bf16 %v1911, %v1907
  %v1924 = vpack.c.bf16 %v1912, %v1908
  %v1925 = vpack.c.bf16 %v1913, %v1909
  %v1926 = vpack.c.bf16 %v1914, %v1910
  %v1927 = vpack.c.bf16 %v1919, %v1915
  %v1928 = vpack.c.bf16 %v1920, %v1916
  %v1929 = vpack.c.bf16 %v1921, %v1917
  %v1930 = vpack.c.bf16 %v1922, %v1918
  %1931 = vst [vmem:[#allocation2 + $0x140] sm:$0xff] %v1923
  %1932 = vst [vmem:[#allocation2 + $0x148] sm:$0xff] %v1924
  %1933 = vst [vmem:[#allocation2 + $0x150] sm:$0xff] %v1925
  %1934 = vst [vmem:[#allocation2 + $0x158] sm:$0xff] %v1926
  %1935 = vst [vmem:[#allocation2 + $0x160] sm:$0xff] %v1927
  %1936 = vst [vmem:[#allocation2 + $0x168] sm:$0xff] %v1928
  %1937 = vst [vmem:[#allocation2 + $0x170] sm:$0xff] %v1929
  %1938 = vst [vmem:[#allocation2 + $0x178] sm:$0xff] %v1930
  %1939 = vrot.lane.b32.xlu0 %v1397, 113
  %v1940 = vpop.permute.xlu0 %1939
  %1941 = vrot.lane.b32.xlu0 %v1401, 113
  %v1942 = vpop.permute.xlu0 %1941
  %1943 = vrot.lane.b32.xlu0 %v1405, 113
  %v1944 = vpop.permute.xlu0 %1943
  %1945 = vrot.lane.b32.xlu0 %v1409, 113
  %v1946 = vpop.permute.xlu0 %1945
  %1947 = vrot.lane.b32.xlu0 %v1398, 113
  %v1948 = vpop.permute.xlu0 %1947
  %1949 = vrot.lane.b32.xlu0 %v1402, 113
  %v1950 = vpop.permute.xlu0 %1949
  %1951 = vrot.lane.b32.xlu0 %v1406, 113
  %v1952 = vpop.permute.xlu0 %1951
  %1953 = vrot.lane.b32.xlu0 %v1410, 113
  %v1954 = vpop.permute.xlu0 %1953
  %1955 = vrot.lane.b32.xlu0 %v1399, 113
  %v1956 = vpop.permute.xlu0 %1955
  %1957 = vrot.lane.b32.xlu0 %v1403, 113
  %v1958 = vpop.permute.xlu0 %1957
  %1959 = vrot.lane.b32.xlu0 %v1407, 113
  %v1960 = vpop.permute.xlu0 %1959
  %1961 = vrot.lane.b32.xlu0 %v1411, 113
  %v1962 = vpop.permute.xlu0 %1961
  %1963 = vrot.lane.b32.xlu0 %v1400, 113
  %v1964 = vpop.permute.xlu0 %1963
  %1965 = vrot.lane.b32.xlu0 %v1404, 113
  %v1966 = vpop.permute.xlu0 %1965
  %1967 = vrot.lane.b32.xlu0 %v1408, 113
  %v1968 = vpop.permute.xlu0 %1967
  %1969 = vrot.lane.b32.xlu0 %v1412, 113
  %v1970 = vpop.permute.xlu0 %1969
  %v1971 = vsel %vm616, %v1956, %v1964
  %v1972 = vsel %vm616, %v1958, %v1966
  %v1973 = vsel %vm616, %v1960, %v1968
  %v1974 = vsel %vm616, %v1962, %v1970
  %v1975 = vsel %vm616, %v1948, %v1956
  %v1976 = vsel %vm616, %v1950, %v1958
  %v1977 = vsel %vm616, %v1952, %v1960
  %v1978 = vsel %vm616, %v1954, %v1962
  %v1979 = vsel %vm616, %v1940, %v1948
  %v1980 = vsel %vm616, %v1942, %v1950
  %v1981 = vsel %vm616, %v1944, %v1952
  %v1982 = vsel %vm616, %v1946, %v1954
  %v1983 = vsel %vm616, %v1964, %v1940
  %v1984 = vsel %vm616, %v1966, %v1942
  %v1985 = vsel %vm616, %v1968, %v1944
  %v1986 = vsel %vm616, %v1970, %v1946
  %v1987 = vld [vmem:[%s633] ss:$8 sm:$0xf]
  %v1989 = vlaneseq
  %v1990 = vshrl.u32 %v1989, 7
  %v1991 = vsub.s32 0, %v1990
  %v1992 = vrot.slane %v1987, %v1991
  %v1993 = vlaneseq
  %v1994 = vshrl.u32 %v1993, 7
  %v1995 = vsub.s32 1, %v1994
  %v1996 = vrot.slane %v1987, %v1995
  %v1997 = vlaneseq
  %v1998 = vshrl.u32 %v1997, 7
  %v1999 = vsub.s32 2, %v1998
  %v2000 = vrot.slane %v1987, %v1999
  %v2001 = vlaneseq
  %v2002 = vshrl.u32 %v2001, 7
  %v2003 = vsub.s32 3, %v2002
  %v2004 = vrot.slane %v1987, %v2003
  %v2009 = vmul.f32 %v1979, %v1992
  %v2010 = vmul.f32 %v1975, %v1996
  %v2011 = vmul.f32 %v1971, %v2000
  %v2012 = vmul.f32 %v1983, %v2004
  %v2013 = vmul.f32 %v1980, %v1992
  %v2014 = vmul.f32 %v1976, %v1996
  %v2015 = vmul.f32 %v1972, %v2000
  %v2016 = vmul.f32 %v1984, %v2004
  %v2017 = vmul.f32 %v1981, %v1992
  %v2018 = vmul.f32 %v1977, %v1996
  %v2019 = vmul.f32 %v1973, %v2000
  %v2020 = vmul.f32 %v1985, %v2004
  %v2021 = vmul.f32 %v1982, %v1992
  %v2022 = vmul.f32 %v1978, %v1996
  %v2023 = vmul.f32 %v1974, %v2000
  %v2024 = vmul.f32 %v1986, %v2004
  %v2025 = vpack.c.bf16 %v2013, %v2009
  %v2026 = vpack.c.bf16 %v2014, %v2010
  %v2027 = vpack.c.bf16 %v2015, %v2011
  %v2028 = vpack.c.bf16 %v2016, %v2012
  %v2029 = vpack.c.bf16 %v2021, %v2017
  %v2030 = vpack.c.bf16 %v2022, %v2018
  %v2031 = vpack.c.bf16 %v2023, %v2019
  %v2032 = vpack.c.bf16 %v2024, %v2020
  %2033 = vst [vmem:[#allocation2 + $0x180] sm:$0xff] %v2025
  %2034 = vst [vmem:[#allocation2 + $0x188] sm:$0xff] %v2026
  %2035 = vst [vmem:[#allocation2 + $0x190] sm:$0xff] %v2027
  %2036 = vst [vmem:[#allocation2 + $0x198] sm:$0xff] %v2028
  %2037 = vst [vmem:[#allocation2 + $0x1a0] sm:$0xff] %v2029
  %2038 = vst [vmem:[#allocation2 + $0x1a8] sm:$0xff] %v2030
  %2039 = vst [vmem:[#allocation2 + $0x1b0] sm:$0xff] %v2031
  %2040 = vst [vmem:[#allocation2 + $0x1b8] sm:$0xff] %v2032
  %2041 = vrot.lane.b32.xlu0 %v1397, 112
  %v2042 = vpop.permute.xlu0 %2041
  %2043 = vrot.lane.b32.xlu0 %v1401, 112
  %v2044 = vpop.permute.xlu0 %2043
  %2045 = vrot.lane.b32.xlu0 %v1405, 112
  %v2046 = vpop.permute.xlu0 %2045
  %2047 = vrot.lane.b32.xlu0 %v1409, 112
  %v2048 = vpop.permute.xlu0 %2047
  %2049 = vrot.lane.b32.xlu0 %v1398, 112
  %v2050 = vpop.permute.xlu0 %2049
  %2051 = vrot.lane.b32.xlu0 %v1402, 112
  %v2052 = vpop.permute.xlu0 %2051
  %2053 = vrot.lane.b32.xlu0 %v1406, 112
  %v2054 = vpop.permute.xlu0 %2053
  %2055 = vrot.lane.b32.xlu0 %v1410, 112
  %v2056 = vpop.permute.xlu0 %2055
  %2057 = vrot.lane.b32.xlu0 %v1399, 112
  %v2058 = vpop.permute.xlu0 %2057
  %2059 = vrot.lane.b32.xlu0 %v1403, 112
  %v2060 = vpop.permute.xlu0 %2059
  %2061 = vrot.lane.b32.xlu0 %v1407, 112
  %v2062 = vpop.permute.xlu0 %2061
  %2063 = vrot.lane.b32.xlu0 %v1411, 112
  %v2064 = vpop.permute.xlu0 %2063
  %2065 = vrot.lane.b32.xlu0 %v1400, 112
  %v2066 = vpop.permute.xlu0 %2065
  %2067 = vrot.lane.b32.xlu0 %v1404, 112
  %v2068 = vpop.permute.xlu0 %2067
  %2069 = vrot.lane.b32.xlu0 %v1408, 112
  %v2070 = vpop.permute.xlu0 %2069
  %2071 = vrot.lane.b32.xlu0 %v1412, 112
  %v2072 = vpop.permute.xlu0 %2071
  %v2073 = vsel %vm720, %v2058, %v2066
  %v2074 = vsel %vm720, %v2060, %v2068
  %v2075 = vsel %vm720, %v2062, %v2070
  %v2076 = vsel %vm720, %v2064, %v2072
  %v2077 = vsel %vm720, %v2050, %v2058
  %v2078 = vsel %vm720, %v2052, %v2060
  %v2079 = vsel %vm720, %v2054, %v2062
  %v2080 = vsel %vm720, %v2056, %v2064
  %v2081 = vsel %vm720, %v2042, %v2050
  %v2082 = vsel %vm720, %v2044, %v2052
  %v2083 = vsel %vm720, %v2046, %v2054
  %v2084 = vsel %vm720, %v2048, %v2056
  %v2085 = vsel %vm720, %v2066, %v2042
  %v2086 = vsel %vm720, %v2068, %v2044
  %v2087 = vsel %vm720, %v2070, %v2046
  %v2088 = vsel %vm720, %v2072, %v2048
  %v2089 = vld [vmem:[%s737] ss:$8 sm:$0xf]
  %v2091 = vlaneseq
  %v2092 = vshrl.u32 %v2091, 7
  %v2093 = vsub.s32 0, %v2092
  %v2094 = vrot.slane %v2089, %v2093
  %v2095 = vlaneseq
  %v2096 = vshrl.u32 %v2095, 7
  %v2097 = vsub.s32 1, %v2096
  %v2098 = vrot.slane %v2089, %v2097
  %v2099 = vlaneseq
  %v2100 = vshrl.u32 %v2099, 7
  %v2101 = vsub.s32 2, %v2100
  %v2102 = vrot.slane %v2089, %v2101
  %v2103 = vlaneseq
  %v2104 = vshrl.u32 %v2103, 7
  %v2105 = vsub.s32 3, %v2104
  %v2106 = vrot.slane %v2089, %v2105
  %v2111 = vmul.f32 %v2081, %v2094
  %v2112 = vmul.f32 %v2077, %v2098
  %v2113 = vmul.f32 %v2073, %v2102
  %v2114 = vmul.f32 %v2085, %v2106
  %v2115 = vmul.f32 %v2082, %v2094
  %v2116 = vmul.f32 %v2078, %v2098
  %v2117 = vmul.f32 %v2074, %v2102
  %v2118 = vmul.f32 %v2086, %v2106
  %v2119 = vmul.f32 %v2083, %v2094
  %v2120 = vmul.f32 %v2079, %v2098
  %v2121 = vmul.f32 %v2075, %v2102
  %v2122 = vmul.f32 %v2087, %v2106
  %v2123 = vmul.f32 %v2084, %v2094
  %v2124 = vmul.f32 %v2080, %v2098
  %v2125 = vmul.f32 %v2076, %v2102
  %v2126 = vmul.f32 %v2088, %v2106
  %v2127 = vpack.c.bf16 %v2115, %v2111
  %v2128 = vpack.c.bf16 %v2116, %v2112
  %v2129 = vpack.c.bf16 %v2117, %v2113
  %v2130 = vpack.c.bf16 %v2118, %v2114
  %v2131 = vpack.c.bf16 %v2123, %v2119
  %v2132 = vpack.c.bf16 %v2124, %v2120
  %v2133 = vpack.c.bf16 %v2125, %v2121
  %v2134 = vpack.c.bf16 %v2126, %v2122
  %2135 = vst [vmem:[#allocation2 + $0x1c0] sm:$0xff] %v2127
  %2136 = vst [vmem:[#allocation2 + $0x1c8] sm:$0xff] %v2128
  %2137 = vst [vmem:[#allocation2 + $0x1d0] sm:$0xff] %v2129
  %2138 = vst [vmem:[#allocation2 + $0x1d8] sm:$0xff] %v2130
  %2139 = vst [vmem:[#allocation2 + $0x1e0] sm:$0xff] %v2131
  %2140 = vst [vmem:[#allocation2 + $0x1e8] sm:$0xff] %v2132
  %2141 = vst [vmem:[#allocation2 + $0x1f0] sm:$0xff] %v2133
  %2142 = vst [vmem:[#allocation2 + $0x1f8] sm:$0xff] %v2134
  %2143 = vrot.lane.b32.xlu0 %v1397, 111
  %v2144 = vpop.permute.xlu0 %2143
  %2145 = vrot.lane.b32.xlu0 %v1401, 111
  %v2146 = vpop.permute.xlu0 %2145
  %2147 = vrot.lane.b32.xlu0 %v1405, 111
  %v2148 = vpop.permute.xlu0 %2147
  %2149 = vrot.lane.b32.xlu0 %v1409, 111
  %v2150 = vpop.permute.xlu0 %2149
  %2151 = vrot.lane.b32.xlu0 %v1398, 111
  %v2152 = vpop.permute.xlu0 %2151
  %2153 = vrot.lane.b32.xlu0 %v1402, 111
  %v2154 = vpop.permute.xlu0 %2153
  %2155 = vrot.lane.b32.xlu0 %v1406, 111
  %v2156 = vpop.permute.xlu0 %2155
  %2157 = vrot.lane.b32.xlu0 %v1410, 111
  %v2158 = vpop.permute.xlu0 %2157
  %2159 = vrot.lane.b32.xlu0 %v1399, 111
  %v2160 = vpop.permute.xlu0 %2159
  %2161 = vrot.lane.b32.xlu0 %v1403, 111
  %v2162 = vpop.permute.xlu0 %2161
  %2163 = vrot.lane.b32.xlu0 %v1407, 111
  %v2164 = vpop.permute.xlu0 %2163
  %2165 = vrot.lane.b32.xlu0 %v1411, 111
  %v2166 = vpop.permute.xlu0 %2165
  %2167 = vrot.lane.b32.xlu0 %v1400, 111
  %v2168 = vpop.permute.xlu0 %2167
  %2169 = vrot.lane.b32.xlu0 %v1404, 111
  %v2170 = vpop.permute.xlu0 %2169
  %2171 = vrot.lane.b32.xlu0 %v1408, 111
  %v2172 = vpop.permute.xlu0 %2171
  %2173 = vrot.lane.b32.xlu0 %v1412, 111
  %v2174 = vpop.permute.xlu0 %2173
  %v2175 = vsel %vm824, %v2160, %v2168
  %v2176 = vsel %vm824, %v2162, %v2170
  %v2177 = vsel %vm824, %v2164, %v2172
  %v2178 = vsel %vm824, %v2166, %v2174
  %v2179 = vsel %vm824, %v2152, %v2160
  %v2180 = vsel %vm824, %v2154, %v2162
  %v2181 = vsel %vm824, %v2156, %v2164
  %v2182 = vsel %vm824, %v2158, %v2166
  %v2183 = vsel %vm824, %v2144, %v2152
  %v2184 = vsel %vm824, %v2146, %v2154
  %v2185 = vsel %vm824, %v2148, %v2156
  %v2186 = vsel %vm824, %v2150, %v2158
  %v2187 = vsel %vm824, %v2168, %v2144
  %v2188 = vsel %vm824, %v2170, %v2146
  %v2189 = vsel %vm824, %v2172, %v2148
  %v2190 = vsel %vm824, %v2174, %v2150
  %v2191 = vld [vmem:[%s841] ss:$8 sm:$0xf]
  %v2193 = vlaneseq
  %v2194 = vshrl.u32 %v2193, 7
  %v2195 = vsub.s32 0, %v2194
  %v2196 = vrot.slane %v2191, %v2195
  %v2197 = vlaneseq
  %v2198 = vshrl.u32 %v2197, 7
  %v2199 = vsub.s32 1, %v2198
  %v2200 = vrot.slane %v2191, %v2199
  %v2201 = vlaneseq
  %v2202 = vshrl.u32 %v2201, 7
  %v2203 = vsub.s32 2, %v2202
  %v2204 = vrot.slane %v2191, %v2203
  %v2205 = vlaneseq
  %v2206 = vshrl.u32 %v2205, 7
  %v2207 = vsub.s32 3, %v2206
  %v2208 = vrot.slane %v2191, %v2207
  %v2213 = vmul.f32 %v2183, %v2196
  %v2214 = vmul.f32 %v2179, %v2200
  %v2215 = vmul.f32 %v2175, %v2204
  %v2216 = vmul.f32 %v2187, %v2208
  %v2217 = vmul.f32 %v2184, %v2196
  %v2218 = vmul.f32 %v2180, %v2200
  %v2219 = vmul.f32 %v2176, %v2204
  %v2220 = vmul.f32 %v2188, %v2208
  %v2221 = vmul.f32 %v2185, %v2196
  %v2222 = vmul.f32 %v2181, %v2200
  %v2223 = vmul.f32 %v2177, %v2204
  %v2224 = vmul.f32 %v2189, %v2208
  %v2225 = vmul.f32 %v2186, %v2196
  %v2226 = vmul.f32 %v2182, %v2200
  %v2227 = vmul.f32 %v2178, %v2204
  %v2228 = vmul.f32 %v2190, %v2208
  %v2229 = vpack.c.bf16 %v2217, %v2213
  %v2230 = vpack.c.bf16 %v2218, %v2214
  %v2231 = vpack.c.bf16 %v2219, %v2215
  %v2232 = vpack.c.bf16 %v2220, %v2216
  %v2233 = vpack.c.bf16 %v2225, %v2221
  %v2234 = vpack.c.bf16 %v2226, %v2222
  %v2235 = vpack.c.bf16 %v2227, %v2223
  %v2236 = vpack.c.bf16 %v2228, %v2224
  %2237 = vst [vmem:[#allocation2 + $0x200] sm:$0xff] %v2229
  %2238 = vst [vmem:[#allocation2 + $0x208] sm:$0xff] %v2230
  %2239 = vst [vmem:[#allocation2 + $0x210] sm:$0xff] %v2231
  %2240 = vst [vmem:[#allocation2 + $0x218] sm:$0xff] %v2232
  %2241 = vst [vmem:[#allocation2 + $0x220] sm:$0xff] %v2233
  %2242 = vst [vmem:[#allocation2 + $0x228] sm:$0xff] %v2234
  %2243 = vst [vmem:[#allocation2 + $0x230] sm:$0xff] %v2235
  %2244 = vst [vmem:[#allocation2 + $0x238] sm:$0xff] %v2236
  %v2245 = vld [vmem:[%s2] sm:$0xff]
  %v2246 = vld [vmem:[%s2 + $0x8] sm:$0xf]
  %v2247 = vld [vmem:[%s2 + $0xc] sm:$0xff]
  %v2248 = vld [vmem:[%s2 + $0x14] sm:$0xf]
  %v2249 = vld [vmem:[%s2 + $0x18] sm:$0xff]
  %v2250 = vld [vmem:[%s2 + $0x20] sm:$0xf]
  %v2251 = vld [vmem:[%s2 + $0x24] sm:$0xff]
  %v2252 = vld [vmem:[%s2 + $0x2c] sm:$0xf]
  %v2253 = vld [vmem:[#allocation2] sm:$0xff]
  %v2254 = vld [vmem:[#allocation2 + $0x8] sm:$0xff]
  %v2255 = vld [vmem:[#allocation2 + $0x10] sm:$0xff]
  %v2256 = vld [vmem:[#allocation2 + $0x18] sm:$0xff]
  %v2257 = vld [vmem:[#allocation2 + $0x20] sm:$0xff]
  %v2258 = vld [vmem:[#allocation2 + $0x28] sm:$0xff]
  %v2259 = vld [vmem:[#allocation2 + $0x30] sm:$0xff]
  %v2260 = vld [vmem:[#allocation2 + $0x38] sm:$0xff]
  %v2261 = vld [vmem:[#allocation2 + $0x40] sm:$0xff]
  %v2262 = vld [vmem:[#allocation2 + $0x48] sm:$0xff]
  %v2263 = vld [vmem:[#allocation2 + $0x50] sm:$0xff]
  %v2264 = vld [vmem:[#allocation2 + $0x58] sm:$0xff]
  %v2265 = vld [vmem:[#allocation2 + $0x60] sm:$0xff]
  %v2266 = vld [vmem:[#allocation2 + $0x68] sm:$0xff]
  %v2267 = vld [vmem:[#allocation2 + $0x70] sm:$0xff]
  %v2268 = vld [vmem:[#allocation2 + $0x78] sm:$0xff]
  %v2269 = vld [vmem:[#allocation2 + $0x80] sm:$0xff]
  %v2270 = vld [vmem:[#allocation2 + $0x88] sm:$0xff]
  %v2271 = vld [vmem:[#allocation2 + $0x90] sm:$0xff]
  %v2272 = vld [vmem:[#allocation2 + $0x98] sm:$0xff]
  %v2273 = vld [vmem:[#allocation2 + $0xa0] sm:$0xff]
  %v2274 = vld [vmem:[#allocation2 + $0xa8] sm:$0xff]
  %v2275 = vld [vmem:[#allocation2 + $0xb0] sm:$0xff]
  %v2276 = vld [vmem:[#allocation2 + $0xb8] sm:$0xff]
  %v2277 = vld [vmem:[#allocation2 + $0xc0] sm:$0xff]
  %v2278 = vld [vmem:[#allocation2 + $0xc8] sm:$0xff]
  %v2279 = vld [vmem:[#allocation2 + $0xd0] sm:$0xff]
  %v2280 = vld [vmem:[#allocation2 + $0xd8] sm:$0xff]
  %v2281 = vld [vmem:[#allocation2 + $0xe0] sm:$0xff]
  %v2282 = vld [vmem:[#allocation2 + $0xe8] sm:$0xff]
  %v2283 = vld [vmem:[#allocation2 + $0xf0] sm:$0xff]
  %v2284 = vld [vmem:[#allocation2 + $0xf8] sm:$0xff]
  %v2285 = vld [vmem:[#allocation2 + $0x100] sm:$0xff]
  %v2286 = vld [vmem:[#allocation2 + $0x108] sm:$0xff]
  %v2287 = vld [vmem:[#allocation2 + $0x110] sm:$0xff]
  %v2288 = vld [vmem:[#allocation2 + $0x118] sm:$0xff]
  %v2289 = vld [vmem:[#allocation2 + $0x120] sm:$0xff]
  %v2290 = vld [vmem:[#allocation2 + $0x128] sm:$0xff]
  %v2291 = vld [vmem:[#allocation2 + $0x130] sm:$0xff]
  %v2292 = vld [vmem:[#allocation2 + $0x138] sm:$0xff]
  %v2293 = vld [vmem:[#allocation2 + $0x140] sm:$0xff]
  %v2294 = vld [vmem:[#allocation2 + $0x148] sm:$0xff]
  %v2295 = vld [vmem:[#allocation2 + $0x150] sm:$0xff]
  %v2296 = vld [vmem:[#allocation2 + $0x158] sm:$0xff]
  %v2297 = vld [vmem:[#allocation2 + $0x160] sm:$0xff]
  %v2298 = vld [vmem:[#allocation2 + $0x168] sm:$0xff]
  %v2299 = vld [vmem:[#allocation2 + $0x170] sm:$0xff]
  %v2300 = vld [vmem:[#allocation2 + $0x178] sm:$0xff]
  %v2301 = vld [vmem:[#allocation2 + $0x180] sm:$0xff]
  %v2302 = vld [vmem:[#allocation2 + $0x188] sm:$0xff]
  %v2303 = vld [vmem:[#allocation2 + $0x190] sm:$0xff]
  %v2304 = vld [vmem:[#allocation2 + $0x198] sm:$0xff]
  %v2305 = vld [vmem:[#allocation2 + $0x1a0] sm:$0xff]
  %v2306 = vld [vmem:[#allocation2 + $0x1a8] sm:$0xff]
  %v2307 = vld [vmem:[#allocation2 + $0x1b0] sm:$0xff]
  %v2308 = vld [vmem:[#allocation2 + $0x1b8] sm:$0xff]
  %v2309 = vld [vmem:[#allocation2 + $0x1c0] sm:$0xff]
  %v2310 = vld [vmem:[#allocation2 + $0x1c8] sm:$0xff]
  %v2311 = vld [vmem:[#allocation2 + $0x1d0] sm:$0xff]
  %v2312 = vld [vmem:[#allocation2 + $0x1d8] sm:$0xff]
  %v2313 = vld [vmem:[#allocation2 + $0x1e0] sm:$0xff]
  %v2314 = vld [vmem:[#allocation2 + $0x1e8] sm:$0xff]
  %v2315 = vld [vmem:[#allocation2 + $0x1f0] sm:$0xff]
  %v2316 = vld [vmem:[#allocation2 + $0x1f8] sm:$0xff]
  %v2317 = vld [vmem:[#allocation2 + $0x200] sm:$0xff]
  %v2318 = vld [vmem:[#allocation2 + $0x208] sm:$0xff]
  %v2319 = vld [vmem:[#allocation2 + $0x210] sm:$0xff]
  %v2320 = vld [vmem:[#allocation2 + $0x218] sm:$0xff]
  %v2321 = vld [vmem:[#allocation2 + $0x220] sm:$0xff]
  %v2322 = vld [vmem:[#allocation2 + $0x228] sm:$0xff]
  %v2323 = vld [vmem:[#allocation2 + $0x230] sm:$0xff]
  %v2324 = vld [vmem:[#allocation2 + $0x238] sm:$0xff]
  %v2333 = vunpack.c.l.b16 %v2245
  %v2334 = vunpack.c.h.b16 %v2245
  %v2335 = vunpack.c.l.b16 %v2246
  %v2336 = vunpack.c.l.b16 %v2247
  %v2337 = vunpack.c.h.b16 %v2247
  %v2338 = vunpack.c.l.b16 %v2248
  %v2339 = vunpack.c.l.b16 %v2249
  %v2340 = vunpack.c.h.b16 %v2249
  %v2341 = vunpack.c.l.b16 %v2250
  %v2342 = vunpack.c.l.b16 %v2251
  %v2343 = vunpack.c.h.b16 %v2251
  %v2344 = vunpack.c.l.b16 %v2252
  %v2345 = vpack.c.b16 %v2336, %v2333
  %v2346 = vpack.c.b16 %v2337, %v2334
  %v2347 = vpack.c.b16 %v2338, %v2335
  %v2348 = vpack.c.b16 %v2342, %v2339
  %v2349 = vpack.c.b16 %v2343, %v2340
  %v2350 = vpack.c.b16 %v2344, %v2341
  %v2356 = vsel %vm1006, %v2347, 0
  %v2359 = vsel %vm1006, %v2350, 0
  %2361 = vmatprep.subr.bf16.mxu0 %v2254
  %2362 = vmatpush1.bf16.msra.mxu0 %v2253
  %2363 = vmatprep.subr.bf16.mxu0 %v2258
  %2364 = vmatpush1.bf16.msra.mxu0 %v2257
  %2365 = vmatprep.subr.bf16.mxu0 %v2262
  %2366 = vmatpush1.bf16.msra.mxu0 %v2261
  %2367 = vmatprep.subr.bf16.mxu0 %v2266
  %2368 = vmatpush1.bf16.msra.mxu0 %v2265
  %2369 = vmatprep.subr.bf16.mxu0 %v2270
  %2370 = vmatpush1.bf16.msra.mxu0 %v2269
  %2371 = vmatprep.subr.bf16.mxu0 %v2274
  %2372 = vmatpush1.bf16.msra.mxu0 %v2273
  %2373 = vmatprep.subr.bf16.mxu0 %v2278
  %2374 = vmatpush1.bf16.msra.mxu0 %v2277
  %2375 = vmatprep.subr.bf16.mxu0 %v2282
  %2376 = vmatpush1.bf16.msra.mxu0 %v2281
  %2377 = vmatprep.subr.bf16.mxu0 %v2286
  %2378 = vmatpush1.bf16.msra.mxu0 %v2285
  %2379 = vmatprep.subr.bf16.mxu0 %v2290
  %2380 = vmatpush1.bf16.msra.mxu0 %v2289
  %2381 = vmatprep.subr.bf16.mxu0 %v2294
  %2382 = vmatpush1.bf16.msra.mxu0 %v2293
  %2383 = vmatprep.subr.bf16.mxu0 %v2298
  %2384 = vmatpush1.bf16.msra.mxu0 %v2297
  %2385 = vmatprep.subr.bf16.mxu0 %v2302
  %2386 = vmatpush1.bf16.msra.mxu0 %v2301
  %2387 = vmatprep.subr.bf16.mxu0 %v2306
  %2388 = vmatpush1.bf16.msra.mxu0 %v2305
  %2389 = vmatprep.subr.bf16.mxu0 %v2310
  %2390 = vmatpush1.bf16.msra.mxu0 %v2309
  %2391 = vmatprep.subr.bf16.mxu0 %v2314
  %2392 = vmatpush1.bf16.msra.mxu0 %v2313
  %2393 = vmatprep.mubr.bf16.mxu0 %v2346
  %2394 = vmatmul.mubr.bf16.gmra.mrb[0].mxu0 %v2345
  %v2395 = vpop.f32.mrb[0].mxu0
  %v2396 = vadd.f32 0.0, %v2395
  %v2397 = vpop.f32.mrb[0].mxu0
  %v2398 = vadd.f32 0.0, %v2397
  %v2399 = vpop.f32.mrb[0].mxu0
  %v2400 = vadd.f32 0.0, %v2399
  %v2401 = vpop.f32.mrb[0].mxu0
  %v2402 = vadd.f32 0.0, %v2401
  %2403 = vmatprep.mubr.bf16.mxu0 %v2349
  %2404 = vmatmul.mubr.bf16.gmra.mrb[0].mxu0 %v2348
  %v2405 = vpop.f32.mrb[0].mxu0
  %v2406 = vadd.f32 0.0, %v2405
  %v2407 = vpop.f32.mrb[0].mxu0
  %v2408 = vadd.f32 0.0, %v2407
  %v2409 = vpop.f32.mrb[0].mxu0
  %v2410 = vadd.f32 0.0, %v2409
  %v2411 = vpop.f32.mrb[0].mxu0
  %v2412 = vadd.f32 0.0, %v2411
  %2413 = vdwg.mxu0
  %2414 = vmatprep.subr.bf16.mxu0 %v2318
  %2415 = vmatpush1.bf16.msra.mxu0 %v2317
  %2416 = vmatprep.subr.bf16.mxu0 %v2322
  %2417 = vmatpush1.bf16.msra.mxu0 %v2321
  %2418 = vmatprep.subr.bf16.mxu0 0
  %2419 = vmatpush1.bf16.msra.mxu0 0
  %2420 = vmatprep.subr.bf16.mxu0 0
  %2421 = vmatpush1.bf16.msra.mxu0 0
  %2422 = vmatprep.subr.bf16.mxu0 0
  %2423 = vmatpush1.bf16.msra.mxu0 0
  %2424 = vmatprep.subr.bf16.mxu0 0
  %2425 = vmatpush1.bf16.msra.mxu0 0
  %2426 = vmatprep.subr.bf16.mxu0 0
  %2427 = vmatpush1.bf16.msra.mxu0 0
  %2428 = vmatprep.subr.bf16.mxu0 0
  %2429 = vmatpush1.bf16.msra.mxu0 0
  %2430 = vmatprep.subr.bf16.mxu0 0
  %2431 = vmatpush1.bf16.msra.mxu0 0
  %2432 = vmatprep.subr.bf16.mxu0 0
  %2433 = vmatpush1.bf16.msra.mxu0 0
  %2434 = vmatprep.subr.bf16.mxu0 0
  %2435 = vmatpush1.bf16.msra.mxu0 0
  %2436 = vmatprep.subr.bf16.mxu0 0
  %2437 = vmatpush1.bf16.msra.mxu0 0
  %2438 = vmatprep.subr.bf16.mxu0 0
  %2439 = vmatpush1.bf16.msra.mxu0 0
  %2440 = vmatprep.subr.bf16.mxu0 0
  %2441 = vmatpush1.bf16.msra.mxu0 0
  %2442 = vmatprep.subr.bf16.mxu0 0
  %2443 = vmatpush1.bf16.msra.mxu0 0
  %2444 = vmatprep.subr.bf16.mxu0 0
  %2445 = vmatpush1.bf16.msra.mxu0 0
  %2446 = vmatprep.mubr.bf16.mxu0 0
  %2447 = vmatmul.mubr.bf16.gmra.mrb[0].mxu0 %v2356
  %v2448 = vpop.f32.mrb[0].mxu0
  %v2449 = vadd.f32 %v2396, %v2448
  %v2450 = vpop.f32.mrb[0].mxu0
  %v2451 = vadd.f32 %v2398, %v2450
  %v2452 = vpop.f32.mrb[0].mxu0
  %v2453 = vadd.f32 %v2400, %v2452
  %v2454 = vpop.f32.mrb[0].mxu0
  %v2455 = vadd.f32 %v2402, %v2454
  %2456 = vmatprep.mubr.bf16.mxu0 0
  %2457 = vmatmul.mubr.bf16.gmra.mrb[0].mxu0 %v2359
  %v2458 = vpop.f32.mrb[0].mxu0
  %v2459 = vadd.f32 %v2406, %v2458
  %v2460 = vpop.f32.mrb[0].mxu0
  %v2461 = vadd.f32 %v2408, %v2460
  %v2462 = vpop.f32.mrb[0].mxu0
  %v2463 = vadd.f32 %v2410, %v2462
  %v2464 = vpop.f32.mrb[0].mxu0
  %v2465 = vadd.f32 %v2412, %v2464
  %2466 = vdwg.mxu0
  %2467 = vmatprep.subr.bf16.mxu0 %v2256
  %2468 = vmatpush1.bf16.msra.mxu0 %v2255
  %2469 = vmatprep.subr.bf16.mxu0 %v2260
  %2470 = vmatpush1.bf16.msra.mxu0 %v2259
  %2471 = vmatprep.subr.bf16.mxu0 %v2264
  %2472 = vmatpush1.bf16.msra.mxu0 %v2263
  %2473 = vmatprep.subr.bf16.mxu0 %v2268
  %2474 = vmatpush1.bf16.msra.mxu0 %v2267
  %2475 = vmatprep.subr.bf16.mxu0 %v2272
  %2476 = vmatpush1.bf16.msra.mxu0 %v2271
  %2477 = vmatprep.subr.bf16.mxu0 %v2276
  %2478 = vmatpush1.bf16.msra.mxu0 %v2275
  %2479 = vmatprep.subr.bf16.mxu0 %v2280
  %2480 = vmatpush1.bf16.msra.mxu0 %v2279
  %2481 = vmatprep.subr.bf16.mxu0 %v2284
  %2482 = vmatpush1.bf16.msra.mxu0 %v2283
  %2483 = vmatprep.subr.bf16.mxu0 %v2288
  %2484 = vmatpush1.bf16.msra.mxu0 %v2287
  %2485 = vmatprep.subr.bf16.mxu0 %v2292
  %2486 = vmatpush1.bf16.msra.mxu0 %v2291
  %2487 = vmatprep.subr.bf16.mxu0 %v2296
  %2488 = vmatpush1.bf16.msra.mxu0 %v2295
  %2489 = vmatprep.subr.bf16.mxu0 %v2300
  %2490 = vmatpush1.bf16.msra.mxu0 %v2299
  %2491 = vmatprep.subr.bf16.mxu0 %v2304
  %2492 = vmatpush1.bf16.msra.mxu0 %v2303
  %2493 = vmatprep.subr.bf16.mxu0 %v2308
  %2494 = vmatpush1.bf16.msra.mxu0 %v2307
  %2495 = vmatprep.subr.bf16.mxu0 %v2312
  %2496 = vmatpush1.bf16.msra.mxu0 %v2311
  %2497 = vmatprep.subr.bf16.mxu0 %v2316
  %2498 = vmatpush1.bf16.msra.mxu0 %v2315
  %2499 = vmatprep.mubr.bf16.mxu0 %v2346
  %2500 = vmatmul.mubr.bf16.gmra.mrb[0].mxu0 %v2345
  %v2501 = vpop.f32.mrb[0].mxu0
  %v2502 = vadd.f32 0.0, %v2501
  %v2503 = vpop.f32.mrb[0].mxu0
  %v2504 = vadd.f32 0.0, %v2503
  %v2505 = vpop.f32.mrb[0].mxu0
  %v2506 = vadd.f32 0.0, %v2505
  %v2507 = vpop.f32.mrb[0].mxu0
  %v2508 = vadd.f32 0.0, %v2507
  %2509 = vmatprep.mubr.bf16.mxu0 %v2349
  %2510 = vmatmul.mubr.bf16.gmra.mrb[0].mxu0 %v2348
  %v2511 = vpop.f32.mrb[0].mxu0
  %v2512 = vadd.f32 0.0, %v2511
  %v2513 = vpop.f32.mrb[0].mxu0
  %v2514 = vadd.f32 0.0, %v2513
  %v2515 = vpop.f32.mrb[0].mxu0
  %v2516 = vadd.f32 0.0, %v2515
  %v2517 = vpop.f32.mrb[0].mxu0
  %v2518 = vadd.f32 0.0, %v2517
  %2519 = vdwg.mxu0
  %2520 = vmatprep.subr.bf16.mxu0 %v2320
  %2521 = vmatpush1.bf16.msra.mxu0 %v2319
  %2522 = vmatprep.subr.bf16.mxu0 %v2324
  %2523 = vmatpush1.bf16.msra.mxu0 %v2323
  %2524 = vmatprep.subr.bf16.mxu0 0
  %2525 = vmatpush1.bf16.msra.mxu0 0
  %2526 = vmatprep.subr.bf16.mxu0 0
  %2527 = vmatpush1.bf16.msra.mxu0 0
  %2528 = vmatprep.subr.bf16.mxu0 0
  %2529 = vmatpush1.bf16.msra.mxu0 0
  %2530 = vmatprep.subr.bf16.mxu0 0
  %2531 = vmatpush1.bf16.msra.mxu0 0
  %2532 = vmatprep.subr.bf16.mxu0 0
  %2533 = vmatpush1.bf16.msra.mxu0 0
  %2534 = vmatprep.subr.bf16.mxu0 0
  %2535 = vmatpush1.bf16.msra.mxu0 0
  %2536 = vmatprep.subr.bf16.mxu0 0
  %2537 = vmatpush1.bf16.msra.mxu0 0
  %2538 = vmatprep.subr.bf16.mxu0 0
  %2539 = vmatpush1.bf16.msra.mxu0 0
  %2540 = vmatprep.subr.bf16.mxu0 0
  %2541 = vmatpush1.bf16.msra.mxu0 0
  %2542 = vmatprep.subr.bf16.mxu0 0
  %2543 = vmatpush1.bf16.msra.mxu0 0
  %2544 = vmatprep.subr.bf16.mxu0 0
  %2545 = vmatpush1.bf16.msra.mxu0 0
  %2546 = vmatprep.subr.bf16.mxu0 0
  %2547 = vmatpush1.bf16.msra.mxu0 0
  %2548 = vmatprep.subr.bf16.mxu0 0
  %2549 = vmatpush1.bf16.msra.mxu0 0
  %2550 = vmatprep.subr.bf16.mxu0 0
  %2551 = vmatpush1.bf16.msra.mxu0 0
  %2552 = vmatprep.mubr.bf16.mxu0 0
  %2553 = vmatmul.mubr.bf16.gmra.mrb[0].mxu0 %v2356
  %v2554 = vpop.f32.mrb[0].mxu0
  %v2555 = vadd.f32 %v2502, %v2554
  %v2556 = vpop.f32.mrb[0].mxu0
  %v2557 = vadd.f32 %v2504, %v2556
  %v2558 = vpop.f32.mrb[0].mxu0
  %v2559 = vadd.f32 %v2506, %v2558
  %v2560 = vpop.f32.mrb[0].mxu0
  %v2561 = vadd.f32 %v2508, %v2560
  %2562 = vmatprep.mubr.bf16.mxu0 0
  %2563 = vmatmul.mubr.bf16.gmra.mrb[0].mxu0 %v2359
  %v2564 = vpop.f32.mrb[0].mxu0
  %v2565 = vadd.f32 %v2512, %v2564
  %v2566 = vpop.f32.mrb[0].mxu0
  %v2567 = vadd.f32 %v2514, %v2566
  %v2568 = vpop.f32.mrb[0].mxu0
  %v2569 = vadd.f32 %v2516, %v2568
  %v2570 = vpop.f32.mrb[0].mxu0
  %v2571 = vadd.f32 %v2518, %v2570
  %2572 = vdwg.mxu0
  %v2573 = vadd.f32 %v2449, %v2451
  %v2574 = vadd.f32 %v2573, %v2555
  %v2575 = vadd.f32 %v2574, %v2557
  %2576 = vadd.xlane.f32.xlu0 %v2575
  %v2577 = vpop.xlane.xlu0 %2576
  %v2578 = vadd.f32 %v2453, %v2455
  %v2579 = vadd.f32 %v2578, %v2559
  %v2580 = vadd.f32 %v2579, %v2561
  %2581 = vadd.xlane.f32.xlu0 %v2580
  %v2582 = vpop.xlane.xlu0 %2581
  %v2583 = vadd.f32 %v2459, %v2461
  %v2584 = vadd.f32 %v2583, %v2565
  %v2585 = vadd.f32 %v2584, %v2567
  %2586 = vadd.xlane.f32.xlu0 %v2585
  %v2587 = vpop.xlane.xlu0 %2586
  %v2588 = vadd.f32 %v2463, %v2465
  %v2589 = vadd.f32 %v2588, %v2569
  %v2590 = vadd.f32 %v2589, %v2571
  %2591 = vadd.xlane.f32.xlu0 %v2590
  %v2592 = vpop.xlane.xlu0 %2591
  %v2593 = vmul.f32 %v2577, 0.001953125
  %v2594 = vmul.f32 %v2582, 0.001953125
  %v2595 = vmul.f32 %v2587, 0.001953125
  %v2596 = vmul.f32 %v2592, 0.001953125
  %v2597 = vsub.f32 %v2449, %v2593
  %v2598 = vsub.f32 %v2451, %v2593
  %v2599 = vsub.f32 %v2555, %v2593
  %v2600 = vsub.f32 %v2557, %v2593
  %v2601 = vsub.f32 %v2453, %v2594
  %v2602 = vsub.f32 %v2455, %v2594
  %v2603 = vsub.f32 %v2559, %v2594
  %v2604 = vsub.f32 %v2561, %v2594
  %v2605 = vsub.f32 %v2459, %v2595
  %v2606 = vsub.f32 %v2461, %v2595
  %v2607 = vsub.f32 %v2565, %v2595
  %v2608 = vsub.f32 %v2567, %v2595
  %v2609 = vsub.f32 %v2463, %v2596
  %v2610 = vsub.f32 %v2465, %v2596
  %v2611 = vsub.f32 %v2569, %v2596
  %v2612 = vsub.f32 %v2571, %v2596
  %v2613 = vmul.f32 %v2597, %v2597
  %v2614 = vmul.f32 %v2598, %v2598
  %v2615 = vmul.f32 %v2599, %v2599
  %v2616 = vmul.f32 %v2600, %v2600
  %v2617 = vmul.f32 %v2601, %v2601
  %v2618 = vmul.f32 %v2602, %v2602
  %v2619 = vmul.f32 %v2603, %v2603
  %v2620 = vmul.f32 %v2604, %v2604
  %v2621 = vmul.f32 %v2605, %v2605
  %v2622 = vmul.f32 %v2606, %v2606
  %v2623 = vmul.f32 %v2607, %v2607
  %v2624 = vmul.f32 %v2608, %v2608
  %v2625 = vmul.f32 %v2609, %v2609
  %v2626 = vmul.f32 %v2610, %v2610
  %v2627 = vmul.f32 %v2611, %v2611
  %v2628 = vmul.f32 %v2612, %v2612
  %v2629 = vadd.f32 %v2613, %v2614
  %v2630 = vadd.f32 %v2629, %v2615
  %v2631 = vadd.f32 %v2630, %v2616
  %2632 = vadd.xlane.f32.xlu0 %v2631
  %v2633 = vpop.xlane.xlu0 %2632
  %v2634 = vadd.f32 %v2617, %v2618
  %v2635 = vadd.f32 %v2634, %v2619
  %v2636 = vadd.f32 %v2635, %v2620
  %2637 = vadd.xlane.f32.xlu0 %v2636
  %v2638 = vpop.xlane.xlu0 %2637
  %v2639 = vadd.f32 %v2621, %v2622
  %v2640 = vadd.f32 %v2639, %v2623
  %v2641 = vadd.f32 %v2640, %v2624
  %2642 = vadd.xlane.f32.xlu0 %v2641
  %v2643 = vpop.xlane.xlu0 %2642
  %v2644 = vadd.f32 %v2625, %v2626
  %v2645 = vadd.f32 %v2644, %v2627
  %v2646 = vadd.f32 %v2645, %v2628
  %2647 = vadd.xlane.f32.xlu0 %v2646
  %v2648 = vpop.xlane.xlu0 %2647
  %v2649 = vmul.f32 %v2633, 0.001953125
  %v2650 = vmul.f32 %v2638, 0.001953125
  %v2651 = vmul.f32 %v2643, 0.001953125
  %v2652 = vmul.f32 %v2648, 0.001953125
  %v2653 = vadd.f32 %v2649, 1e-05
  %v2654 = vadd.f32 %v2650, 1e-05
  %v2655 = vadd.f32 %v2651, 1e-05
  %v2656 = vadd.f32 %v2652, 1e-05
  %v2657 = vrsqrt.pop %v2653
  %v2658 = vrsqrt.pop %v2654
  %v2659 = vrsqrt.pop %v2655
  %v2660 = vrsqrt.pop %v2656
  %v2661 = vld [vmem:[%s5] sm:$0xff]
  %v2662 = vld [vmem:[%s5 + $0x8] sm:$0xff]
  %v2663 = vld [vmem:[%s5 + $0x10] sm:$0xff]
  %v2664 = vld [vmem:[%s5 + $0x18] sm:$0xff]
  %v2665 = vmul.f32 %v2657, %v2661
  %v2666 = vmul.f32 %v2658, %v2662
  %v2667 = vmul.f32 %v2659, %v2663
  %v2668 = vmul.f32 %v2660, %v2664
  %2670 = vset.pattern.permute.xlu0 0
  %2671 = vperm.xlu0 %2670, %v2665
  %v2672 = vpop.permute.xlu0 %2671
  %2675 = vset.pattern.permute.xlu0 0
  %2676 = vperm.xlu0 %2675, %v2666
  %v2677 = vpop.permute.xlu0 %2676
  %2680 = vset.pattern.permute.xlu0 0
  %2681 = vperm.xlu0 %2680, %v2667
  %v2682 = vpop.permute.xlu0 %2681
  %2685 = vset.pattern.permute.xlu0 0
  %2686 = vperm.xlu0 %2685, %v2668
  %v2687 = vpop.permute.xlu0 %2686
  %v2689 = vmul.f32 %v2597, %v2672
  %v2690 = vmul.f32 %v2598, %v2672
  %v2691 = vmul.f32 %v2599, %v2672
  %v2692 = vmul.f32 %v2600, %v2672
  %v2693 = vmul.f32 %v2601, %v2677
  %v2694 = vmul.f32 %v2602, %v2677
  %v2695 = vmul.f32 %v2603, %v2677
  %v2696 = vmul.f32 %v2604, %v2677
  %v2697 = vmul.f32 %v2605, %v2682
  %v2698 = vmul.f32 %v2606, %v2682
  %v2699 = vmul.f32 %v2607, %v2682
  %v2700 = vmul.f32 %v2608, %v2682
  %v2701 = vmul.f32 %v2609, %v2687
  %v2702 = vmul.f32 %v2610, %v2687
  %v2703 = vmul.f32 %v2611, %v2687
  %v2704 = vmul.f32 %v2612, %v2687
  %v2705 = vld [vmem:[%s6] sm:$0xff]
  %v2706 = vld [vmem:[%s6 + $0x8] sm:$0xff]
  %v2707 = vld [vmem:[%s6 + $0x10] sm:$0xff]
  %v2708 = vld [vmem:[%s6 + $0x18] sm:$0xff]
  %2710 = vset.pattern.permute.xlu0 0
  %2711 = vperm.xlu0 %2710, %v2705
  %v2712 = vpop.permute.xlu0 %2711
  %2715 = vset.pattern.permute.xlu0 0
  %2716 = vperm.xlu0 %2715, %v2706
  %v2717 = vpop.permute.xlu0 %2716
  %2720 = vset.pattern.permute.xlu0 0
  %2721 = vperm.xlu0 %2720, %v2707
  %v2722 = vpop.permute.xlu0 %2721
  %2725 = vset.pattern.permute.xlu0 0
  %2726 = vperm.xlu0 %2725, %v2708
  %v2727 = vpop.permute.xlu0 %2726
  %v2729 = vadd.f32 %v2689, %v2712
  %v2730 = vadd.f32 %v2690, %v2712
  %v2731 = vadd.f32 %v2691, %v2712
  %v2732 = vadd.f32 %v2692, %v2712
  %v2733 = vadd.f32 %v2693, %v2717
  %v2734 = vadd.f32 %v2694, %v2717
  %v2735 = vadd.f32 %v2695, %v2717
  %v2736 = vadd.f32 %v2696, %v2717
  %v2737 = vadd.f32 %v2697, %v2722
  %v2738 = vadd.f32 %v2698, %v2722
  %v2739 = vadd.f32 %v2699, %v2722
  %v2740 = vadd.f32 %v2700, %v2722
  %v2741 = vadd.f32 %v2701, %v2727
  %v2742 = vadd.f32 %v2702, %v2727
  %v2743 = vadd.f32 %v2703, %v2727
  %v2744 = vadd.f32 %v2704, %v2727
  %v2745 = vld [vmem:[%s0] sm:$0xff]
  %v2746 = vld [vmem:[%s0 + $0x8] sm:$0xff]
  %v2747 = vld [vmem:[%s0 + $0x10] sm:$0xff]
  %v2748 = vld [vmem:[%s0 + $0x18] sm:$0xff]
  %v2749 = vld [vmem:[%s0 + $0x20] sm:$0xff]
  %v2750 = vld [vmem:[%s0 + $0x28] sm:$0xff]
  %v2751 = vld [vmem:[%s0 + $0x30] sm:$0xff]
  %v2752 = vld [vmem:[%s0 + $0x38] sm:$0xff]
  %v2753 = vadd.f32 %v2729, %v2745
  %v2754 = vadd.f32 %v2730, %v2746
  %v2755 = vadd.f32 %v2733, %v2747
  %v2756 = vadd.f32 %v2734, %v2748
  %v2757 = vadd.f32 %v2737, %v2749
  %v2758 = vadd.f32 %v2738, %v2750
  %v2759 = vadd.f32 %v2741, %v2751
  %v2760 = vadd.f32 %v2742, %v2752
  %v2761 = vmax.f32 %v2753, 0.0
  %v2762 = vmax.f32 %v2754, 0.0
  %v2763 = vmax.f32 %v2755, 0.0
  %v2764 = vmax.f32 %v2756, 0.0
  %v2765 = vmax.f32 %v2757, 0.0
  %v2766 = vmax.f32 %v2758, 0.0
  %v2767 = vmax.f32 %v2759, 0.0
  %v2768 = vmax.f32 %v2760, 0.0
  %2769 = vst [vmem:[%s8] sm:$0xff] %v2761
  %2770 = vst [vmem:[%s8 + $0x8] sm:$0xff] %v2762
  %2771 = vst [vmem:[%s8 + $0x10] sm:$0xff] %v2763
  %2772 = vst [vmem:[%s8 + $0x18] sm:$0xff] %v2764
  %2773 = vst [vmem:[%s8 + $0x20] sm:$0xff] %v2765
  %2774 = vst [vmem:[%s8 + $0x28] sm:$0xff] %v2766
  %2775 = vst [vmem:[%s8 + $0x30] sm:$0xff] %v2767
  %2776 = vst [vmem:[%s8 + $0x38] sm:$0xff] %v2768
  %v2777 = vld [vmem:[%s38] sm:$0xff]
  %v2778 = vld [vmem:[%s38 + $0x8] sm:$0xff]
  %v2779 = vld [vmem:[%s38 + $0x10] sm:$0xff]
  %v2780 = vld [vmem:[%s38 + $0x18] sm:$0xff]
  %v2781 = vld [vmem:[%s38 + $0x20] sm:$0xff]
  %v2782 = vld [vmem:[%s38 + $0x28] sm:$0xff]
  %v2783 = vld [vmem:[%s38 + $0x30] sm:$0xff]
  %v2784 = vld [vmem:[%s38 + $0x38] sm:$0xff]
  %v2785 = vadd.f32 %v2731, %v2777
  %v2786 = vadd.f32 %v2732, %v2778
  %v2787 = vadd.f32 %v2735, %v2779
  %v2788 = vadd.f32 %v2736, %v2780
  %v2789 = vadd.f32 %v2739, %v2781
  %v2790 = vadd.f32 %v2740, %v2782
  %v2791 = vadd.f32 %v2743, %v2783
  %v2792 = vadd.f32 %v2744, %v2784
  %v2793 = vmax.f32 %v2785, 0.0
  %v2794 = vmax.f32 %v2786, 0.0
  %v2795 = vmax.f32 %v2787, 0.0
  %v2796 = vmax.f32 %v2788, 0.0
  %v2797 = vmax.f32 %v2789, 0.0
  %v2798 = vmax.f32 %v2790, 0.0
  %v2799 = vmax.f32 %v2791, 0.0
  %v2800 = vmax.f32 %v2792, 0.0
  %s2801 = scalar_lea.vmem %s8, 64
  %2802 = vst [vmem:[%s2801] sm:$0xff] %v2793
  %2803 = vst [vmem:[%s2801 + $0x8] sm:$0xff] %v2794
  %2804 = vst [vmem:[%s2801 + $0x10] sm:$0xff] %v2795
  %2805 = vst [vmem:[%s2801 + $0x18] sm:$0xff] %v2796
  %2806 = vst [vmem:[%s2801 + $0x20] sm:$0xff] %v2797
  %2807 = vst [vmem:[%s2801 + $0x28] sm:$0xff] %v2798
  %2808 = vst [vmem:[%s2801 + $0x30] sm:$0xff] %v2799
  %2809 = vst [vmem:[%s2801 + $0x38] sm:$0xff] %v2800
  // Predicated region
  $region34: #{resnet_block.1} parent=0 // pred_check
    _
  $region35: #{resnet_block.1} parent=0 // pred_check_branch
    %2811 = sbr.rel (0) target = $region37
  $region36: #{resnet_block.1} parent=0 // pred_region
    _
  $region37: #{resnet_block.1} parent=0 // pred_fallthru
    _
  // Predicated region
  $region38: #{resnet_block.1} parent=0 // pred_check
    _
  $region39: #{resnet_block.1} parent=0 // pred_check_branch
    %2813 = sbr.rel (0) target = $region41
  $region40: #{resnet_block.1} parent=0 // pred_region
    _
  $region41: #{resnet_block.1} parent=0 // pred_fallthru
    _

</llo_original>
